<compile_context>
chip_gen: v5e
topology: v5e:2x2
jax: 0.10.0
libtpu: 0.0.40
codegen_flags: <defaults>
</compile_context>

<pallas_src>
import jax
import jax.numpy as jnp
from jax.experimental import pallas as pl
from jax.experimental.pallas import tpu as pltpu

# Module hyper-parameters (defaults of NeuralNet.__init__)
VOCAB = 128     # vocab_size
EMB = 32        # embedding_dim
SEQ = 32        # input_size (tokens per example)
HID = 128       # hidden_size
OUT = 256       # output_size
BATCH = 8       # small example batch


# ---------------------------------------------------------------------------
# Single fused kernel: (embedding folded into fc1) -> relu -> fc2 -> relu -> fc3
# ---------------------------------------------------------------------------
def fused_forward_kernel(tok_ref, t_ref, b1_ref, w2_ref, b2_ref, w3_ref,
                         b3_ref, o_ref):
    tok = tok_ref[...]                                             # (B, SEQ) int32
    bsz = tok.shape[0]
    viota = jax.lax.broadcasted_iota(jnp.int32, (1, VOCAB), 1)     # (1, VOCAB)

    # embed + fc1 (pre-folded): h1[b, h] = b1[h] + sum_s T[s, tok[b, s], h]
    acc = jnp.zeros((bsz, HID), jnp.float32)
    for s in range(SEQ):                                           # static unroll
        one_hot = (tok[:, s:s + 1] == viota).astype(jnp.bfloat16)  # (B, VOCAB)
        acc = acc + jnp.dot(one_hot, t_ref[s],                     # (B, HID)
                            preferred_element_type=jnp.float32)
    h1 = jnp.maximum(acc + b1_ref[...], 0.0)                       # relu(fc1)

    h2 = jnp.dot(h1.astype(jnp.bfloat16), w2_ref[...],
                 preferred_element_type=jnp.float32) + b2_ref[...]
    h2 = jnp.maximum(h2, 0.0)                                      # relu(fc2)

    o_ref[...] = jnp.dot(h2.astype(jnp.bfloat16), w3_ref[...],
                         preferred_element_type=jnp.float32) + b3_ref[...]  # fc3


# ---------------------------------------------------------------------------
# Wrapper-side parameter preprocessing (done once, plain JAX)
# ---------------------------------------------------------------------------
def fold_embedding_into_fc1(table, w1t):
    """T[s, v, h] = sum_e table[v, e] * w1t[s*EMB + e, h]  -> (SEQ, VOCAB, HID)."""
    w1r = w1t.reshape(SEQ, EMB, HID)
    return jnp.einsum("ve,seh->svh", table, w1r)


def preprocess_params(params):
    table, w1t, b1, w2t, b2, w3t, b3 = params
    t_fold = fold_embedding_into_fc1(table, w1t).astype(jnp.bfloat16)  # 1 MiB
    return (t_fold, b1,
            w2t.astype(jnp.bfloat16), b2,
            w3t.astype(jnp.bfloat16), b3)


def neural_net_forward(tokens, kernel_params):
    t_fold, b1, w2_bf, b2, w3_bf, b3 = kernel_params
    b = tokens.shape[0]
    return pl.pallas_call(
        fused_forward_kernel,
        out_shape=jax.ShapeDtypeStruct((b, OUT), jnp.float32),
        grid=(1,),
        in_specs=[
            pl.BlockSpec((b, SEQ), lambda i: (0, 0)),              # tokens
            pl.BlockSpec((SEQ, VOCAB, HID), lambda i: (0, 0, 0)),  # folded embed+fc1 (bf16)
            pl.BlockSpec((1, HID), lambda i: (0, 0)),              # b1
            pl.BlockSpec((HID, HID), lambda i: (0, 0)),            # W2^T (bf16)
            pl.BlockSpec((1, HID), lambda i: (0, 0)),              # b2
            pl.BlockSpec((HID, OUT), lambda i: (0, 0)),            # W3^T (bf16)
            pl.BlockSpec((1, OUT), lambda i: (0, 0)),              # b3
        ],
        out_specs=pl.BlockSpec((b, OUT), lambda i: (0, 0)),        # (8, 256) lane-dense
        compiler_params=pltpu.CompilerParams(
            dimension_semantics=("arbitrary",)),
    )(tokens.astype(jnp.int32), t_fold, b1, w2_bf, b2, w3_bf, b3)


# ---------------------------------------------------------------------------
# Init + pure-JAX f32 reference (PyTorch-equivalent semantics)
# ---------------------------------------------------------------------------
def init_params(key):
    """fc weights: kaiming-normal; biases: uniform(+-1/sqrt(fan_in));
    embedding: standard normal (nn.Embedding default).  Linear weights are
    stored pre-transposed as (in_features, out_features)."""
    ks = jax.random.split(key, 7)
    d1 = SEQ * EMB
    table = jax.random.normal(ks[0], (VOCAB, EMB), jnp.float32)
    w1t = jax.random.normal(ks[1], (d1, HID), jnp.float32) * jnp.sqrt(2.0 / d1)
    b1 = jax.random.uniform(ks[2], (1, HID), jnp.float32,
                            -1.0 / jnp.sqrt(d1), 1.0 / jnp.sqrt(d1))
    w2t = jax.random.normal(ks[3], (HID, HID), jnp.float32) * jnp.sqrt(2.0 / HID)
    b2 = jax.random.uniform(ks[4], (1, HID), jnp.float32,
                            -1.0 / jnp.sqrt(HID), 1.0 / jnp.sqrt(HID))
    w3t = jax.random.normal(ks[5], (HID, OUT), jnp.float32) * jnp.sqrt(2.0 / HID)
    b3 = jax.random.uniform(ks[6], (1, OUT), jnp.float32,
                            -1.0 / jnp.sqrt(HID), 1.0 / jnp.sqrt(HID))
    return table, w1t, b1, w2t, b2, w3t, b3


def reference_forward(tokens, params):
    table, w1t, b1, w2t, b2, w3t, b3 = params
    e = table[tokens]                          # (B, SEQ, EMB)
    x = e.reshape(tokens.shape[0], -1)
    h1 = jnp.maximum(x @ w1t + b1, 0.0)
    h2 = jnp.maximum(h1 @ w2t + b2, 0.0)
    return h2 @ w3t + b3


if __name__ == "__main__":
    key = jax.random.PRNGKey(0)
    k_tok, k_par = jax.random.split(key)

    params = init_params(k_par)
    kernel_params = preprocess_params(params)
    tokens = jax.random.randint(k_tok, (BATCH, SEQ), 0, VOCAB, dtype=jnp.int32)

    out = neural_net_forward(tokens, kernel_params)
    out = jax.block_until_ready(out)

    ref = reference_forward(tokens, params)
    assert out.shape == (BATCH, OUT), out.shape
    # bf16 weights through 3 layers => relaxed tolerance vs the f32 reference
    # (expected max abs deviation ~0.03 for O(1) outputs).
    assert jnp.allclose(out, ref, rtol=5e-2, atol=1e-1), (
        "mismatch vs reference; max abs diff = %f" % float(jnp.max(jnp.abs(out - ref))))

    print("KERNEL_OK")
</pallas_src>

<mosaic_0001>
module attributes {stable_mosaic.version = 11 : i64} {
  func.func @fused_forward_kernel(%arg0: i32, %arg1: memref<8x32xi32, #tpu.memory_space<vmem>>, %arg2: memref<32x128x128xbf16, #tpu.memory_space<vmem>>, %arg3: memref<1x128xf32, #tpu.memory_space<vmem>>, %arg4: memref<128x128xbf16, #tpu.memory_space<vmem>>, %arg5: memref<1x128xf32, #tpu.memory_space<vmem>>, %arg6: memref<128x256xbf16, #tpu.memory_space<vmem>>, %arg7: memref<1x256xf32, #tpu.memory_space<vmem>>, %arg8: memref<8x256xf32, #tpu.memory_space<vmem>>) attributes {dimension_semantics = [#tpu.dimension_semantics<arbitrary>], iteration_bounds = array<i64: 1>, scalar_prefetch = 0 : i64, scratch_operands = 0 : i64, tpu.core_type = #tpu.core_type<tc>, window_params = [{pipeline_mode = #tpu.pipeline_mode<synchronous>, transform_indices = @transform_0, window_bounds = array<i64: 8, 32>}, {pipeline_mode = #tpu.pipeline_mode<synchronous>, transform_indices = @transform_1, window_bounds = array<i64: 32, 128, 128>}, {pipeline_mode = #tpu.pipeline_mode<synchronous>, transform_indices = @transform_2, window_bounds = array<i64: 1, 128>}, {pipeline_mode = #tpu.pipeline_mode<synchronous>, transform_indices = @transform_3, window_bounds = array<i64: 128, 128>}, {pipeline_mode = #tpu.pipeline_mode<synchronous>, transform_indices = @transform_4, window_bounds = array<i64: 1, 128>}, {pipeline_mode = #tpu.pipeline_mode<synchronous>, transform_indices = @transform_5, window_bounds = array<i64: 128, 256>}, {pipeline_mode = #tpu.pipeline_mode<synchronous>, transform_indices = @transform_6, window_bounds = array<i64: 1, 256>}, {pipeline_mode = #tpu.pipeline_mode<synchronous>, transform_indices = @transform_7, window_bounds = array<i64: 8, 256>}]} {
    %c0 = arith.constant 0 : index
    %c0_0 = arith.constant 0 : index
    %0 = vector.load %arg1[%c0, %c0_0] : memref<8x32xi32, #tpu.memory_space<vmem>>, vector<8x32xi32>
    %1 = tpu.iota {dimensions = array<i32: 1>} : vector<1x128xi32>
    %cst = arith.constant 0.000000e+00 : f32
    %2 = vector.broadcast %cst : f32 to vector<8x128xf32>
    %3 = vector.extract_strided_slice %0 {offsets = [0, 0], sizes = [8, 1], strides = [1, 1]} : vector<8x32xi32> to vector<8x1xi32>
    %4 = vector.broadcast %3 : vector<8x1xi32> to vector<8x128xi32>
    %5 = vector.broadcast %1 : vector<1x128xi32> to vector<8x128xi32>
    %6 = arith.cmpi eq, %4, %5 : vector<8x128xi32>
    %7 = arith.extui %6 : vector<8x128xi1> to vector<8x128xi32>
    %8 = arith.sitofp %7 : vector<8x128xi32> to vector<8x128xf32>
    %9 = arith.truncf %8 : vector<8x128xf32> to vector<8x128xbf16>
    %c0_1 = arith.constant 0 : index
    %c0_2 = arith.constant 0 : index
    %c0_3 = arith.constant 0 : index
    %10 = vector.load %arg2[%c0_1, %c0_2, %c0_3] : memref<32x128x128xbf16, #tpu.memory_space<vmem>>, vector<1x128x128xbf16>
    %11 = vector.shape_cast %10 : vector<1x128x128xbf16> to vector<128x128xbf16>
    %cst_4 = arith.constant dense<0.000000e+00> : vector<8x128xf32>
    %12 = tpu.matmul %9, %11, %cst_4 {dimension_numbers = #tpu.dot_dimension_numbers<[1], [0], [0], [1], [0, 0, 1, 1], [], []>} : vector<8x128xbf16>, vector<128x128xbf16>, vector<8x128xf32> -> vector<8x128xf32>
    %13 = arith.addf %2, %12 : vector<8x128xf32>
    %14 = vector.extract_strided_slice %0 {offsets = [0, 1], sizes = [8, 1], strides = [1, 1]} : vector<8x32xi32> to vector<8x1xi32>
    %15 = vector.broadcast %14 : vector<8x1xi32> to vector<8x128xi32>
    %16 = vector.broadcast %1 : vector<1x128xi32> to vector<8x128xi32>
    %17 = arith.cmpi eq, %15, %16 : vector<8x128xi32>
    %18 = arith.extui %17 : vector<8x128xi1> to vector<8x128xi32>
    %19 = arith.sitofp %18 : vector<8x128xi32> to vector<8x128xf32>
    %20 = arith.truncf %19 : vector<8x128xf32> to vector<8x128xbf16>
    %c1 = arith.constant 1 : index
    %c0_5 = arith.constant 0 : index
    %c0_6 = arith.constant 0 : index
    %21 = vector.load %arg2[%c1, %c0_5, %c0_6] : memref<32x128x128xbf16, #tpu.memory_space<vmem>>, vector<1x128x128xbf16>
    %22 = vector.shape_cast %21 : vector<1x128x128xbf16> to vector<128x128xbf16>
    %cst_7 = arith.constant dense<0.000000e+00> : vector<8x128xf32>
    %23 = tpu.matmul %20, %22, %cst_7 {dimension_numbers = #tpu.dot_dimension_numbers<[1], [0], [0], [1], [0, 0, 1, 1], [], []>} : vector<8x128xbf16>, vector<128x128xbf16>, vector<8x128xf32> -> vector<8x128xf32>
    %24 = arith.addf %13, %23 : vector<8x128xf32>
    %25 = vector.extract_strided_slice %0 {offsets = [0, 2], sizes = [8, 1], strides = [1, 1]} : vector<8x32xi32> to vector<8x1xi32>
    %26 = vector.broadcast %25 : vector<8x1xi32> to vector<8x128xi32>
    %27 = vector.broadcast %1 : vector<1x128xi32> to vector<8x128xi32>
    %28 = arith.cmpi eq, %26, %27 : vector<8x128xi32>
    %29 = arith.extui %28 : vector<8x128xi1> to vector<8x128xi32>
    %30 = arith.sitofp %29 : vector<8x128xi32> to vector<8x128xf32>
    %31 = arith.truncf %30 : vector<8x128xf32> to vector<8x128xbf16>
    %c2 = arith.constant 2 : index
    %c0_8 = arith.constant 0 : index
    %c0_9 = arith.constant 0 : index
    %32 = vector.load %arg2[%c2, %c0_8, %c0_9] : memref<32x128x128xbf16, #tpu.memory_space<vmem>>, vector<1x128x128xbf16>
    %33 = vector.shape_cast %32 : vector<1x128x128xbf16> to vector<128x128xbf16>
    %cst_10 = arith.constant dense<0.000000e+00> : vector<8x128xf32>
    %34 = tpu.matmul %31, %33, %cst_10 {dimension_numbers = #tpu.dot_dimension_numbers<[1], [0], [0], [1], [0, 0, 1, 1], [], []>} : vector<8x128xbf16>, vector<128x128xbf16>, vector<8x128xf32> -> vector<8x128xf32>
    %35 = arith.addf %24, %34 : vector<8x128xf32>
    %36 = vector.extract_strided_slice %0 {offsets = [0, 3], sizes = [8, 1], strides = [1, 1]} : vector<8x32xi32> to vector<8x1xi32>
    %37 = vector.broadcast %36 : vector<8x1xi32> to vector<8x128xi32>
    %38 = vector.broadcast %1 : vector<1x128xi32> to vector<8x128xi32>
    %39 = arith.cmpi eq, %37, %38 : vector<8x128xi32>
    %40 = arith.extui %39 : vector<8x128xi1> to vector<8x128xi32>
    %41 = arith.sitofp %40 : vector<8x128xi32> to vector<8x128xf32>
    %42 = arith.truncf %41 : vector<8x128xf32> to vector<8x128xbf16>
    %c3 = arith.constant 3 : index
    %c0_11 = arith.constant 0 : index
    %c0_12 = arith.constant 0 : index
    %43 = vector.load %arg2[%c3, %c0_11, %c0_12] : memref<32x128x128xbf16, #tpu.memory_space<vmem>>, vector<1x128x128xbf16>
    %44 = vector.shape_cast %43 : vector<1x128x128xbf16> to vector<128x128xbf16>
    %cst_13 = arith.constant dense<0.000000e+00> : vector<8x128xf32>
    %45 = tpu.matmul %42, %44, %cst_13 {dimension_numbers = #tpu.dot_dimension_numbers<[1], [0], [0], [1], [0, 0, 1, 1], [], []>} : vector<8x128xbf16>, vector<128x128xbf16>, vector<8x128xf32> -> vector<8x128xf32>
    %46 = arith.addf %35, %45 : vector<8x128xf32>
    %47 = vector.extract_strided_slice %0 {offsets = [0, 4], sizes = [8, 1], strides = [1, 1]} : vector<8x32xi32> to vector<8x1xi32>
    %48 = vector.broadcast %47 : vector<8x1xi32> to vector<8x128xi32>
    %49 = vector.broadcast %1 : vector<1x128xi32> to vector<8x128xi32>
    %50 = arith.cmpi eq, %48, %49 : vector<8x128xi32>
    %51 = arith.extui %50 : vector<8x128xi1> to vector<8x128xi32>
    %52 = arith.sitofp %51 : vector<8x128xi32> to vector<8x128xf32>
    %53 = arith.truncf %52 : vector<8x128xf32> to vector<8x128xbf16>
    %c4 = arith.constant 4 : index
    %c0_14 = arith.constant 0 : index
    %c0_15 = arith.constant 0 : index
    %54 = vector.load %arg2[%c4, %c0_14, %c0_15] : memref<32x128x128xbf16, #tpu.memory_space<vmem>>, vector<1x128x128xbf16>
    %55 = vector.shape_cast %54 : vector<1x128x128xbf16> to vector<128x128xbf16>
    %cst_16 = arith.constant dense<0.000000e+00> : vector<8x128xf32>
    %56 = tpu.matmul %53, %55, %cst_16 {dimension_numbers = #tpu.dot_dimension_numbers<[1], [0], [0], [1], [0, 0, 1, 1], [], []>} : vector<8x128xbf16>, vector<128x128xbf16>, vector<8x128xf32> -> vector<8x128xf32>
    %57 = arith.addf %46, %56 : vector<8x128xf32>
    %58 = vector.extract_strided_slice %0 {offsets = [0, 5], sizes = [8, 1], strides = [1, 1]} : vector<8x32xi32> to vector<8x1xi32>
    %59 = vector.broadcast %58 : vector<8x1xi32> to vector<8x128xi32>
    %60 = vector.broadcast %1 : vector<1x128xi32> to vector<8x128xi32>
    %61 = arith.cmpi eq, %59, %60 : vector<8x128xi32>
    %62 = arith.extui %61 : vector<8x128xi1> to vector<8x128xi32>
    %63 = arith.sitofp %62 : vector<8x128xi32> to vector<8x128xf32>
    %64 = arith.truncf %63 : vector<8x128xf32> to vector<8x128xbf16>
    %c5 = arith.constant 5 : index
    %c0_17 = arith.constant 0 : index
    %c0_18 = arith.constant 0 : index
    %65 = vector.load %arg2[%c5, %c0_17, %c0_18] : memref<32x128x128xbf16, #tpu.memory_space<vmem>>, vector<1x128x128xbf16>
    %66 = vector.shape_cast %65 : vector<1x128x128xbf16> to vector<128x128xbf16>
    %cst_19 = arith.constant dense<0.000000e+00> : vector<8x128xf32>
    %67 = tpu.matmul %64, %66, %cst_19 {dimension_numbers = #tpu.dot_dimension_numbers<[1], [0], [0], [1], [0, 0, 1, 1], [], []>} : vector<8x128xbf16>, vector<128x128xbf16>, vector<8x128xf32> -> vector<8x128xf32>
    %68 = arith.addf %57, %67 : vector<8x128xf32>
    %69 = vector.extract_strided_slice %0 {offsets = [0, 6], sizes = [8, 1], strides = [1, 1]} : vector<8x32xi32> to vector<8x1xi32>
    %70 = vector.broadcast %69 : vector<8x1xi32> to vector<8x128xi32>
    %71 = vector.broadcast %1 : vector<1x128xi32> to vector<8x128xi32>
    %72 = arith.cmpi eq, %70, %71 : vector<8x128xi32>
    %73 = arith.extui %72 : vector<8x128xi1> to vector<8x128xi32>
    %74 = arith.sitofp %73 : vector<8x128xi32> to vector<8x128xf32>
    %75 = arith.truncf %74 : vector<8x128xf32> to vector<8x128xbf16>
    %c6 = arith.constant 6 : index
    %c0_20 = arith.constant 0 : index
    %c0_21 = arith.constant 0 : index
    %76 = vector.load %arg2[%c6, %c0_20, %c0_21] : memref<32x128x128xbf16, #tpu.memory_space<vmem>>, vector<1x128x128xbf16>
    %77 = vector.shape_cast %76 : vector<1x128x128xbf16> to vector<128x128xbf16>
    %cst_22 = arith.constant dense<0.000000e+00> : vector<8x128xf32>
    %78 = tpu.matmul %75, %77, %cst_22 {dimension_numbers = #tpu.dot_dimension_numbers<[1], [0], [0], [1], [0, 0, 1, 1], [], []>} : vector<8x128xbf16>, vector<128x128xbf16>, vector<8x128xf32> -> vector<8x128xf32>
    %79 = arith.addf %68, %78 : vector<8x128xf32>
    %80 = vector.extract_strided_slice %0 {offsets = [0, 7], sizes = [8, 1], strides = [1, 1]} : vector<8x32xi32> to vector<8x1xi32>
    %81 = vector.broadcast %80 : vector<8x1xi32> to vector<8x128xi32>
    %82 = vector.broadcast %1 : vector<1x128xi32> to vector<8x128xi32>
    %83 = arith.cmpi eq, %81, %82 : vector<8x128xi32>
    %84 = arith.extui %83 : vector<8x128xi1> to vector<8x128xi32>
    %85 = arith.sitofp %84 : vector<8x128xi32> to vector<8x128xf32>
    %86 = arith.truncf %85 : vector<8x128xf32> to vector<8x128xbf16>
    %c7 = arith.constant 7 : index
    %c0_23 = arith.constant 0 : index
    %c0_24 = arith.constant 0 : index
    %87 = vector.load %arg2[%c7, %c0_23, %c0_24] : memref<32x128x128xbf16, #tpu.memory_space<vmem>>, vector<1x128x128xbf16>
    %88 = vector.shape_cast %87 : vector<1x128x128xbf16> to vector<128x128xbf16>
    %cst_25 = arith.constant dense<0.000000e+00> : vector<8x128xf32>
    %89 = tpu.matmul %86, %88, %cst_25 {dimension_numbers = #tpu.dot_dimension_numbers<[1], [0], [0], [1], [0, 0, 1, 1], [], []>} : vector<8x128xbf16>, vector<128x128xbf16>, vector<8x128xf32> -> vector<8x128xf32>
    %90 = arith.addf %79, %89 : vector<8x128xf32>
    %91 = vector.extract_strided_slice %0 {offsets = [0, 8], sizes = [8, 1], strides = [1, 1]} : vector<8x32xi32> to vector<8x1xi32>
    %92 = vector.broadcast %91 : vector<8x1xi32> to vector<8x128xi32>
    %93 = vector.broadcast %1 : vector<1x128xi32> to vector<8x128xi32>
    %94 = arith.cmpi eq, %92, %93 : vector<8x128xi32>
    %95 = arith.extui %94 : vector<8x128xi1> to vector<8x128xi32>
    %96 = arith.sitofp %95 : vector<8x128xi32> to vector<8x128xf32>
    %97 = arith.truncf %96 : vector<8x128xf32> to vector<8x128xbf16>
    %c8 = arith.constant 8 : index
    %c0_26 = arith.constant 0 : index
    %c0_27 = arith.constant 0 : index
    %98 = vector.load %arg2[%c8, %c0_26, %c0_27] : memref<32x128x128xbf16, #tpu.memory_space<vmem>>, vector<1x128x128xbf16>
    %99 = vector.shape_cast %98 : vector<1x128x128xbf16> to vector<128x128xbf16>
    %cst_28 = arith.constant dense<0.000000e+00> : vector<8x128xf32>
    %100 = tpu.matmul %97, %99, %cst_28 {dimension_numbers = #tpu.dot_dimension_numbers<[1], [0], [0], [1], [0, 0, 1, 1], [], []>} : vector<8x128xbf16>, vector<128x128xbf16>, vector<8x128xf32> -> vector<8x128xf32>
    %101 = arith.addf %90, %100 : vector<8x128xf32>
    %102 = vector.extract_strided_slice %0 {offsets = [0, 9], sizes = [8, 1], strides = [1, 1]} : vector<8x32xi32> to vector<8x1xi32>
    %103 = vector.broadcast %102 : vector<8x1xi32> to vector<8x128xi32>
    %104 = vector.broadcast %1 : vector<1x128xi32> to vector<8x128xi32>
    %105 = arith.cmpi eq, %103, %104 : vector<8x128xi32>
    %106 = arith.extui %105 : vector<8x128xi1> to vector<8x128xi32>
    %107 = arith.sitofp %106 : vector<8x128xi32> to vector<8x128xf32>
    %108 = arith.truncf %107 : vector<8x128xf32> to vector<8x128xbf16>
    %c9 = arith.constant 9 : index
    %c0_29 = arith.constant 0 : index
    %c0_30 = arith.constant 0 : index
    %109 = vector.load %arg2[%c9, %c0_29, %c0_30] : memref<32x128x128xbf16, #tpu.memory_space<vmem>>, vector<1x128x128xbf16>
    %110 = vector.shape_cast %109 : vector<1x128x128xbf16> to vector<128x128xbf16>
    %cst_31 = arith.constant dense<0.000000e+00> : vector<8x128xf32>
    %111 = tpu.matmul %108, %110, %cst_31 {dimension_numbers = #tpu.dot_dimension_numbers<[1], [0], [0], [1], [0, 0, 1, 1], [], []>} : vector<8x128xbf16>, vector<128x128xbf16>, vector<8x128xf32> -> vector<8x128xf32>
    %112 = arith.addf %101, %111 : vector<8x128xf32>
    %113 = vector.extract_strided_slice %0 {offsets = [0, 10], sizes = [8, 1], strides = [1, 1]} : vector<8x32xi32> to vector<8x1xi32>
    %114 = vector.broadcast %113 : vector<8x1xi32> to vector<8x128xi32>
    %115 = vector.broadcast %1 : vector<1x128xi32> to vector<8x128xi32>
    %116 = arith.cmpi eq, %114, %115 : vector<8x128xi32>
    %117 = arith.extui %116 : vector<8x128xi1> to vector<8x128xi32>
    %118 = arith.sitofp %117 : vector<8x128xi32> to vector<8x128xf32>
    %119 = arith.truncf %118 : vector<8x128xf32> to vector<8x128xbf16>
    %c10 = arith.constant 10 : index
    %c0_32 = arith.constant 0 : index
    %c0_33 = arith.constant 0 : index
    %120 = vector.load %arg2[%c10, %c0_32, %c0_33] : memref<32x128x128xbf16, #tpu.memory_space<vmem>>, vector<1x128x128xbf16>
    %121 = vector.shape_cast %120 : vector<1x128x128xbf16> to vector<128x128xbf16>
    %cst_34 = arith.constant dense<0.000000e+00> : vector<8x128xf32>
    %122 = tpu.matmul %119, %121, %cst_34 {dimension_numbers = #tpu.dot_dimension_numbers<[1], [0], [0], [1], [0, 0, 1, 1], [], []>} : vector<8x128xbf16>, vector<128x128xbf16>, vector<8x128xf32> -> vector<8x128xf32>
    %123 = arith.addf %112, %122 : vector<8x128xf32>
    %124 = vector.extract_strided_slice %0 {offsets = [0, 11], sizes = [8, 1], strides = [1, 1]} : vector<8x32xi32> to vector<8x1xi32>
    %125 = vector.broadcast %124 : vector<8x1xi32> to vector<8x128xi32>
    %126 = vector.broadcast %1 : vector<1x128xi32> to vector<8x128xi32>
    %127 = arith.cmpi eq, %125, %126 : vector<8x128xi32>
    %128 = arith.extui %127 : vector<8x128xi1> to vector<8x128xi32>
    %129 = arith.sitofp %128 : vector<8x128xi32> to vector<8x128xf32>
    %130 = arith.truncf %129 : vector<8x128xf32> to vector<8x128xbf16>
    %c11 = arith.constant 11 : index
    %c0_35 = arith.constant 0 : index
    %c0_36 = arith.constant 0 : index
    %131 = vector.load %arg2[%c11, %c0_35, %c0_36] : memref<32x128x128xbf16, #tpu.memory_space<vmem>>, vector<1x128x128xbf16>
    %132 = vector.shape_cast %131 : vector<1x128x128xbf16> to vector<128x128xbf16>
    %cst_37 = arith.constant dense<0.000000e+00> : vector<8x128xf32>
    %133 = tpu.matmul %130, %132, %cst_37 {dimension_numbers = #tpu.dot_dimension_numbers<[1], [0], [0], [1], [0, 0, 1, 1], [], []>} : vector<8x128xbf16>, vector<128x128xbf16>, vector<8x128xf32> -> vector<8x128xf32>
    %134 = arith.addf %123, %133 : vector<8x128xf32>
    %135 = vector.extract_strided_slice %0 {offsets = [0, 12], sizes = [8, 1], strides = [1, 1]} : vector<8x32xi32> to vector<8x1xi32>
    %136 = vector.broadcast %135 : vector<8x1xi32> to vector<8x128xi32>
    %137 = vector.broadcast %1 : vector<1x128xi32> to vector<8x128xi32>
    %138 = arith.cmpi eq, %136, %137 : vector<8x128xi32>
    %139 = arith.extui %138 : vector<8x128xi1> to vector<8x128xi32>
    %140 = arith.sitofp %139 : vector<8x128xi32> to vector<8x128xf32>
    %141 = arith.truncf %140 : vector<8x128xf32> to vector<8x128xbf16>
    %c12 = arith.constant 12 : index
    %c0_38 = arith.constant 0 : index
    %c0_39 = arith.constant 0 : index
    %142 = vector.load %arg2[%c12, %c0_38, %c0_39] : memref<32x128x128xbf16, #tpu.memory_space<vmem>>, vector<1x128x128xbf16>
    %143 = vector.shape_cast %142 : vector<1x128x128xbf16> to vector<128x128xbf16>
    %cst_40 = arith.constant dense<0.000000e+00> : vector<8x128xf32>
    %144 = tpu.matmul %141, %143, %cst_40 {dimension_numbers = #tpu.dot_dimension_numbers<[1], [0], [0], [1], [0, 0, 1, 1], [], []>} : vector<8x128xbf16>, vector<128x128xbf16>, vector<8x128xf32> -> vector<8x128xf32>
    %145 = arith.addf %134, %144 : vector<8x128xf32>
    %146 = vector.extract_strided_slice %0 {offsets = [0, 13], sizes = [8, 1], strides = [1, 1]} : vector<8x32xi32> to vector<8x1xi32>
    %147 = vector.broadcast %146 : vector<8x1xi32> to vector<8x128xi32>
    %148 = vector.broadcast %1 : vector<1x128xi32> to vector<8x128xi32>
    %149 = arith.cmpi eq, %147, %148 : vector<8x128xi32>
    %150 = arith.extui %149 : vector<8x128xi1> to vector<8x128xi32>
    %151 = arith.sitofp %150 : vector<8x128xi32> to vector<8x128xf32>
    %152 = arith.truncf %151 : vector<8x128xf32> to vector<8x128xbf16>
    %c13 = arith.constant 13 : index
    %c0_41 = arith.constant 0 : index
    %c0_42 = arith.constant 0 : index
    %153 = vector.load %arg2[%c13, %c0_41, %c0_42] : memref<32x128x128xbf16, #tpu.memory_space<vmem>>, vector<1x128x128xbf16>
    %154 = vector.shape_cast %153 : vector<1x128x128xbf16> to vector<128x128xbf16>
    %cst_43 = arith.constant dense<0.000000e+00> : vector<8x128xf32>
    %155 = tpu.matmul %152, %154, %cst_43 {dimension_numbers = #tpu.dot_dimension_numbers<[1], [0], [0], [1], [0, 0, 1, 1], [], []>} : vector<8x128xbf16>, vector<128x128xbf16>, vector<8x128xf32> -> vector<8x128xf32>
    %156 = arith.addf %145, %155 : vector<8x128xf32>
    %157 = vector.extract_strided_slice %0 {offsets = [0, 14], sizes = [8, 1], strides = [1, 1]} : vector<8x32xi32> to vector<8x1xi32>
    %158 = vector.broadcast %157 : vector<8x1xi32> to vector<8x128xi32>
    %159 = vector.broadcast %1 : vector<1x128xi32> to vector<8x128xi32>
    %160 = arith.cmpi eq, %158, %159 : vector<8x128xi32>
    %161 = arith.extui %160 : vector<8x128xi1> to vector<8x128xi32>
    %162 = arith.sitofp %161 : vector<8x128xi32> to vector<8x128xf32>
    %163 = arith.truncf %162 : vector<8x128xf32> to vector<8x128xbf16>
    %c14 = arith.constant 14 : index
    %c0_44 = arith.constant 0 : index
    %c0_45 = arith.constant 0 : index
    %164 = vector.load %arg2[%c14, %c0_44, %c0_45] : memref<32x128x128xbf16, #tpu.memory_space<vmem>>, vector<1x128x128xbf16>
    %165 = vector.shape_cast %164 : vector<1x128x128xbf16> to vector<128x128xbf16>
    %cst_46 = arith.constant dense<0.000000e+00> : vector<8x128xf32>
    %166 = tpu.matmul %163, %165, %cst_46 {dimension_numbers = #tpu.dot_dimension_numbers<[1], [0], [0], [1], [0, 0, 1, 1], [], []>} : vector<8x128xbf16>, vector<128x128xbf16>, vector<8x128xf32> -> vector<8x128xf32>
    %167 = arith.addf %156, %166 : vector<8x128xf32>
    %168 = vector.extract_strided_slice %0 {offsets = [0, 15], sizes = [8, 1], strides = [1, 1]} : vector<8x32xi32> to vector<8x1xi32>
    %169 = vector.broadcast %168 : vector<8x1xi32> to vector<8x128xi32>
    %170 = vector.broadcast %1 : vector<1x128xi32> to vector<8x128xi32>
    %171 = arith.cmpi eq, %169, %170 : vector<8x128xi32>
    %172 = arith.extui %171 : vector<8x128xi1> to vector<8x128xi32>
    %173 = arith.sitofp %172 : vector<8x128xi32> to vector<8x128xf32>
    %174 = arith.truncf %173 : vector<8x128xf32> to vector<8x128xbf16>
    %c15 = arith.constant 15 : index
    %c0_47 = arith.constant 0 : index
    %c0_48 = arith.constant 0 : index
    %175 = vector.load %arg2[%c15, %c0_47, %c0_48] : memref<32x128x128xbf16, #tpu.memory_space<vmem>>, vector<1x128x128xbf16>
    %176 = vector.shape_cast %175 : vector<1x128x128xbf16> to vector<128x128xbf16>
    %cst_49 = arith.constant dense<0.000000e+00> : vector<8x128xf32>
    %177 = tpu.matmul %174, %176, %cst_49 {dimension_numbers = #tpu.dot_dimension_numbers<[1], [0], [0], [1], [0, 0, 1, 1], [], []>} : vector<8x128xbf16>, vector<128x128xbf16>, vector<8x128xf32> -> vector<8x128xf32>
    %178 = arith.addf %167, %177 : vector<8x128xf32>
    %179 = vector.extract_strided_slice %0 {offsets = [0, 16], sizes = [8, 1], strides = [1, 1]} : vector<8x32xi32> to vector<8x1xi32>
    %180 = vector.broadcast %179 : vector<8x1xi32> to vector<8x128xi32>
    %181 = vector.broadcast %1 : vector<1x128xi32> to vector<8x128xi32>
    %182 = arith.cmpi eq, %180, %181 : vector<8x128xi32>
    %183 = arith.extui %182 : vector<8x128xi1> to vector<8x128xi32>
    %184 = arith.sitofp %183 : vector<8x128xi32> to vector<8x128xf32>
    %185 = arith.truncf %184 : vector<8x128xf32> to vector<8x128xbf16>
    %c16 = arith.constant 16 : index
    %c0_50 = arith.constant 0 : index
    %c0_51 = arith.constant 0 : index
    %186 = vector.load %arg2[%c16, %c0_50, %c0_51] : memref<32x128x128xbf16, #tpu.memory_space<vmem>>, vector<1x128x128xbf16>
    %187 = vector.shape_cast %186 : vector<1x128x128xbf16> to vector<128x128xbf16>
    %cst_52 = arith.constant dense<0.000000e+00> : vector<8x128xf32>
    %188 = tpu.matmul %185, %187, %cst_52 {dimension_numbers = #tpu.dot_dimension_numbers<[1], [0], [0], [1], [0, 0, 1, 1], [], []>} : vector<8x128xbf16>, vector<128x128xbf16>, vector<8x128xf32> -> vector<8x128xf32>
    %189 = arith.addf %178, %188 : vector<8x128xf32>
    %190 = vector.extract_strided_slice %0 {offsets = [0, 17], sizes = [8, 1], strides = [1, 1]} : vector<8x32xi32> to vector<8x1xi32>
    %191 = vector.broadcast %190 : vector<8x1xi32> to vector<8x128xi32>
    %192 = vector.broadcast %1 : vector<1x128xi32> to vector<8x128xi32>
    %193 = arith.cmpi eq, %191, %192 : vector<8x128xi32>
    %194 = arith.extui %193 : vector<8x128xi1> to vector<8x128xi32>
    %195 = arith.sitofp %194 : vector<8x128xi32> to vector<8x128xf32>
    %196 = arith.truncf %195 : vector<8x128xf32> to vector<8x128xbf16>
    %c17 = arith.constant 17 : index
    %c0_53 = arith.constant 0 : index
    %c0_54 = arith.constant 0 : index
    %197 = vector.load %arg2[%c17, %c0_53, %c0_54] : memref<32x128x128xbf16, #tpu.memory_space<vmem>>, vector<1x128x128xbf16>
    %198 = vector.shape_cast %197 : vector<1x128x128xbf16> to vector<128x128xbf16>
    %cst_55 = arith.constant dense<0.000000e+00> : vector<8x128xf32>
    %199 = tpu.matmul %196, %198, %cst_55 {dimension_numbers = #tpu.dot_dimension_numbers<[1], [0], [0], [1], [0, 0, 1, 1], [], []>} : vector<8x128xbf16>, vector<128x128xbf16>, vector<8x128xf32> -> vector<8x128xf32>
    %200 = arith.addf %189, %199 : vector<8x128xf32>
    %201 = vector.extract_strided_slice %0 {offsets = [0, 18], sizes = [8, 1], strides = [1, 1]} : vector<8x32xi32> to vector<8x1xi32>
    %202 = vector.broadcast %201 : vector<8x1xi32> to vector<8x128xi32>
    %203 = vector.broadcast %1 : vector<1x128xi32> to vector<8x128xi32>
    %204 = arith.cmpi eq, %202, %203 : vector<8x128xi32>
    %205 = arith.extui %204 : vector<8x128xi1> to vector<8x128xi32>
    %206 = arith.sitofp %205 : vector<8x128xi32> to vector<8x128xf32>
    %207 = arith.truncf %206 : vector<8x128xf32> to vector<8x128xbf16>
    %c18 = arith.constant 18 : index
    %c0_56 = arith.constant 0 : index
    %c0_57 = arith.constant 0 : index
    %208 = vector.load %arg2[%c18, %c0_56, %c0_57] : memref<32x128x128xbf16, #tpu.memory_space<vmem>>, vector<1x128x128xbf16>
    %209 = vector.shape_cast %208 : vector<1x128x128xbf16> to vector<128x128xbf16>
    %cst_58 = arith.constant dense<0.000000e+00> : vector<8x128xf32>
    %210 = tpu.matmul %207, %209, %cst_58 {dimension_numbers = #tpu.dot_dimension_numbers<[1], [0], [0], [1], [0, 0, 1, 1], [], []>} : vector<8x128xbf16>, vector<128x128xbf16>, vector<8x128xf32> -> vector<8x128xf32>
    %211 = arith.addf %200, %210 : vector<8x128xf32>
    %212 = vector.extract_strided_slice %0 {offsets = [0, 19], sizes = [8, 1], strides = [1, 1]} : vector<8x32xi32> to vector<8x1xi32>
    %213 = vector.broadcast %212 : vector<8x1xi32> to vector<8x128xi32>
    %214 = vector.broadcast %1 : vector<1x128xi32> to vector<8x128xi32>
    %215 = arith.cmpi eq, %213, %214 : vector<8x128xi32>
    %216 = arith.extui %215 : vector<8x128xi1> to vector<8x128xi32>
    %217 = arith.sitofp %216 : vector<8x128xi32> to vector<8x128xf32>
    %218 = arith.truncf %217 : vector<8x128xf32> to vector<8x128xbf16>
    %c19 = arith.constant 19 : index
    %c0_59 = arith.constant 0 : index
    %c0_60 = arith.constant 0 : index
    %219 = vector.load %arg2[%c19, %c0_59, %c0_60] : memref<32x128x128xbf16, #tpu.memory_space<vmem>>, vector<1x128x128xbf16>
    %220 = vector.shape_cast %219 : vector<1x128x128xbf16> to vector<128x128xbf16>
    %cst_61 = arith.constant dense<0.000000e+00> : vector<8x128xf32>
    %221 = tpu.matmul %218, %220, %cst_61 {dimension_numbers = #tpu.dot_dimension_numbers<[1], [0], [0], [1], [0, 0, 1, 1], [], []>} : vector<8x128xbf16>, vector<128x128xbf16>, vector<8x128xf32> -> vector<8x128xf32>
    %222 = arith.addf %211, %221 : vector<8x128xf32>
    %223 = vector.extract_strided_slice %0 {offsets = [0, 20], sizes = [8, 1], strides = [1, 1]} : vector<8x32xi32> to vector<8x1xi32>
    %224 = vector.broadcast %223 : vector<8x1xi32> to vector<8x128xi32>
    %225 = vector.broadcast %1 : vector<1x128xi32> to vector<8x128xi32>
    %226 = arith.cmpi eq, %224, %225 : vector<8x128xi32>
    %227 = arith.extui %226 : vector<8x128xi1> to vector<8x128xi32>
    %228 = arith.sitofp %227 : vector<8x128xi32> to vector<8x128xf32>
    %229 = arith.truncf %228 : vector<8x128xf32> to vector<8x128xbf16>
    %c20 = arith.constant 20 : index
    %c0_62 = arith.constant 0 : index
    %c0_63 = arith.constant 0 : index
    %230 = vector.load %arg2[%c20, %c0_62, %c0_63] : memref<32x128x128xbf16, #tpu.memory_space<vmem>>, vector<1x128x128xbf16>
    %231 = vector.shape_cast %230 : vector<1x128x128xbf16> to vector<128x128xbf16>
    %cst_64 = arith.constant dense<0.000000e+00> : vector<8x128xf32>
    %232 = tpu.matmul %229, %231, %cst_64 {dimension_numbers = #tpu.dot_dimension_numbers<[1], [0], [0], [1], [0, 0, 1, 1], [], []>} : vector<8x128xbf16>, vector<128x128xbf16>, vector<8x128xf32> -> vector<8x128xf32>
    %233 = arith.addf %222, %232 : vector<8x128xf32>
    %234 = vector.extract_strided_slice %0 {offsets = [0, 21], sizes = [8, 1], strides = [1, 1]} : vector<8x32xi32> to vector<8x1xi32>
    %235 = vector.broadcast %234 : vector<8x1xi32> to vector<8x128xi32>
    %236 = vector.broadcast %1 : vector<1x128xi32> to vector<8x128xi32>
    %237 = arith.cmpi eq, %235, %236 : vector<8x128xi32>
    %238 = arith.extui %237 : vector<8x128xi1> to vector<8x128xi32>
    %239 = arith.sitofp %238 : vector<8x128xi32> to vector<8x128xf32>
    %240 = arith.truncf %239 : vector<8x128xf32> to vector<8x128xbf16>
    %c21 = arith.constant 21 : index
    %c0_65 = arith.constant 0 : index
    %c0_66 = arith.constant 0 : index
    %241 = vector.load %arg2[%c21, %c0_65, %c0_66] : memref<32x128x128xbf16, #tpu.memory_space<vmem>>, vector<1x128x128xbf16>
    %242 = vector.shape_cast %241 : vector<1x128x128xbf16> to vector<128x128xbf16>
    %cst_67 = arith.constant dense<0.000000e+00> : vector<8x128xf32>
    %243 = tpu.matmul %240, %242, %cst_67 {dimension_numbers = #tpu.dot_dimension_numbers<[1], [0], [0], [1], [0, 0, 1, 1], [], []>} : vector<8x128xbf16>, vector<128x128xbf16>, vector<8x128xf32> -> vector<8x128xf32>
    %244 = arith.addf %233, %243 : vector<8x128xf32>
    %245 = vector.extract_strided_slice %0 {offsets = [0, 22], sizes = [8, 1], strides = [1, 1]} : vector<8x32xi32> to vector<8x1xi32>
    %246 = vector.broadcast %245 : vector<8x1xi32> to vector<8x128xi32>
    %247 = vector.broadcast %1 : vector<1x128xi32> to vector<8x128xi32>
    %248 = arith.cmpi eq, %246, %247 : vector<8x128xi32>
    %249 = arith.extui %248 : vector<8x128xi1> to vector<8x128xi32>
    %250 = arith.sitofp %249 : vector<8x128xi32> to vector<8x128xf32>
    %251 = arith.truncf %250 : vector<8x128xf32> to vector<8x128xbf16>
    %c22 = arith.constant 22 : index
    %c0_68 = arith.constant 0 : index
    %c0_69 = arith.constant 0 : index
    %252 = vector.load %arg2[%c22, %c0_68, %c0_69] : memref<32x128x128xbf16, #tpu.memory_space<vmem>>, vector<1x128x128xbf16>
    %253 = vector.shape_cast %252 : vector<1x128x128xbf16> to vector<128x128xbf16>
    %cst_70 = arith.constant dense<0.000000e+00> : vector<8x128xf32>
    %254 = tpu.matmul %251, %253, %cst_70 {dimension_numbers = #tpu.dot_dimension_numbers<[1], [0], [0], [1], [0, 0, 1, 1], [], []>} : vector<8x128xbf16>, vector<128x128xbf16>, vector<8x128xf32> -> vector<8x128xf32>
    %255 = arith.addf %244, %254 : vector<8x128xf32>
    %256 = vector.extract_strided_slice %0 {offsets = [0, 23], sizes = [8, 1], strides = [1, 1]} : vector<8x32xi32> to vector<8x1xi32>
    %257 = vector.broadcast %256 : vector<8x1xi32> to vector<8x128xi32>
    %258 = vector.broadcast %1 : vector<1x128xi32> to vector<8x128xi32>
    %259 = arith.cmpi eq, %257, %258 : vector<8x128xi32>
    %260 = arith.extui %259 : vector<8x128xi1> to vector<8x128xi32>
    %261 = arith.sitofp %260 : vector<8x128xi32> to vector<8x128xf32>
    %262 = arith.truncf %261 : vector<8x128xf32> to vector<8x128xbf16>
    %c23 = arith.constant 23 : index
    %c0_71 = arith.constant 0 : index
    %c0_72 = arith.constant 0 : index
    %263 = vector.load %arg2[%c23, %c0_71, %c0_72] : memref<32x128x128xbf16, #tpu.memory_space<vmem>>, vector<1x128x128xbf16>
    %264 = vector.shape_cast %263 : vector<1x128x128xbf16> to vector<128x128xbf16>
    %cst_73 = arith.constant dense<0.000000e+00> : vector<8x128xf32>
    %265 = tpu.matmul %262, %264, %cst_73 {dimension_numbers = #tpu.dot_dimension_numbers<[1], [0], [0], [1], [0, 0, 1, 1], [], []>} : vector<8x128xbf16>, vector<128x128xbf16>, vector<8x128xf32> -> vector<8x128xf32>
    %266 = arith.addf %255, %265 : vector<8x128xf32>
    %267 = vector.extract_strided_slice %0 {offsets = [0, 24], sizes = [8, 1], strides = [1, 1]} : vector<8x32xi32> to vector<8x1xi32>
    %268 = vector.broadcast %267 : vector<8x1xi32> to vector<8x128xi32>
    %269 = vector.broadcast %1 : vector<1x128xi32> to vector<8x128xi32>
    %270 = arith.cmpi eq, %268, %269 : vector<8x128xi32>
    %271 = arith.extui %270 : vector<8x128xi1> to vector<8x128xi32>
    %272 = arith.sitofp %271 : vector<8x128xi32> to vector<8x128xf32>
    %273 = arith.truncf %272 : vector<8x128xf32> to vector<8x128xbf16>
    %c24 = arith.constant 24 : index
    %c0_74 = arith.constant 0 : index
    %c0_75 = arith.constant 0 : index
    %274 = vector.load %arg2[%c24, %c0_74, %c0_75] : memref<32x128x128xbf16, #tpu.memory_space<vmem>>, vector<1x128x128xbf16>
    %275 = vector.shape_cast %274 : vector<1x128x128xbf16> to vector<128x128xbf16>
    %cst_76 = arith.constant dense<0.000000e+00> : vector<8x128xf32>
    %276 = tpu.matmul %273, %275, %cst_76 {dimension_numbers = #tpu.dot_dimension_numbers<[1], [0], [0], [1], [0, 0, 1, 1], [], []>} : vector<8x128xbf16>, vector<128x128xbf16>, vector<8x128xf32> -> vector<8x128xf32>
    %277 = arith.addf %266, %276 : vector<8x128xf32>
    %278 = vector.extract_strided_slice %0 {offsets = [0, 25], sizes = [8, 1], strides = [1, 1]} : vector<8x32xi32> to vector<8x1xi32>
    %279 = vector.broadcast %278 : vector<8x1xi32> to vector<8x128xi32>
    %280 = vector.broadcast %1 : vector<1x128xi32> to vector<8x128xi32>
    %281 = arith.cmpi eq, %279, %280 : vector<8x128xi32>
    %282 = arith.extui %281 : vector<8x128xi1> to vector<8x128xi32>
    %283 = arith.sitofp %282 : vector<8x128xi32> to vector<8x128xf32>
    %284 = arith.truncf %283 : vector<8x128xf32> to vector<8x128xbf16>
    %c25 = arith.constant 25 : index
    %c0_77 = arith.constant 0 : index
    %c0_78 = arith.constant 0 : index
    %285 = vector.load %arg2[%c25, %c0_77, %c0_78] : memref<32x128x128xbf16, #tpu.memory_space<vmem>>, vector<1x128x128xbf16>
    %286 = vector.shape_cast %285 : vector<1x128x128xbf16> to vector<128x128xbf16>
    %cst_79 = arith.constant dense<0.000000e+00> : vector<8x128xf32>
    %287 = tpu.matmul %284, %286, %cst_79 {dimension_numbers = #tpu.dot_dimension_numbers<[1], [0], [0], [1], [0, 0, 1, 1], [], []>} : vector<8x128xbf16>, vector<128x128xbf16>, vector<8x128xf32> -> vector<8x128xf32>
    %288 = arith.addf %277, %287 : vector<8x128xf32>
    %289 = vector.extract_strided_slice %0 {offsets = [0, 26], sizes = [8, 1], strides = [1, 1]} : vector<8x32xi32> to vector<8x1xi32>
    %290 = vector.broadcast %289 : vector<8x1xi32> to vector<8x128xi32>
    %291 = vector.broadcast %1 : vector<1x128xi32> to vector<8x128xi32>
    %292 = arith.cmpi eq, %290, %291 : vector<8x128xi32>
    %293 = arith.extui %292 : vector<8x128xi1> to vector<8x128xi32>
    %294 = arith.sitofp %293 : vector<8x128xi32> to vector<8x128xf32>
    %295 = arith.truncf %294 : vector<8x128xf32> to vector<8x128xbf16>
    %c26 = arith.constant 26 : index
    %c0_80 = arith.constant 0 : index
    %c0_81 = arith.constant 0 : index
    %296 = vector.load %arg2[%c26, %c0_80, %c0_81] : memref<32x128x128xbf16, #tpu.memory_space<vmem>>, vector<1x128x128xbf16>
    %297 = vector.shape_cast %296 : vector<1x128x128xbf16> to vector<128x128xbf16>
    %cst_82 = arith.constant dense<0.000000e+00> : vector<8x128xf32>
    %298 = tpu.matmul %295, %297, %cst_82 {dimension_numbers = #tpu.dot_dimension_numbers<[1], [0], [0], [1], [0, 0, 1, 1], [], []>} : vector<8x128xbf16>, vector<128x128xbf16>, vector<8x128xf32> -> vector<8x128xf32>
    %299 = arith.addf %288, %298 : vector<8x128xf32>
    %300 = vector.extract_strided_slice %0 {offsets = [0, 27], sizes = [8, 1], strides = [1, 1]} : vector<8x32xi32> to vector<8x1xi32>
    %301 = vector.broadcast %300 : vector<8x1xi32> to vector<8x128xi32>
    %302 = vector.broadcast %1 : vector<1x128xi32> to vector<8x128xi32>
    %303 = arith.cmpi eq, %301, %302 : vector<8x128xi32>
    %304 = arith.extui %303 : vector<8x128xi1> to vector<8x128xi32>
    %305 = arith.sitofp %304 : vector<8x128xi32> to vector<8x128xf32>
    %306 = arith.truncf %305 : vector<8x128xf32> to vector<8x128xbf16>
    %c27 = arith.constant 27 : index
    %c0_83 = arith.constant 0 : index
    %c0_84 = arith.constant 0 : index
    %307 = vector.load %arg2[%c27, %c0_83, %c0_84] : memref<32x128x128xbf16, #tpu.memory_space<vmem>>, vector<1x128x128xbf16>
    %308 = vector.shape_cast %307 : vector<1x128x128xbf16> to vector<128x128xbf16>
    %cst_85 = arith.constant dense<0.000000e+00> : vector<8x128xf32>
    %309 = tpu.matmul %306, %308, %cst_85 {dimension_numbers = #tpu.dot_dimension_numbers<[1], [0], [0], [1], [0, 0, 1, 1], [], []>} : vector<8x128xbf16>, vector<128x128xbf16>, vector<8x128xf32> -> vector<8x128xf32>
    %310 = arith.addf %299, %309 : vector<8x128xf32>
    %311 = vector.extract_strided_slice %0 {offsets = [0, 28], sizes = [8, 1], strides = [1, 1]} : vector<8x32xi32> to vector<8x1xi32>
    %312 = vector.broadcast %311 : vector<8x1xi32> to vector<8x128xi32>
    %313 = vector.broadcast %1 : vector<1x128xi32> to vector<8x128xi32>
    %314 = arith.cmpi eq, %312, %313 : vector<8x128xi32>
    %315 = arith.extui %314 : vector<8x128xi1> to vector<8x128xi32>
    %316 = arith.sitofp %315 : vector<8x128xi32> to vector<8x128xf32>
    %317 = arith.truncf %316 : vector<8x128xf32> to vector<8x128xbf16>
    %c28 = arith.constant 28 : index
    %c0_86 = arith.constant 0 : index
    %c0_87 = arith.constant 0 : index
    %318 = vector.load %arg2[%c28, %c0_86, %c0_87] : memref<32x128x128xbf16, #tpu.memory_space<vmem>>, vector<1x128x128xbf16>
    %319 = vector.shape_cast %318 : vector<1x128x128xbf16> to vector<128x128xbf16>
    %cst_88 = arith.constant dense<0.000000e+00> : vector<8x128xf32>
    %320 = tpu.matmul %317, %319, %cst_88 {dimension_numbers = #tpu.dot_dimension_numbers<[1], [0], [0], [1], [0, 0, 1, 1], [], []>} : vector<8x128xbf16>, vector<128x128xbf16>, vector<8x128xf32> -> vector<8x128xf32>
    %321 = arith.addf %310, %320 : vector<8x128xf32>
    %322 = vector.extract_strided_slice %0 {offsets = [0, 29], sizes = [8, 1], strides = [1, 1]} : vector<8x32xi32> to vector<8x1xi32>
    %323 = vector.broadcast %322 : vector<8x1xi32> to vector<8x128xi32>
    %324 = vector.broadcast %1 : vector<1x128xi32> to vector<8x128xi32>
    %325 = arith.cmpi eq, %323, %324 : vector<8x128xi32>
    %326 = arith.extui %325 : vector<8x128xi1> to vector<8x128xi32>
    %327 = arith.sitofp %326 : vector<8x128xi32> to vector<8x128xf32>
    %328 = arith.truncf %327 : vector<8x128xf32> to vector<8x128xbf16>
    %c29 = arith.constant 29 : index
    %c0_89 = arith.constant 0 : index
    %c0_90 = arith.constant 0 : index
    %329 = vector.load %arg2[%c29, %c0_89, %c0_90] : memref<32x128x128xbf16, #tpu.memory_space<vmem>>, vector<1x128x128xbf16>
    %330 = vector.shape_cast %329 : vector<1x128x128xbf16> to vector<128x128xbf16>
    %cst_91 = arith.constant dense<0.000000e+00> : vector<8x128xf32>
    %331 = tpu.matmul %328, %330, %cst_91 {dimension_numbers = #tpu.dot_dimension_numbers<[1], [0], [0], [1], [0, 0, 1, 1], [], []>} : vector<8x128xbf16>, vector<128x128xbf16>, vector<8x128xf32> -> vector<8x128xf32>
    %332 = arith.addf %321, %331 : vector<8x128xf32>
    %333 = vector.extract_strided_slice %0 {offsets = [0, 30], sizes = [8, 1], strides = [1, 1]} : vector<8x32xi32> to vector<8x1xi32>
    %334 = vector.broadcast %333 : vector<8x1xi32> to vector<8x128xi32>
    %335 = vector.broadcast %1 : vector<1x128xi32> to vector<8x128xi32>
    %336 = arith.cmpi eq, %334, %335 : vector<8x128xi32>
    %337 = arith.extui %336 : vector<8x128xi1> to vector<8x128xi32>
    %338 = arith.sitofp %337 : vector<8x128xi32> to vector<8x128xf32>
    %339 = arith.truncf %338 : vector<8x128xf32> to vector<8x128xbf16>
    %c30 = arith.constant 30 : index
    %c0_92 = arith.constant 0 : index
    %c0_93 = arith.constant 0 : index
    %340 = vector.load %arg2[%c30, %c0_92, %c0_93] : memref<32x128x128xbf16, #tpu.memory_space<vmem>>, vector<1x128x128xbf16>
    %341 = vector.shape_cast %340 : vector<1x128x128xbf16> to vector<128x128xbf16>
    %cst_94 = arith.constant dense<0.000000e+00> : vector<8x128xf32>
    %342 = tpu.matmul %339, %341, %cst_94 {dimension_numbers = #tpu.dot_dimension_numbers<[1], [0], [0], [1], [0, 0, 1, 1], [], []>} : vector<8x128xbf16>, vector<128x128xbf16>, vector<8x128xf32> -> vector<8x128xf32>
    %343 = arith.addf %332, %342 : vector<8x128xf32>
    %344 = vector.extract_strided_slice %0 {offsets = [0, 31], sizes = [8, 1], strides = [1, 1]} : vector<8x32xi32> to vector<8x1xi32>
    %345 = vector.broadcast %344 : vector<8x1xi32> to vector<8x128xi32>
    %346 = vector.broadcast %1 : vector<1x128xi32> to vector<8x128xi32>
    %347 = arith.cmpi eq, %345, %346 : vector<8x128xi32>
    %348 = arith.extui %347 : vector<8x128xi1> to vector<8x128xi32>
    %349 = arith.sitofp %348 : vector<8x128xi32> to vector<8x128xf32>
    %350 = arith.truncf %349 : vector<8x128xf32> to vector<8x128xbf16>
    %c31 = arith.constant 31 : index
    %c0_95 = arith.constant 0 : index
    %c0_96 = arith.constant 0 : index
    %351 = vector.load %arg2[%c31, %c0_95, %c0_96] : memref<32x128x128xbf16, #tpu.memory_space<vmem>>, vector<1x128x128xbf16>
    %352 = vector.shape_cast %351 : vector<1x128x128xbf16> to vector<128x128xbf16>
    %cst_97 = arith.constant dense<0.000000e+00> : vector<8x128xf32>
    %353 = tpu.matmul %350, %352, %cst_97 {dimension_numbers = #tpu.dot_dimension_numbers<[1], [0], [0], [1], [0, 0, 1, 1], [], []>} : vector<8x128xbf16>, vector<128x128xbf16>, vector<8x128xf32> -> vector<8x128xf32>
    %354 = arith.addf %343, %353 : vector<8x128xf32>
    %c0_98 = arith.constant 0 : index
    %c0_99 = arith.constant 0 : index
    %355 = vector.load %arg3[%c0_98, %c0_99] : memref<1x128xf32, #tpu.memory_space<vmem>>, vector<1x128xf32>
    %356 = vector.broadcast %355 : vector<1x128xf32> to vector<8x128xf32>
    %357 = arith.addf %354, %356 : vector<8x128xf32>
    %cst_100 = arith.constant 0.000000e+00 : f32
    %358 = vector.broadcast %cst_100 : f32 to vector<8x128xf32>
    %359 = arith.maximumf %357, %358 : vector<8x128xf32>
    %360 = arith.truncf %359 : vector<8x128xf32> to vector<8x128xbf16>
    %c0_101 = arith.constant 0 : index
    %c0_102 = arith.constant 0 : index
    %361 = vector.load %arg4[%c0_101, %c0_102] : memref<128x128xbf16, #tpu.memory_space<vmem>>, vector<128x128xbf16>
    %cst_103 = arith.constant dense<0.000000e+00> : vector<8x128xf32>
    %362 = tpu.matmul %360, %361, %cst_103 {dimension_numbers = #tpu.dot_dimension_numbers<[1], [0], [0], [1], [0, 0, 1, 1], [], []>} : vector<8x128xbf16>, vector<128x128xbf16>, vector<8x128xf32> -> vector<8x128xf32>
    %c0_104 = arith.constant 0 : index
    %c0_105 = arith.constant 0 : index
    %363 = vector.load %arg5[%c0_104, %c0_105] : memref<1x128xf32, #tpu.memory_space<vmem>>, vector<1x128xf32>
    %364 = vector.broadcast %363 : vector<1x128xf32> to vector<8x128xf32>
    %365 = arith.addf %362, %364 : vector<8x128xf32>
    %cst_106 = arith.constant 0.000000e+00 : f32
    %366 = vector.broadcast %cst_106 : f32 to vector<8x128xf32>
    %367 = arith.maximumf %365, %366 : vector<8x128xf32>
    %368 = arith.truncf %367 : vector<8x128xf32> to vector<8x128xbf16>
    %c0_107 = arith.constant 0 : index
    %c0_108 = arith.constant 0 : index
    %369 = vector.load %arg6[%c0_107, %c0_108] : memref<128x256xbf16, #tpu.memory_space<vmem>>, vector<128x256xbf16>
    %cst_109 = arith.constant dense<0.000000e+00> : vector<8x256xf32>
    %370 = tpu.matmul %368, %369, %cst_109 {dimension_numbers = #tpu.dot_dimension_numbers<[1], [0], [0], [1], [0, 0, 1, 1], [], []>} : vector<8x128xbf16>, vector<128x256xbf16>, vector<8x256xf32> -> vector<8x256xf32>
    %c0_110 = arith.constant 0 : index
    %c0_111 = arith.constant 0 : index
    %371 = vector.load %arg7[%c0_110, %c0_111] : memref<1x256xf32, #tpu.memory_space<vmem>>, vector<1x256xf32>
    %372 = vector.broadcast %371 : vector<1x256xf32> to vector<8x256xf32>
    %373 = arith.addf %370, %372 : vector<8x256xf32>
    %c0_112 = arith.constant 0 : index
    %c0_113 = arith.constant 0 : index
    %374 = vector.load %arg8[%c0_112, %c0_113] : memref<8x256xf32, #tpu.memory_space<vmem>>, vector<8x256xf32>
    tpu.vector_store %arg8[%c0_112, %c0_113], %373 {strides = array<i32>} : memref<8x256xf32, #tpu.memory_space<vmem>>, vector<8x256xf32>,
    return
  }
  func.func @transform_0(%arg0: i32) -> (i32, i32) {
    %c0_i32 = arith.constant 0 : i32
    %c0_i32_0 = arith.constant 0 : i32
    %c0_i32_1 = arith.constant 0 : i32
    return %c0_i32, %c0_i32_0 : i32, i32
  }
  func.func @transform_1(%arg0: i32) -> (i32, i32, i32) {
    %c0_i32 = arith.constant 0 : i32
    %c0_i32_0 = arith.constant 0 : i32
    %c0_i32_1 = arith.constant 0 : i32
    %c0_i32_2 = arith.constant 0 : i32
    return %c0_i32, %c0_i32_0, %c0_i32_1 : i32, i32, i32
  }
  func.func @transform_2(%arg0: i32) -> (i32, i32) {
    %c0_i32 = arith.constant 0 : i32
    %c0_i32_0 = arith.constant 0 : i32
    %c0_i32_1 = arith.constant 0 : i32
    return %c0_i32, %c0_i32_0 : i32, i32
  }
  func.func @transform_3(%arg0: i32) -> (i32, i32) {
    %c0_i32 = arith.constant 0 : i32
    %c0_i32_0 = arith.constant 0 : i32
    %c0_i32_1 = arith.constant 0 : i32
    return %c0_i32, %c0_i32_0 : i32, i32
  }
  func.func @transform_4(%arg0: i32) -> (i32, i32) {
    %c0_i32 = arith.constant 0 : i32
    %c0_i32_0 = arith.constant 0 : i32
    %c0_i32_1 = arith.constant 0 : i32
    return %c0_i32, %c0_i32_0 : i32, i32
  }
  func.func @transform_5(%arg0: i32) -> (i32, i32) {
    %c0_i32 = arith.constant 0 : i32
    %c0_i32_0 = arith.constant 0 : i32
    %c0_i32_1 = arith.constant 0 : i32
    return %c0_i32, %c0_i32_0 : i32, i32
  }
  func.func @transform_6(%arg0: i32) -> (i32, i32) {
    %c0_i32 = arith.constant 0 : i32
    %c0_i32_0 = arith.constant 0 : i32
    %c0_i32_1 = arith.constant 0 : i32
    return %c0_i32, %c0_i32_0 : i32, i32
  }
  func.func @transform_7(%arg0: i32) -> (i32, i32) {
    %c0_i32 = arith.constant 0 : i32
    %c0_i32_0 = arith.constant 0 : i32
    %c0_i32_1 = arith.constant 0 : i32
    return %c0_i32, %c0_i32_0 : i32, i32
  }
}

</mosaic_0001>

<llo_original>
// kernel: tpu_custom_call.1
$region0: #{tpu_custom_call.1}
  #allocation0 [shape = 'u32[]', space=smem, size = 0x4, offset = 0x4, fixed_abs, tag = 'smem constant byte address 0x4 - core index']
  #allocation1 [shape = 'u32[72,128]{1,0:T(1,128)}', space=vmem, size = 0x9000, scoped, tag = 'internal scratch']
  %s0 = inlined_call_operand.hbm [shape: s32[8,32], index: 0, kind: input, shape index: {}]
  %s1 = inlined_call_operand.hbm [shape: bf16[32,128,128], index: 1, kind: input, shape index: {}]
  %s2 = inlined_call_operand.vmem [shape: f32[1,128], index: 2, kind: input, shape index: {}]
  %s3 = inlined_call_operand.hbm [shape: bf16[128,128], index: 3, kind: input, shape index: {}]
  %s4 = inlined_call_operand.hbm [shape: f32[1,128], index: 4, kind: input, shape index: {}]
  %s5 = inlined_call_operand.hbm [shape: bf16[128,256], index: 5, kind: input, shape index: {}]
  %s6 = inlined_call_operand.vmem [shape: f32[1,256], index: 6, kind: input, shape index: {}]
  %s7 = inlined_call_operand.hbm [shape: f32[8,256], index: 7, kind: output, shape index: {}]
  %s8 = sld [smem:[#allocation0]]
  $region58: #{tpu_custom_call.1} parent=0
    _
  %s10 = ssub.s32 1, %s8
  %s11 = scalar_select 0, %s10, %s8
  $region1: #{tpu_custom_call.1} parent=0
    #allocation2 [shape = 'u8[4096]{0}', space=vmem, size = 0x1000, scoped, tag = 'input window, operand 0, single buffered']
    #allocation3 [shape = 's32[1]{0}', space=sflag, size = 0x4, scoped, tag = 'scoped memory for tpu_custom_call.1']
    #allocation4 [shape = 's32[1]{0}', space=sflag, size = 0x4, scoped, tag = 'scoped memory for tpu_custom_call.1']
    #allocation5 [shape = 'u8[1048576]{0}', space=vmem, size = 0x100000, scoped, tag = 'input window, operand 1, single buffered']
    #allocation6 [shape = 's32[1]{0}', space=sflag, size = 0x4, scoped, tag = 'scoped memory for tpu_custom_call.1']
    #allocation7 [shape = 'u8[32768]{0}', space=vmem, size = 0x8000, scoped, tag = 'input window, operand 3, single buffered']
    #allocation8 [shape = 'u8[512]{0}', space=vmem, size = 0x400, scoped, tag = 'input window, operand 4, single buffered']
    #allocation9 [shape = 's32[1]{0}', space=sflag, size = 0x4, scoped, tag = 'scoped memory for tpu_custom_call.1']
    #allocation10 [shape = 'u8[65536]{0}', space=vmem, size = 0x10000, scoped, tag = 'input window, operand 5, single buffered']
    #allocation11 [shape = 'u8[8192]{0}', space=vmem, size = 0x2000, scoped, tag = 'output window, operand 0, single buffered']
    %12 = vsyncpa [#allocation3], 0
    %13 = vsyncpa [#allocation6], 0
    %14 = vsyncpa [#allocation9], 0
    %15 = vsyncpa [#allocation4], 0
    // Predicated region
    $region2: #{tpu_custom_call.1} parent=1 // pred_check
      _
    $region3: #{tpu_custom_call.1} parent=1 // pred_check_branch
      %17 = sbr.rel (0) target = $region5
    $region4: #{tpu_custom_call.1} parent=1 // pred_region
      %19 = vsyncadd [#allocation3], 0
      %s21 = sshll.u32 %s0, 4
      %s22 = int_to_ptr.hbm [resolvable:$true] %s21
      %s23 = sshll.u32 [#allocation2], 4
      %s24 = int_to_ptr.vmem [resolvable:$true] %s23
      %26 = dma.hbm_to_vmem [thread:$0]  %s22, 128, %s24, [#allocation3]
    $region5: #{tpu_custom_call.1} parent=1 // pred_fallthru
      _
    // Predicated region
    $region6: #{tpu_custom_call.1} parent=1 // pred_check
      _
    $region7: #{tpu_custom_call.1} parent=1 // pred_check_branch
      %28 = sbr.rel (0) target = $region9
    $region8: #{tpu_custom_call.1} parent=1 // pred_region
      %30 = vsyncadd [#allocation6], 0
      %s31 = sshll.u32 %s1, 4
      %s32 = int_to_ptr.hbm [resolvable:$true] %s31
      %s33 = sshll.u32 [#allocation5], 4
      %s34 = int_to_ptr.vmem [resolvable:$true] %s33
      %39 = dma.hbm_to_vmem [thread:$0]  %s32, 32768, %s34, [#allocation6], 64, 64, 4
    $region9: #{tpu_custom_call.1} parent=1 // pred_fallthru
      _
    // Predicated region
    $region10: #{tpu_custom_call.1} parent=1 // pred_check
      _
    $region11: #{tpu_custom_call.1} parent=1 // pred_check_branch
      %41 = sbr.rel (0) target = $region13
    $region12: #{tpu_custom_call.1} parent=1 // pred_region
      _
    $region13: #{tpu_custom_call.1} parent=1 // pred_fallthru
      _
    // Predicated region
    $region14: #{tpu_custom_call.1} parent=1 // pred_check
      _
    $region15: #{tpu_custom_call.1} parent=1 // pred_check_branch
      %43 = sbr.rel (0) target = $region17
    $region16: #{tpu_custom_call.1} parent=1 // pred_region
      %45 = vsyncadd [#allocation6], 0
      %s46 = sshll.u32 %s3, 4
      %s47 = int_to_ptr.hbm [resolvable:$true] %s46
      %s48 = sshll.u32 [#allocation7], 4
      %s49 = int_to_ptr.vmem [resolvable:$true] %s48
      %54 = dma.hbm_to_vmem [thread:$0]  %s47, 1024, %s49, [#allocation6], 64, 64, 4
    $region17: #{tpu_custom_call.1} parent=1 // pred_fallthru
      _
    // Predicated region
    $region18: #{tpu_custom_call.1} parent=1 // pred_check
      _
    $region19: #{tpu_custom_call.1} parent=1 // pred_check_branch
      %56 = sbr.rel (0) target = $region21
    $region20: #{tpu_custom_call.1} parent=1 // pred_region
      %58 = vsyncadd [#allocation9], 0
      %s60 = sshll.u32 %s4, 4
      %s61 = int_to_ptr.hbm [resolvable:$true] %s60
      %s62 = sshll.u32 [#allocation8], 4
      %s63 = int_to_ptr.vmem [resolvable:$true] %s62
      %65 = dma.hbm_to_vmem [thread:$0]  %s61, 16, %s63, [#allocation9]
    $region21: #{tpu_custom_call.1} parent=1 // pred_fallthru
      _
    // Predicated region
    $region22: #{tpu_custom_call.1} parent=1 // pred_check
      _
    $region23: #{tpu_custom_call.1} parent=1 // pred_check_branch
      %67 = sbr.rel (0) target = $region25
    $region24: #{tpu_custom_call.1} parent=1 // pred_region
      %69 = vsyncadd [#allocation9], 0
      %s70 = sshll.u32 %s5, 4
      %s71 = int_to_ptr.hbm [resolvable:$true] %s70
      %s72 = sshll.u32 [#allocation10], 4
      %s73 = int_to_ptr.vmem [resolvable:$true] %s72
      %78 = dma.hbm_to_vmem [thread:$0]  %s71, 2048, %s73, [#allocation9], 128, 128, 8
    $region25: #{tpu_custom_call.1} parent=1 // pred_fallthru
      _
    // Predicated region
    $region26: #{tpu_custom_call.1} parent=1 // pred_check
      _
    $region27: #{tpu_custom_call.1} parent=1 // pred_check_branch
      %80 = sbr.rel (0) target = $region29
    $region28: #{tpu_custom_call.1} parent=1 // pred_region
      _
    $region29: #{tpu_custom_call.1} parent=1 // pred_fallthru
      _
    // Predicated region
    $region30: #{tpu_custom_call.1} parent=1 // pred_check
      _
    $region31: #{tpu_custom_call.1} parent=1 // pred_check_branch
      %82 = sbr.rel (0) target = $region33
    $region32: #{tpu_custom_call.1} parent=1 // pred_region
      %84 = dma.done [#allocation3], 128
    $region33: #{tpu_custom_call.1} parent=1 // pred_fallthru
      _
    // Predicated region
    $region34: #{tpu_custom_call.1} parent=1 // pred_check
      _
    $region35: #{tpu_custom_call.1} parent=1 // pred_check_branch
      %86 = sbr.rel (0) target = $region37
    $region36: #{tpu_custom_call.1} parent=1 // pred_region
      %88 = dma.done [#allocation6], 32768
    $region37: #{tpu_custom_call.1} parent=1 // pred_fallthru
      _
    // Predicated region
    $region38: #{tpu_custom_call.1} parent=1 // pred_check
      _
    $region39: #{tpu_custom_call.1} parent=1 // pred_check_branch
      %90 = sbr.rel (0) target = $region41
    $region40: #{tpu_custom_call.1} parent=1 // pred_region
      %92 = dma.done [#allocation6], 1024
    $region41: #{tpu_custom_call.1} parent=1 // pred_fallthru
      _
    // Predicated region
    $region42: #{tpu_custom_call.1} parent=1 // pred_check
      _
    $region43: #{tpu_custom_call.1} parent=1 // pred_check_branch
      %94 = sbr.rel (0) target = $region45
    $region44: #{tpu_custom_call.1} parent=1 // pred_region
      %96 = dma.done [#allocation9], 16
    $region45: #{tpu_custom_call.1} parent=1 // pred_fallthru
      _
    // Predicated region
    $region46: #{tpu_custom_call.1} parent=1 // pred_check
      _
    $region47: #{tpu_custom_call.1} parent=1 // pred_check_branch
      %98 = sbr.rel (0) target = $region49
    $region48: #{tpu_custom_call.1} parent=1 // pred_region
      %100 = dma.done [#allocation9], 2048
    $region49: #{tpu_custom_call.1} parent=1 // pred_fallthru
      _
    %v101 = vld [vmem:[#allocation2] sm:$0xff]
    %v102 = vlaneseq
    %v103 = vand.u32 %v102, 127
    %104 = vset.pattern.permute.xlu0 0
    %105 = vperm.xlu0 %104, %v101
    %v106 = vpop.permute.xlu0 %105
    %vm107 = vcmp.eq.s32.totalorder %v106, %v103
    %v108 = vsel %vm107, 1, 0
    %v109 = vcvt.s32.f32 %v108
    %v110 = vpack.c.bf16 %v109, %v109
    %v111 = vld [vmem:[#allocation5] sm:$0xf]
    %v112 = vld [vmem:[#allocation5 + $0x4] sm:$0xf]
    %v113 = vld [vmem:[#allocation5 + $0x8] sm:$0xf]
    %v114 = vld [vmem:[#allocation5 + $0xc] sm:$0xf]
    %v115 = vld [vmem:[#allocation5 + $0x10] sm:$0xf]
    %v116 = vld [vmem:[#allocation5 + $0x14] sm:$0xf]
    %v117 = vld [vmem:[#allocation5 + $0x18] sm:$0xf]
    %v118 = vld [vmem:[#allocation5 + $0x1c] sm:$0xf]
    %v119 = vld [vmem:[#allocation5 + $0x20] sm:$0xf]
    %v120 = vld [vmem:[#allocation5 + $0x24] sm:$0xf]
    %v121 = vld [vmem:[#allocation5 + $0x28] sm:$0xf]
    %v122 = vld [vmem:[#allocation5 + $0x2c] sm:$0xf]
    %v123 = vld [vmem:[#allocation5 + $0x30] sm:$0xf]
    %v124 = vld [vmem:[#allocation5 + $0x34] sm:$0xf]
    %v125 = vld [vmem:[#allocation5 + $0x38] sm:$0xf]
    %v126 = vld [vmem:[#allocation5 + $0x3c] sm:$0xf]
    %127 = vset.pattern.permute.xlu0 1
    %128 = vperm.xlu0 %127, %v101
    %v129 = vpop.permute.xlu0 %128
    %vm130 = vcmp.eq.s32.totalorder %v129, %v103
    %v131 = vsel %vm130, 1, 0
    %v132 = vcvt.s32.f32 %v131
    %v133 = vpack.c.bf16 %v132, %v132
    %s134 = scalar_lea.vmem [#allocation5], 64
    %v135 = vld [vmem:[%s134] sm:$0xf]
    %v136 = vld [vmem:[%s134 + $0x4] sm:$0xf]
    %v137 = vld [vmem:[%s134 + $0x8] sm:$0xf]
    %v138 = vld [vmem:[%s134 + $0xc] sm:$0xf]
    %v139 = vld [vmem:[%s134 + $0x10] sm:$0xf]
    %v140 = vld [vmem:[%s134 + $0x14] sm:$0xf]
    %v141 = vld [vmem:[%s134 + $0x18] sm:$0xf]
    %v142 = vld [vmem:[%s134 + $0x1c] sm:$0xf]
    %v143 = vld [vmem:[%s134 + $0x20] sm:$0xf]
    %v144 = vld [vmem:[%s134 + $0x24] sm:$0xf]
    %v145 = vld [vmem:[%s134 + $0x28] sm:$0xf]
    %v146 = vld [vmem:[%s134 + $0x2c] sm:$0xf]
    %v147 = vld [vmem:[%s134 + $0x30] sm:$0xf]
    %v148 = vld [vmem:[%s134 + $0x34] sm:$0xf]
    %v149 = vld [vmem:[%s134 + $0x38] sm:$0xf]
    %v150 = vld [vmem:[%s134 + $0x3c] sm:$0xf]
    %v167 = vunpack.c.l.b16 %v135
    %v168 = vunpack.c.l.b16 %v136
    %v169 = vunpack.c.l.b16 %v137
    %v170 = vunpack.c.l.b16 %v138
    %v171 = vunpack.c.l.b16 %v139
    %v172 = vunpack.c.l.b16 %v140
    %v173 = vunpack.c.l.b16 %v141
    %v174 = vunpack.c.l.b16 %v142
    %v175 = vunpack.c.l.b16 %v143
    %v176 = vunpack.c.l.b16 %v144
    %v177 = vunpack.c.l.b16 %v145
    %v178 = vunpack.c.l.b16 %v146
    %v179 = vunpack.c.l.b16 %v147
    %v180 = vunpack.c.l.b16 %v148
    %v181 = vunpack.c.l.b16 %v149
    %v182 = vunpack.c.l.b16 %v150
    %v183 = vpack.c.b16 %v168, %v167
    %v184 = vpack.c.b16 %v170, %v169
    %v185 = vpack.c.b16 %v172, %v171
    %v186 = vpack.c.b16 %v174, %v173
    %v187 = vpack.c.b16 %v176, %v175
    %v188 = vpack.c.b16 %v178, %v177
    %v189 = vpack.c.b16 %v180, %v179
    %v190 = vpack.c.b16 %v182, %v181
    %199 = vmatpush.bf16.msra.mxu0 %v190
    %200 = vmatpush.bf16.msra.mxu0 %v189
    %201 = vmatpush.bf16.msra.mxu0 %v188
    %202 = vmatpush.bf16.msra.mxu0 %v187
    %203 = vmatpush.bf16.msra.mxu0 %v186
    %204 = vmatpush.bf16.msra.mxu0 %v185
    %205 = vmatpush.bf16.msra.mxu0 %v184
    %206 = vmatpush.bf16.msra.mxu0 %v183
    %207 = vmatmul.bf16.gmra.mxu0 %v133
    %v208 = vpop.f32.mrf.mxu0
    %v209 = vadd.f32 0.0, %v208
    %v210 = vpop.f32.mrf.mxu0
    %211 = vdwg.mxu0
    %v228 = vunpack.c.l.b16 %v111
    %v229 = vunpack.c.l.b16 %v112
    %v230 = vunpack.c.l.b16 %v113
    %v231 = vunpack.c.l.b16 %v114
    %v232 = vunpack.c.l.b16 %v115
    %v233 = vunpack.c.l.b16 %v116
    %v234 = vunpack.c.l.b16 %v117
    %v235 = vunpack.c.l.b16 %v118
    %v236 = vunpack.c.l.b16 %v119
    %v237 = vunpack.c.l.b16 %v120
    %v238 = vunpack.c.l.b16 %v121
    %v239 = vunpack.c.l.b16 %v122
    %v240 = vunpack.c.l.b16 %v123
    %v241 = vunpack.c.l.b16 %v124
    %v242 = vunpack.c.l.b16 %v125
    %v243 = vunpack.c.l.b16 %v126
    %v244 = vpack.c.b16 %v229, %v228
    %v245 = vpack.c.b16 %v231, %v230
    %v246 = vpack.c.b16 %v233, %v232
    %v247 = vpack.c.b16 %v235, %v234
    %v248 = vpack.c.b16 %v237, %v236
    %v249 = vpack.c.b16 %v239, %v238
    %v250 = vpack.c.b16 %v241, %v240
    %v251 = vpack.c.b16 %v243, %v242
    %260 = vmatpush.bf16.msra.mxu0 %v251
    %261 = vmatpush.bf16.msra.mxu0 %v250
    %262 = vmatpush.bf16.msra.mxu0 %v249
    %263 = vmatpush.bf16.msra.mxu0 %v248
    %264 = vmatpush.bf16.msra.mxu0 %v247
    %265 = vmatpush.bf16.msra.mxu0 %v246
    %266 = vmatpush.bf16.msra.mxu0 %v245
    %267 = vmatpush.bf16.msra.mxu0 %v244
    %268 = vmatmul.bf16.gmra.mxu0 %v110
    %v269 = vpop.f32.mrf.mxu0
    %v270 = vadd.f32 %v209, %v269
    %v271 = vpop.f32.mrf.mxu0
    %272 = vdwg.mxu0
    %273 = vset.pattern.permute.xlu0 2
    %274 = vperm.xlu0 %273, %v101
    %v275 = vpop.permute.xlu0 %274
    %vm276 = vcmp.eq.s32.totalorder %v275, %v103
    %v277 = vsel %vm276, 1, 0
    %v278 = vcvt.s32.f32 %v277
    %v279 = vpack.c.bf16 %v278, %v278
    %s280 = scalar_lea.vmem [#allocation5], 128
    %v281 = vld [vmem:[%s280] sm:$0xf]
    %v282 = vld [vmem:[%s280 + $0x4] sm:$0xf]
    %v283 = vld [vmem:[%s280 + $0x8] sm:$0xf]
    %v284 = vld [vmem:[%s280 + $0xc] sm:$0xf]
    %v285 = vld [vmem:[%s280 + $0x10] sm:$0xf]
    %v286 = vld [vmem:[%s280 + $0x14] sm:$0xf]
    %v287 = vld [vmem:[%s280 + $0x18] sm:$0xf]
    %v288 = vld [vmem:[%s280 + $0x1c] sm:$0xf]
    %v289 = vld [vmem:[%s280 + $0x20] sm:$0xf]
    %v290 = vld [vmem:[%s280 + $0x24] sm:$0xf]
    %v291 = vld [vmem:[%s280 + $0x28] sm:$0xf]
    %v292 = vld [vmem:[%s280 + $0x2c] sm:$0xf]
    %v293 = vld [vmem:[%s280 + $0x30] sm:$0xf]
    %v294 = vld [vmem:[%s280 + $0x34] sm:$0xf]
    %v295 = vld [vmem:[%s280 + $0x38] sm:$0xf]
    %v296 = vld [vmem:[%s280 + $0x3c] sm:$0xf]
    %v313 = vunpack.c.l.b16 %v281
    %v314 = vunpack.c.l.b16 %v282
    %v315 = vunpack.c.l.b16 %v283
    %v316 = vunpack.c.l.b16 %v284
    %v317 = vunpack.c.l.b16 %v285
    %v318 = vunpack.c.l.b16 %v286
    %v319 = vunpack.c.l.b16 %v287
    %v320 = vunpack.c.l.b16 %v288
    %v321 = vunpack.c.l.b16 %v289
    %v322 = vunpack.c.l.b16 %v290
    %v323 = vunpack.c.l.b16 %v291
    %v324 = vunpack.c.l.b16 %v292
    %v325 = vunpack.c.l.b16 %v293
    %v326 = vunpack.c.l.b16 %v294
    %v327 = vunpack.c.l.b16 %v295
    %v328 = vunpack.c.l.b16 %v296
    %v329 = vpack.c.b16 %v314, %v313
    %v330 = vpack.c.b16 %v316, %v315
    %v331 = vpack.c.b16 %v318, %v317
    %v332 = vpack.c.b16 %v320, %v319
    %v333 = vpack.c.b16 %v322, %v321
    %v334 = vpack.c.b16 %v324, %v323
    %v335 = vpack.c.b16 %v326, %v325
    %v336 = vpack.c.b16 %v328, %v327
    %345 = vmatpush.bf16.msra.mxu0 %v336
    %346 = vmatpush.bf16.msra.mxu0 %v335
    %347 = vmatpush.bf16.msra.mxu0 %v334
    %348 = vmatpush.bf16.msra.mxu0 %v333
    %349 = vmatpush.bf16.msra.mxu0 %v332
    %350 = vmatpush.bf16.msra.mxu0 %v331
    %351 = vmatpush.bf16.msra.mxu0 %v330
    %352 = vmatpush.bf16.msra.mxu0 %v329
    %353 = vmatmul.bf16.gmra.mxu0 %v279
    %v354 = vpop.f32.mrf.mxu0
    %v355 = vadd.f32 0.0, %v354
    %v356 = vpop.f32.mrf.mxu0
    %357 = vdwg.mxu0
    %v358 = vadd.f32 %v270, %v355
    %359 = vset.pattern.permute.xlu0 3
    %360 = vperm.xlu0 %359, %v101
    %v361 = vpop.permute.xlu0 %360
    %vm362 = vcmp.eq.s32.totalorder %v361, %v103
    %v363 = vsel %vm362, 1, 0
    %v364 = vcvt.s32.f32 %v363
    %v365 = vpack.c.bf16 %v364, %v364
    %s366 = scalar_lea.vmem [#allocation5], 192
    %v367 = vld [vmem:[%s366] sm:$0xf]
    %v368 = vld [vmem:[%s366 + $0x4] sm:$0xf]
    %v369 = vld [vmem:[%s366 + $0x8] sm:$0xf]
    %v370 = vld [vmem:[%s366 + $0xc] sm:$0xf]
    %v371 = vld [vmem:[%s366 + $0x10] sm:$0xf]
    %v372 = vld [vmem:[%s366 + $0x14] sm:$0xf]
    %v373 = vld [vmem:[%s366 + $0x18] sm:$0xf]
    %v374 = vld [vmem:[%s366 + $0x1c] sm:$0xf]
    %v375 = vld [vmem:[%s366 + $0x20] sm:$0xf]
    %v376 = vld [vmem:[%s366 + $0x24] sm:$0xf]
    %v377 = vld [vmem:[%s366 + $0x28] sm:$0xf]
    %v378 = vld [vmem:[%s366 + $0x2c] sm:$0xf]
    %v379 = vld [vmem:[%s366 + $0x30] sm:$0xf]
    %v380 = vld [vmem:[%s366 + $0x34] sm:$0xf]
    %v381 = vld [vmem:[%s366 + $0x38] sm:$0xf]
    %v382 = vld [vmem:[%s366 + $0x3c] sm:$0xf]
    %v399 = vunpack.c.l.b16 %v367
    %v400 = vunpack.c.l.b16 %v368
    %v401 = vunpack.c.l.b16 %v369
    %v402 = vunpack.c.l.b16 %v370
    %v403 = vunpack.c.l.b16 %v371
    %v404 = vunpack.c.l.b16 %v372
    %v405 = vunpack.c.l.b16 %v373
    %v406 = vunpack.c.l.b16 %v374
    %v407 = vunpack.c.l.b16 %v375
    %v408 = vunpack.c.l.b16 %v376
    %v409 = vunpack.c.l.b16 %v377
    %v410 = vunpack.c.l.b16 %v378
    %v411 = vunpack.c.l.b16 %v379
    %v412 = vunpack.c.l.b16 %v380
    %v413 = vunpack.c.l.b16 %v381
    %v414 = vunpack.c.l.b16 %v382
    %v415 = vpack.c.b16 %v400, %v399
    %v416 = vpack.c.b16 %v402, %v401
    %v417 = vpack.c.b16 %v404, %v403
    %v418 = vpack.c.b16 %v406, %v405
    %v419 = vpack.c.b16 %v408, %v407
    %v420 = vpack.c.b16 %v410, %v409
    %v421 = vpack.c.b16 %v412, %v411
    %v422 = vpack.c.b16 %v414, %v413
    %431 = vmatpush.bf16.msra.mxu0 %v422
    %432 = vmatpush.bf16.msra.mxu0 %v421
    %433 = vmatpush.bf16.msra.mxu0 %v420
    %434 = vmatpush.bf16.msra.mxu0 %v419
    %435 = vmatpush.bf16.msra.mxu0 %v418
    %436 = vmatpush.bf16.msra.mxu0 %v417
    %437 = vmatpush.bf16.msra.mxu0 %v416
    %438 = vmatpush.bf16.msra.mxu0 %v415
    %439 = vmatmul.bf16.gmra.mxu0 %v365
    %v440 = vpop.f32.mrf.mxu0
    %v441 = vadd.f32 0.0, %v440
    %v442 = vpop.f32.mrf.mxu0
    %443 = vdwg.mxu0
    %v444 = vadd.f32 %v358, %v441
    %445 = vset.pattern.permute.xlu0 4
    %446 = vperm.xlu0 %445, %v101
    %v447 = vpop.permute.xlu0 %446
    %vm448 = vcmp.eq.s32.totalorder %v447, %v103
    %v449 = vsel %vm448, 1, 0
    %v450 = vcvt.s32.f32 %v449
    %v451 = vpack.c.bf16 %v450, %v450
    %s452 = scalar_lea.vmem [#allocation5], 256
    %v453 = vld [vmem:[%s452] sm:$0xf]
    %v454 = vld [vmem:[%s452 + $0x4] sm:$0xf]
    %v455 = vld [vmem:[%s452 + $0x8] sm:$0xf]
    %v456 = vld [vmem:[%s452 + $0xc] sm:$0xf]
    %v457 = vld [vmem:[%s452 + $0x10] sm:$0xf]
    %v458 = vld [vmem:[%s452 + $0x14] sm:$0xf]
    %v459 = vld [vmem:[%s452 + $0x18] sm:$0xf]
    %v460 = vld [vmem:[%s452 + $0x1c] sm:$0xf]
    %v461 = vld [vmem:[%s452 + $0x20] sm:$0xf]
    %v462 = vld [vmem:[%s452 + $0x24] sm:$0xf]
    %v463 = vld [vmem:[%s452 + $0x28] sm:$0xf]
    %v464 = vld [vmem:[%s452 + $0x2c] sm:$0xf]
    %v465 = vld [vmem:[%s452 + $0x30] sm:$0xf]
    %v466 = vld [vmem:[%s452 + $0x34] sm:$0xf]
    %v467 = vld [vmem:[%s452 + $0x38] sm:$0xf]
    %v468 = vld [vmem:[%s452 + $0x3c] sm:$0xf]
    %v485 = vunpack.c.l.b16 %v453
    %v486 = vunpack.c.l.b16 %v454
    %v487 = vunpack.c.l.b16 %v455
    %v488 = vunpack.c.l.b16 %v456
    %v489 = vunpack.c.l.b16 %v457
    %v490 = vunpack.c.l.b16 %v458
    %v491 = vunpack.c.l.b16 %v459
    %v492 = vunpack.c.l.b16 %v460
    %v493 = vunpack.c.l.b16 %v461
    %v494 = vunpack.c.l.b16 %v462
    %v495 = vunpack.c.l.b16 %v463
    %v496 = vunpack.c.l.b16 %v464
    %v497 = vunpack.c.l.b16 %v465
    %v498 = vunpack.c.l.b16 %v466
    %v499 = vunpack.c.l.b16 %v467
    %v500 = vunpack.c.l.b16 %v468
    %v501 = vpack.c.b16 %v486, %v485
    %v502 = vpack.c.b16 %v488, %v487
    %v503 = vpack.c.b16 %v490, %v489
    %v504 = vpack.c.b16 %v492, %v491
    %v505 = vpack.c.b16 %v494, %v493
    %v506 = vpack.c.b16 %v496, %v495
    %v507 = vpack.c.b16 %v498, %v497
    %v508 = vpack.c.b16 %v500, %v499
    %517 = vmatpush.bf16.msra.mxu0 %v508
    %518 = vmatpush.bf16.msra.mxu0 %v507
    %519 = vmatpush.bf16.msra.mxu0 %v506
    %520 = vmatpush.bf16.msra.mxu0 %v505
    %521 = vmatpush.bf16.msra.mxu0 %v504
    %522 = vmatpush.bf16.msra.mxu0 %v503
    %523 = vmatpush.bf16.msra.mxu0 %v502
    %524 = vmatpush.bf16.msra.mxu0 %v501
    %525 = vmatmul.bf16.gmra.mxu0 %v451
    %v526 = vpop.f32.mrf.mxu0
    %v527 = vadd.f32 0.0, %v526
    %v528 = vpop.f32.mrf.mxu0
    %529 = vdwg.mxu0
    %v530 = vadd.f32 %v444, %v527
    %531 = vset.pattern.permute.xlu0 5
    %532 = vperm.xlu0 %531, %v101
    %v533 = vpop.permute.xlu0 %532
    %vm534 = vcmp.eq.s32.totalorder %v533, %v103
    %v535 = vsel %vm534, 1, 0
    %v536 = vcvt.s32.f32 %v535
    %v537 = vpack.c.bf16 %v536, %v536
    %s538 = scalar_lea.vmem [#allocation5], 320
    %v539 = vld [vmem:[%s538] sm:$0xf]
    %v540 = vld [vmem:[%s538 + $0x4] sm:$0xf]
    %v541 = vld [vmem:[%s538 + $0x8] sm:$0xf]
    %v542 = vld [vmem:[%s538 + $0xc] sm:$0xf]
    %v543 = vld [vmem:[%s538 + $0x10] sm:$0xf]
    %v544 = vld [vmem:[%s538 + $0x14] sm:$0xf]
    %v545 = vld [vmem:[%s538 + $0x18] sm:$0xf]
    %v546 = vld [vmem:[%s538 + $0x1c] sm:$0xf]
    %v547 = vld [vmem:[%s538 + $0x20] sm:$0xf]
    %v548 = vld [vmem:[%s538 + $0x24] sm:$0xf]
    %v549 = vld [vmem:[%s538 + $0x28] sm:$0xf]
    %v550 = vld [vmem:[%s538 + $0x2c] sm:$0xf]
    %v551 = vld [vmem:[%s538 + $0x30] sm:$0xf]
    %v552 = vld [vmem:[%s538 + $0x34] sm:$0xf]
    %v553 = vld [vmem:[%s538 + $0x38] sm:$0xf]
    %v554 = vld [vmem:[%s538 + $0x3c] sm:$0xf]
    %v571 = vunpack.c.l.b16 %v539
    %v572 = vunpack.c.l.b16 %v540
    %v573 = vunpack.c.l.b16 %v541
    %v574 = vunpack.c.l.b16 %v542
    %v575 = vunpack.c.l.b16 %v543
    %v576 = vunpack.c.l.b16 %v544
    %v577 = vunpack.c.l.b16 %v545
    %v578 = vunpack.c.l.b16 %v546
    %v579 = vunpack.c.l.b16 %v547
    %v580 = vunpack.c.l.b16 %v548
    %v581 = vunpack.c.l.b16 %v549
    %v582 = vunpack.c.l.b16 %v550
    %v583 = vunpack.c.l.b16 %v551
    %v584 = vunpack.c.l.b16 %v552
    %v585 = vunpack.c.l.b16 %v553
    %v586 = vunpack.c.l.b16 %v554
    %v587 = vpack.c.b16 %v572, %v571
    %v588 = vpack.c.b16 %v574, %v573
    %v589 = vpack.c.b16 %v576, %v575
    %v590 = vpack.c.b16 %v578, %v577
    %v591 = vpack.c.b16 %v580, %v579
    %v592 = vpack.c.b16 %v582, %v581
    %v593 = vpack.c.b16 %v584, %v583
    %v594 = vpack.c.b16 %v586, %v585
    %603 = vmatpush.bf16.msra.mxu0 %v594
    %604 = vmatpush.bf16.msra.mxu0 %v593
    %605 = vmatpush.bf16.msra.mxu0 %v592
    %606 = vmatpush.bf16.msra.mxu0 %v591
    %607 = vmatpush.bf16.msra.mxu0 %v590
    %608 = vmatpush.bf16.msra.mxu0 %v589
    %609 = vmatpush.bf16.msra.mxu0 %v588
    %610 = vmatpush.bf16.msra.mxu0 %v587
    %611 = vmatmul.bf16.gmra.mxu0 %v537
    %v612 = vpop.f32.mrf.mxu0
    %v613 = vadd.f32 0.0, %v612
    %v614 = vpop.f32.mrf.mxu0
    %615 = vdwg.mxu0
    %v616 = vadd.f32 %v530, %v613
    %617 = vset.pattern.permute.xlu0 6
    %618 = vperm.xlu0 %617, %v101
    %v619 = vpop.permute.xlu0 %618
    %vm620 = vcmp.eq.s32.totalorder %v619, %v103
    %v621 = vsel %vm620, 1, 0
    %v622 = vcvt.s32.f32 %v621
    %v623 = vpack.c.bf16 %v622, %v622
    %s624 = scalar_lea.vmem [#allocation5], 384
    %v625 = vld [vmem:[%s624] sm:$0xf]
    %v626 = vld [vmem:[%s624 + $0x4] sm:$0xf]
    %v627 = vld [vmem:[%s624 + $0x8] sm:$0xf]
    %v628 = vld [vmem:[%s624 + $0xc] sm:$0xf]
    %v629 = vld [vmem:[%s624 + $0x10] sm:$0xf]
    %v630 = vld [vmem:[%s624 + $0x14] sm:$0xf]
    %v631 = vld [vmem:[%s624 + $0x18] sm:$0xf]
    %v632 = vld [vmem:[%s624 + $0x1c] sm:$0xf]
    %v633 = vld [vmem:[%s624 + $0x20] sm:$0xf]
    %v634 = vld [vmem:[%s624 + $0x24] sm:$0xf]
    %v635 = vld [vmem:[%s624 + $0x28] sm:$0xf]
    %v636 = vld [vmem:[%s624 + $0x2c] sm:$0xf]
    %v637 = vld [vmem:[%s624 + $0x30] sm:$0xf]
    %v638 = vld [vmem:[%s624 + $0x34] sm:$0xf]
    %v639 = vld [vmem:[%s624 + $0x38] sm:$0xf]
    %v640 = vld [vmem:[%s624 + $0x3c] sm:$0xf]
    %v657 = vunpack.c.l.b16 %v625
    %v658 = vunpack.c.l.b16 %v626
    %v659 = vunpack.c.l.b16 %v627
    %v660 = vunpack.c.l.b16 %v628
    %v661 = vunpack.c.l.b16 %v629
    %v662 = vunpack.c.l.b16 %v630
    %v663 = vunpack.c.l.b16 %v631
    %v664 = vunpack.c.l.b16 %v632
    %v665 = vunpack.c.l.b16 %v633
    %v666 = vunpack.c.l.b16 %v634
    %v667 = vunpack.c.l.b16 %v635
    %v668 = vunpack.c.l.b16 %v636
    %v669 = vunpack.c.l.b16 %v637
    %v670 = vunpack.c.l.b16 %v638
    %v671 = vunpack.c.l.b16 %v639
    %v672 = vunpack.c.l.b16 %v640
    %v673 = vpack.c.b16 %v658, %v657
    %v674 = vpack.c.b16 %v660, %v659
    %v675 = vpack.c.b16 %v662, %v661
    %v676 = vpack.c.b16 %v664, %v663
    %v677 = vpack.c.b16 %v666, %v665
    %v678 = vpack.c.b16 %v668, %v667
    %v679 = vpack.c.b16 %v670, %v669
    %v680 = vpack.c.b16 %v672, %v671
    %689 = vmatpush.bf16.msra.mxu0 %v680
    %690 = vmatpush.bf16.msra.mxu0 %v679
    %691 = vmatpush.bf16.msra.mxu0 %v678
    %692 = vmatpush.bf16.msra.mxu0 %v677
    %693 = vmatpush.bf16.msra.mxu0 %v676
    %694 = vmatpush.bf16.msra.mxu0 %v675
    %695 = vmatpush.bf16.msra.mxu0 %v674
    %696 = vmatpush.bf16.msra.mxu0 %v673
    %697 = vmatmul.bf16.gmra.mxu0 %v623
    %v698 = vpop.f32.mrf.mxu0
    %v699 = vadd.f32 0.0, %v698
    %v700 = vpop.f32.mrf.mxu0
    %701 = vdwg.mxu0
    %v702 = vadd.f32 %v616, %v699
    %703 = vset.pattern.permute.xlu0 7
    %704 = vperm.xlu0 %703, %v101
    %v705 = vpop.permute.xlu0 %704
    %vm706 = vcmp.eq.s32.totalorder %v705, %v103
    %v707 = vsel %vm706, 1, 0
    %v708 = vcvt.s32.f32 %v707
    %v709 = vpack.c.bf16 %v708, %v708
    %s710 = scalar_lea.vmem [#allocation5], 448
    %v711 = vld [vmem:[%s710] sm:$0xf]
    %v712 = vld [vmem:[%s710 + $0x4] sm:$0xf]
    %v713 = vld [vmem:[%s710 + $0x8] sm:$0xf]
    %v714 = vld [vmem:[%s710 + $0xc] sm:$0xf]
    %v715 = vld [vmem:[%s710 + $0x10] sm:$0xf]
    %v716 = vld [vmem:[%s710 + $0x14] sm:$0xf]
    %v717 = vld [vmem:[%s710 + $0x18] sm:$0xf]
    %v718 = vld [vmem:[%s710 + $0x1c] sm:$0xf]
    %v719 = vld [vmem:[%s710 + $0x20] sm:$0xf]
    %v720 = vld [vmem:[%s710 + $0x24] sm:$0xf]
    %v721 = vld [vmem:[%s710 + $0x28] sm:$0xf]
    %v722 = vld [vmem:[%s710 + $0x2c] sm:$0xf]
    %v723 = vld [vmem:[%s710 + $0x30] sm:$0xf]
    %v724 = vld [vmem:[%s710 + $0x34] sm:$0xf]
    %v725 = vld [vmem:[%s710 + $0x38] sm:$0xf]
    %v726 = vld [vmem:[%s710 + $0x3c] sm:$0xf]
    %v743 = vunpack.c.l.b16 %v711
    %v744 = vunpack.c.l.b16 %v712
    %v745 = vunpack.c.l.b16 %v713
    %v746 = vunpack.c.l.b16 %v714
    %v747 = vunpack.c.l.b16 %v715
    %v748 = vunpack.c.l.b16 %v716
    %v749 = vunpack.c.l.b16 %v717
    %v750 = vunpack.c.l.b16 %v718
    %v751 = vunpack.c.l.b16 %v719
    %v752 = vunpack.c.l.b16 %v720
    %v753 = vunpack.c.l.b16 %v721
    %v754 = vunpack.c.l.b16 %v722
    %v755 = vunpack.c.l.b16 %v723
    %v756 = vunpack.c.l.b16 %v724
    %v757 = vunpack.c.l.b16 %v725
    %v758 = vunpack.c.l.b16 %v726
    %v759 = vpack.c.b16 %v744, %v743
    %v760 = vpack.c.b16 %v746, %v745
    %v761 = vpack.c.b16 %v748, %v747
    %v762 = vpack.c.b16 %v750, %v749
    %v763 = vpack.c.b16 %v752, %v751
    %v764 = vpack.c.b16 %v754, %v753
    %v765 = vpack.c.b16 %v756, %v755
    %v766 = vpack.c.b16 %v758, %v757
    %775 = vmatpush.bf16.msra.mxu0 %v766
    %776 = vmatpush.bf16.msra.mxu0 %v765
    %777 = vmatpush.bf16.msra.mxu0 %v764
    %778 = vmatpush.bf16.msra.mxu0 %v763
    %779 = vmatpush.bf16.msra.mxu0 %v762
    %780 = vmatpush.bf16.msra.mxu0 %v761
    %781 = vmatpush.bf16.msra.mxu0 %v760
    %782 = vmatpush.bf16.msra.mxu0 %v759
    %783 = vmatmul.bf16.gmra.mxu0 %v709
    %v784 = vpop.f32.mrf.mxu0
    %v785 = vadd.f32 0.0, %v784
    %v786 = vpop.f32.mrf.mxu0
    %787 = vdwg.mxu0
    %v788 = vadd.f32 %v702, %v785
    %789 = vset.pattern.permute.xlu0 8
    %790 = vperm.xlu0 %789, %v101
    %v791 = vpop.permute.xlu0 %790
    %vm792 = vcmp.eq.s32.totalorder %v791, %v103
    %v793 = vsel %vm792, 1, 0
    %v794 = vcvt.s32.f32 %v793
    %v795 = vpack.c.bf16 %v794, %v794
    %s796 = scalar_lea.vmem [#allocation5], 512
    %v797 = vld [vmem:[%s796] sm:$0xf]
    %v798 = vld [vmem:[%s796 + $0x4] sm:$0xf]
    %v799 = vld [vmem:[%s796 + $0x8] sm:$0xf]
    %v800 = vld [vmem:[%s796 + $0xc] sm:$0xf]
    %v801 = vld [vmem:[%s796 + $0x10] sm:$0xf]
    %v802 = vld [vmem:[%s796 + $0x14] sm:$0xf]
    %v803 = vld [vmem:[%s796 + $0x18] sm:$0xf]
    %v804 = vld [vmem:[%s796 + $0x1c] sm:$0xf]
    %v805 = vld [vmem:[%s796 + $0x20] sm:$0xf]
    %v806 = vld [vmem:[%s796 + $0x24] sm:$0xf]
    %v807 = vld [vmem:[%s796 + $0x28] sm:$0xf]
    %v808 = vld [vmem:[%s796 + $0x2c] sm:$0xf]
    %v809 = vld [vmem:[%s796 + $0x30] sm:$0xf]
    %v810 = vld [vmem:[%s796 + $0x34] sm:$0xf]
    %v811 = vld [vmem:[%s796 + $0x38] sm:$0xf]
    %v812 = vld [vmem:[%s796 + $0x3c] sm:$0xf]
    %v829 = vunpack.c.l.b16 %v797
    %v830 = vunpack.c.l.b16 %v798
    %v831 = vunpack.c.l.b16 %v799
    %v832 = vunpack.c.l.b16 %v800
    %v833 = vunpack.c.l.b16 %v801
    %v834 = vunpack.c.l.b16 %v802
    %v835 = vunpack.c.l.b16 %v803
    %v836 = vunpack.c.l.b16 %v804
    %v837 = vunpack.c.l.b16 %v805
    %v838 = vunpack.c.l.b16 %v806
    %v839 = vunpack.c.l.b16 %v807
    %v840 = vunpack.c.l.b16 %v808
    %v841 = vunpack.c.l.b16 %v809
    %v842 = vunpack.c.l.b16 %v810
    %v843 = vunpack.c.l.b16 %v811
    %v844 = vunpack.c.l.b16 %v812
    %v845 = vpack.c.b16 %v830, %v829
    %v846 = vpack.c.b16 %v832, %v831
    %v847 = vpack.c.b16 %v834, %v833
    %v848 = vpack.c.b16 %v836, %v835
    %v849 = vpack.c.b16 %v838, %v837
    %v850 = vpack.c.b16 %v840, %v839
    %v851 = vpack.c.b16 %v842, %v841
    %v852 = vpack.c.b16 %v844, %v843
    %861 = vmatpush.bf16.msra.mxu0 %v852
    %862 = vmatpush.bf16.msra.mxu0 %v851
    %863 = vmatpush.bf16.msra.mxu0 %v850
    %864 = vmatpush.bf16.msra.mxu0 %v849
    %865 = vmatpush.bf16.msra.mxu0 %v848
    %866 = vmatpush.bf16.msra.mxu0 %v847
    %867 = vmatpush.bf16.msra.mxu0 %v846
    %868 = vmatpush.bf16.msra.mxu0 %v845
    %869 = vmatmul.bf16.gmra.mxu0 %v795
    %v870 = vpop.f32.mrf.mxu0
    %v871 = vadd.f32 0.0, %v870
    %v872 = vpop.f32.mrf.mxu0
    %873 = vdwg.mxu0
    %v874 = vadd.f32 %v788, %v871
    %875 = vset.pattern.permute.xlu0 9
    %876 = vperm.xlu0 %875, %v101
    %v877 = vpop.permute.xlu0 %876
    %vm878 = vcmp.eq.s32.totalorder %v877, %v103
    %v879 = vsel %vm878, 1, 0
    %v880 = vcvt.s32.f32 %v879
    %v881 = vpack.c.bf16 %v880, %v880
    %s882 = scalar_lea.vmem [#allocation5], 576
    %v883 = vld [vmem:[%s882] sm:$0xf]
    %v884 = vld [vmem:[%s882 + $0x4] sm:$0xf]
    %v885 = vld [vmem:[%s882 + $0x8] sm:$0xf]
    %v886 = vld [vmem:[%s882 + $0xc] sm:$0xf]
    %v887 = vld [vmem:[%s882 + $0x10] sm:$0xf]
    %v888 = vld [vmem:[%s882 + $0x14] sm:$0xf]
    %v889 = vld [vmem:[%s882 + $0x18] sm:$0xf]
    %v890 = vld [vmem:[%s882 + $0x1c] sm:$0xf]
    %v891 = vld [vmem:[%s882 + $0x20] sm:$0xf]
    %v892 = vld [vmem:[%s882 + $0x24] sm:$0xf]
    %v893 = vld [vmem:[%s882 + $0x28] sm:$0xf]
    %v894 = vld [vmem:[%s882 + $0x2c] sm:$0xf]
    %v895 = vld [vmem:[%s882 + $0x30] sm:$0xf]
    %v896 = vld [vmem:[%s882 + $0x34] sm:$0xf]
    %v897 = vld [vmem:[%s882 + $0x38] sm:$0xf]
    %v898 = vld [vmem:[%s882 + $0x3c] sm:$0xf]
    %v915 = vunpack.c.l.b16 %v883
    %v916 = vunpack.c.l.b16 %v884
    %v917 = vunpack.c.l.b16 %v885
    %v918 = vunpack.c.l.b16 %v886
    %v919 = vunpack.c.l.b16 %v887
    %v920 = vunpack.c.l.b16 %v888
    %v921 = vunpack.c.l.b16 %v889
    %v922 = vunpack.c.l.b16 %v890
    %v923 = vunpack.c.l.b16 %v891
    %v924 = vunpack.c.l.b16 %v892
    %v925 = vunpack.c.l.b16 %v893
    %v926 = vunpack.c.l.b16 %v894
    %v927 = vunpack.c.l.b16 %v895
    %v928 = vunpack.c.l.b16 %v896
    %v929 = vunpack.c.l.b16 %v897
    %v930 = vunpack.c.l.b16 %v898
    %v931 = vpack.c.b16 %v916, %v915
    %v932 = vpack.c.b16 %v918, %v917
    %v933 = vpack.c.b16 %v920, %v919
    %v934 = vpack.c.b16 %v922, %v921
    %v935 = vpack.c.b16 %v924, %v923
    %v936 = vpack.c.b16 %v926, %v925
    %v937 = vpack.c.b16 %v928, %v927
    %v938 = vpack.c.b16 %v930, %v929
    %947 = vmatpush.bf16.msra.mxu0 %v938
    %948 = vmatpush.bf16.msra.mxu0 %v937
    %949 = vmatpush.bf16.msra.mxu0 %v936
    %950 = vmatpush.bf16.msra.mxu0 %v935
    %951 = vmatpush.bf16.msra.mxu0 %v934
    %952 = vmatpush.bf16.msra.mxu0 %v933
    %953 = vmatpush.bf16.msra.mxu0 %v932
    %954 = vmatpush.bf16.msra.mxu0 %v931
    %955 = vmatmul.bf16.gmra.mxu0 %v881
    %v956 = vpop.f32.mrf.mxu0
    %v957 = vadd.f32 0.0, %v956
    %v958 = vpop.f32.mrf.mxu0
    %959 = vdwg.mxu0
    %v960 = vadd.f32 %v874, %v957
    %961 = vset.pattern.permute.xlu0 10
    %962 = vperm.xlu0 %961, %v101
    %v963 = vpop.permute.xlu0 %962
    %vm964 = vcmp.eq.s32.totalorder %v963, %v103
    %v965 = vsel %vm964, 1, 0
    %v966 = vcvt.s32.f32 %v965
    %v967 = vpack.c.bf16 %v966, %v966
    %s968 = scalar_lea.vmem [#allocation5], 640
    %v969 = vld [vmem:[%s968] sm:$0xf]
    %v970 = vld [vmem:[%s968 + $0x4] sm:$0xf]
    %v971 = vld [vmem:[%s968 + $0x8] sm:$0xf]
    %v972 = vld [vmem:[%s968 + $0xc] sm:$0xf]
    %v973 = vld [vmem:[%s968 + $0x10] sm:$0xf]
    %v974 = vld [vmem:[%s968 + $0x14] sm:$0xf]
    %v975 = vld [vmem:[%s968 + $0x18] sm:$0xf]
    %v976 = vld [vmem:[%s968 + $0x1c] sm:$0xf]
    %v977 = vld [vmem:[%s968 + $0x20] sm:$0xf]
    %v978 = vld [vmem:[%s968 + $0x24] sm:$0xf]
    %v979 = vld [vmem:[%s968 + $0x28] sm:$0xf]
    %v980 = vld [vmem:[%s968 + $0x2c] sm:$0xf]
    %v981 = vld [vmem:[%s968 + $0x30] sm:$0xf]
    %v982 = vld [vmem:[%s968 + $0x34] sm:$0xf]
    %v983 = vld [vmem:[%s968 + $0x38] sm:$0xf]
    %v984 = vld [vmem:[%s968 + $0x3c] sm:$0xf]
    %v1001 = vunpack.c.l.b16 %v969
    %v1002 = vunpack.c.l.b16 %v970
    %v1003 = vunpack.c.l.b16 %v971
    %v1004 = vunpack.c.l.b16 %v972
    %v1005 = vunpack.c.l.b16 %v973
    %v1006 = vunpack.c.l.b16 %v974
    %v1007 = vunpack.c.l.b16 %v975
    %v1008 = vunpack.c.l.b16 %v976
    %v1009 = vunpack.c.l.b16 %v977
    %v1010 = vunpack.c.l.b16 %v978
    %v1011 = vunpack.c.l.b16 %v979
    %v1012 = vunpack.c.l.b16 %v980
    %v1013 = vunpack.c.l.b16 %v981
    %v1014 = vunpack.c.l.b16 %v982
    %v1015 = vunpack.c.l.b16 %v983
    %v1016 = vunpack.c.l.b16 %v984
    %v1017 = vpack.c.b16 %v1002, %v1001
    %v1018 = vpack.c.b16 %v1004, %v1003
    %v1019 = vpack.c.b16 %v1006, %v1005
    %v1020 = vpack.c.b16 %v1008, %v1007
    %v1021 = vpack.c.b16 %v1010, %v1009
    %v1022 = vpack.c.b16 %v1012, %v1011
    %v1023 = vpack.c.b16 %v1014, %v1013
    %v1024 = vpack.c.b16 %v1016, %v1015
    %1033 = vmatpush.bf16.msra.mxu0 %v1024
    %1034 = vmatpush.bf16.msra.mxu0 %v1023
    %1035 = vmatpush.bf16.msra.mxu0 %v1022
    %1036 = vmatpush.bf16.msra.mxu0 %v1021
    %1037 = vmatpush.bf16.msra.mxu0 %v1020
    %1038 = vmatpush.bf16.msra.mxu0 %v1019
    %1039 = vmatpush.bf16.msra.mxu0 %v1018
    %1040 = vmatpush.bf16.msra.mxu0 %v1017
    %1041 = vmatmul.bf16.gmra.mxu0 %v967
    %v1042 = vpop.f32.mrf.mxu0
    %v1043 = vadd.f32 0.0, %v1042
    %v1044 = vpop.f32.mrf.mxu0
    %1045 = vdwg.mxu0
    %v1046 = vadd.f32 %v960, %v1043
    %1047 = vset.pattern.permute.xlu0 11
    %1048 = vperm.xlu0 %1047, %v101
    %v1049 = vpop.permute.xlu0 %1048
    %vm1050 = vcmp.eq.s32.totalorder %v1049, %v103
    %v1051 = vsel %vm1050, 1, 0
    %v1052 = vcvt.s32.f32 %v1051
    %v1053 = vpack.c.bf16 %v1052, %v1052
    %s1054 = scalar_lea.vmem [#allocation5], 704
    %v1055 = vld [vmem:[%s1054] sm:$0xf]
    %v1056 = vld [vmem:[%s1054 + $0x4] sm:$0xf]
    %v1057 = vld [vmem:[%s1054 + $0x8] sm:$0xf]
    %v1058 = vld [vmem:[%s1054 + $0xc] sm:$0xf]
    %v1059 = vld [vmem:[%s1054 + $0x10] sm:$0xf]
    %v1060 = vld [vmem:[%s1054 + $0x14] sm:$0xf]
    %v1061 = vld [vmem:[%s1054 + $0x18] sm:$0xf]
    %v1062 = vld [vmem:[%s1054 + $0x1c] sm:$0xf]
    %v1063 = vld [vmem:[%s1054 + $0x20] sm:$0xf]
    %v1064 = vld [vmem:[%s1054 + $0x24] sm:$0xf]
    %v1065 = vld [vmem:[%s1054 + $0x28] sm:$0xf]
    %v1066 = vld [vmem:[%s1054 + $0x2c] sm:$0xf]
    %v1067 = vld [vmem:[%s1054 + $0x30] sm:$0xf]
    %v1068 = vld [vmem:[%s1054 + $0x34] sm:$0xf]
    %v1069 = vld [vmem:[%s1054 + $0x38] sm:$0xf]
    %v1070 = vld [vmem:[%s1054 + $0x3c] sm:$0xf]
    %v1087 = vunpack.c.l.b16 %v1055
    %v1088 = vunpack.c.l.b16 %v1056
    %v1089 = vunpack.c.l.b16 %v1057
    %v1090 = vunpack.c.l.b16 %v1058
    %v1091 = vunpack.c.l.b16 %v1059
    %v1092 = vunpack.c.l.b16 %v1060
    %v1093 = vunpack.c.l.b16 %v1061
    %v1094 = vunpack.c.l.b16 %v1062
    %v1095 = vunpack.c.l.b16 %v1063
    %v1096 = vunpack.c.l.b16 %v1064
    %v1097 = vunpack.c.l.b16 %v1065
    %v1098 = vunpack.c.l.b16 %v1066
    %v1099 = vunpack.c.l.b16 %v1067
    %v1100 = vunpack.c.l.b16 %v1068
    %v1101 = vunpack.c.l.b16 %v1069
    %v1102 = vunpack.c.l.b16 %v1070
    %v1103 = vpack.c.b16 %v1088, %v1087
    %v1104 = vpack.c.b16 %v1090, %v1089
    %v1105 = vpack.c.b16 %v1092, %v1091
    %v1106 = vpack.c.b16 %v1094, %v1093
    %v1107 = vpack.c.b16 %v1096, %v1095
    %v1108 = vpack.c.b16 %v1098, %v1097
    %v1109 = vpack.c.b16 %v1100, %v1099
    %v1110 = vpack.c.b16 %v1102, %v1101
    %1119 = vmatpush.bf16.msra.mxu0 %v1110
    %1120 = vmatpush.bf16.msra.mxu0 %v1109
    %1121 = vmatpush.bf16.msra.mxu0 %v1108
    %1122 = vmatpush.bf16.msra.mxu0 %v1107
    %1123 = vmatpush.bf16.msra.mxu0 %v1106
    %1124 = vmatpush.bf16.msra.mxu0 %v1105
    %1125 = vmatpush.bf16.msra.mxu0 %v1104
    %1126 = vmatpush.bf16.msra.mxu0 %v1103
    %1127 = vmatmul.bf16.gmra.mxu0 %v1053
    %v1128 = vpop.f32.mrf.mxu0
    %v1129 = vadd.f32 0.0, %v1128
    %v1130 = vpop.f32.mrf.mxu0
    %1131 = vdwg.mxu0
    %v1132 = vadd.f32 %v1046, %v1129
    %1133 = vset.pattern.permute.xlu0 12
    %1134 = vperm.xlu0 %1133, %v101
    %v1135 = vpop.permute.xlu0 %1134
    %vm1136 = vcmp.eq.s32.totalorder %v1135, %v103
    %v1137 = vsel %vm1136, 1, 0
    %v1138 = vcvt.s32.f32 %v1137
    %v1139 = vpack.c.bf16 %v1138, %v1138
    %s1140 = scalar_lea.vmem [#allocation5], 768
    %v1141 = vld [vmem:[%s1140] sm:$0xf]
    %v1142 = vld [vmem:[%s1140 + $0x4] sm:$0xf]
    %v1143 = vld [vmem:[%s1140 + $0x8] sm:$0xf]
    %v1144 = vld [vmem:[%s1140 + $0xc] sm:$0xf]
    %v1145 = vld [vmem:[%s1140 + $0x10] sm:$0xf]
    %v1146 = vld [vmem:[%s1140 + $0x14] sm:$0xf]
    %v1147 = vld [vmem:[%s1140 + $0x18] sm:$0xf]
    %v1148 = vld [vmem:[%s1140 + $0x1c] sm:$0xf]
    %v1149 = vld [vmem:[%s1140 + $0x20] sm:$0xf]
    %v1150 = vld [vmem:[%s1140 + $0x24] sm:$0xf]
    %v1151 = vld [vmem:[%s1140 + $0x28] sm:$0xf]
    %v1152 = vld [vmem:[%s1140 + $0x2c] sm:$0xf]
    %v1153 = vld [vmem:[%s1140 + $0x30] sm:$0xf]
    %v1154 = vld [vmem:[%s1140 + $0x34] sm:$0xf]
    %v1155 = vld [vmem:[%s1140 + $0x38] sm:$0xf]
    %v1156 = vld [vmem:[%s1140 + $0x3c] sm:$0xf]
    %v1173 = vunpack.c.l.b16 %v1141
    %v1174 = vunpack.c.l.b16 %v1142
    %v1175 = vunpack.c.l.b16 %v1143
    %v1176 = vunpack.c.l.b16 %v1144
    %v1177 = vunpack.c.l.b16 %v1145
    %v1178 = vunpack.c.l.b16 %v1146
    %v1179 = vunpack.c.l.b16 %v1147
    %v1180 = vunpack.c.l.b16 %v1148
    %v1181 = vunpack.c.l.b16 %v1149
    %v1182 = vunpack.c.l.b16 %v1150
    %v1183 = vunpack.c.l.b16 %v1151
    %v1184 = vunpack.c.l.b16 %v1152
    %v1185 = vunpack.c.l.b16 %v1153
    %v1186 = vunpack.c.l.b16 %v1154
    %v1187 = vunpack.c.l.b16 %v1155
    %v1188 = vunpack.c.l.b16 %v1156
    %v1189 = vpack.c.b16 %v1174, %v1173
    %v1190 = vpack.c.b16 %v1176, %v1175
    %v1191 = vpack.c.b16 %v1178, %v1177
    %v1192 = vpack.c.b16 %v1180, %v1179
    %v1193 = vpack.c.b16 %v1182, %v1181
    %v1194 = vpack.c.b16 %v1184, %v1183
    %v1195 = vpack.c.b16 %v1186, %v1185
    %v1196 = vpack.c.b16 %v1188, %v1187
    %1205 = vmatpush.bf16.msra.mxu0 %v1196
    %1206 = vmatpush.bf16.msra.mxu0 %v1195
    %1207 = vmatpush.bf16.msra.mxu0 %v1194
    %1208 = vmatpush.bf16.msra.mxu0 %v1193
    %1209 = vmatpush.bf16.msra.mxu0 %v1192
    %1210 = vmatpush.bf16.msra.mxu0 %v1191
    %1211 = vmatpush.bf16.msra.mxu0 %v1190
    %1212 = vmatpush.bf16.msra.mxu0 %v1189
    %1213 = vmatmul.bf16.gmra.mxu0 %v1139
    %v1214 = vpop.f32.mrf.mxu0
    %v1215 = vadd.f32 0.0, %v1214
    %v1216 = vpop.f32.mrf.mxu0
    %1217 = vdwg.mxu0
    %v1218 = vadd.f32 %v1132, %v1215
    %1219 = vset.pattern.permute.xlu0 13
    %1220 = vperm.xlu0 %1219, %v101
    %v1221 = vpop.permute.xlu0 %1220
    %vm1222 = vcmp.eq.s32.totalorder %v1221, %v103
    %v1223 = vsel %vm1222, 1, 0
    %v1224 = vcvt.s32.f32 %v1223
    %v1225 = vpack.c.bf16 %v1224, %v1224
    %s1226 = scalar_lea.vmem [#allocation5], 832
    %v1227 = vld [vmem:[%s1226] sm:$0xf]
    %v1228 = vld [vmem:[%s1226 + $0x4] sm:$0xf]
    %v1229 = vld [vmem:[%s1226 + $0x8] sm:$0xf]
    %v1230 = vld [vmem:[%s1226 + $0xc] sm:$0xf]
    %v1231 = vld [vmem:[%s1226 + $0x10] sm:$0xf]
    %v1232 = vld [vmem:[%s1226 + $0x14] sm:$0xf]
    %v1233 = vld [vmem:[%s1226 + $0x18] sm:$0xf]
    %v1234 = vld [vmem:[%s1226 + $0x1c] sm:$0xf]
    %v1235 = vld [vmem:[%s1226 + $0x20] sm:$0xf]
    %v1236 = vld [vmem:[%s1226 + $0x24] sm:$0xf]
    %v1237 = vld [vmem:[%s1226 + $0x28] sm:$0xf]
    %v1238 = vld [vmem:[%s1226 + $0x2c] sm:$0xf]
    %v1239 = vld [vmem:[%s1226 + $0x30] sm:$0xf]
    %v1240 = vld [vmem:[%s1226 + $0x34] sm:$0xf]
    %v1241 = vld [vmem:[%s1226 + $0x38] sm:$0xf]
    %v1242 = vld [vmem:[%s1226 + $0x3c] sm:$0xf]
    %v1259 = vunpack.c.l.b16 %v1227
    %v1260 = vunpack.c.l.b16 %v1228
    %v1261 = vunpack.c.l.b16 %v1229
    %v1262 = vunpack.c.l.b16 %v1230
    %v1263 = vunpack.c.l.b16 %v1231
    %v1264 = vunpack.c.l.b16 %v1232
    %v1265 = vunpack.c.l.b16 %v1233
    %v1266 = vunpack.c.l.b16 %v1234
    %v1267 = vunpack.c.l.b16 %v1235
    %v1268 = vunpack.c.l.b16 %v1236
    %v1269 = vunpack.c.l.b16 %v1237
    %v1270 = vunpack.c.l.b16 %v1238
    %v1271 = vunpack.c.l.b16 %v1239
    %v1272 = vunpack.c.l.b16 %v1240
    %v1273 = vunpack.c.l.b16 %v1241
    %v1274 = vunpack.c.l.b16 %v1242
    %v1275 = vpack.c.b16 %v1260, %v1259
    %v1276 = vpack.c.b16 %v1262, %v1261
    %v1277 = vpack.c.b16 %v1264, %v1263
    %v1278 = vpack.c.b16 %v1266, %v1265
    %v1279 = vpack.c.b16 %v1268, %v1267
    %v1280 = vpack.c.b16 %v1270, %v1269
    %v1281 = vpack.c.b16 %v1272, %v1271
    %v1282 = vpack.c.b16 %v1274, %v1273
    %1291 = vmatpush.bf16.msra.mxu0 %v1282
    %1292 = vmatpush.bf16.msra.mxu0 %v1281
    %1293 = vmatpush.bf16.msra.mxu0 %v1280
    %1294 = vmatpush.bf16.msra.mxu0 %v1279
    %1295 = vmatpush.bf16.msra.mxu0 %v1278
    %1296 = vmatpush.bf16.msra.mxu0 %v1277
    %1297 = vmatpush.bf16.msra.mxu0 %v1276
    %1298 = vmatpush.bf16.msra.mxu0 %v1275
    %1299 = vmatmul.bf16.gmra.mxu0 %v1225
    %v1300 = vpop.f32.mrf.mxu0
    %v1301 = vadd.f32 0.0, %v1300
    %v1302 = vpop.f32.mrf.mxu0
    %1303 = vdwg.mxu0
    %v1304 = vadd.f32 %v1218, %v1301
    %1305 = vset.pattern.permute.xlu0 14
    %1306 = vperm.xlu0 %1305, %v101
    %v1307 = vpop.permute.xlu0 %1306
    %vm1308 = vcmp.eq.s32.totalorder %v1307, %v103
    %v1309 = vsel %vm1308, 1, 0
    %v1310 = vcvt.s32.f32 %v1309
    %v1311 = vpack.c.bf16 %v1310, %v1310
    %s1312 = scalar_lea.vmem [#allocation5], 896
    %v1313 = vld [vmem:[%s1312] sm:$0xf]
    %v1314 = vld [vmem:[%s1312 + $0x4] sm:$0xf]
    %v1315 = vld [vmem:[%s1312 + $0x8] sm:$0xf]
    %v1316 = vld [vmem:[%s1312 + $0xc] sm:$0xf]
    %v1317 = vld [vmem:[%s1312 + $0x10] sm:$0xf]
    %v1318 = vld [vmem:[%s1312 + $0x14] sm:$0xf]
    %v1319 = vld [vmem:[%s1312 + $0x18] sm:$0xf]
    %v1320 = vld [vmem:[%s1312 + $0x1c] sm:$0xf]
    %v1321 = vld [vmem:[%s1312 + $0x20] sm:$0xf]
    %v1322 = vld [vmem:[%s1312 + $0x24] sm:$0xf]
    %v1323 = vld [vmem:[%s1312 + $0x28] sm:$0xf]
    %v1324 = vld [vmem:[%s1312 + $0x2c] sm:$0xf]
    %v1325 = vld [vmem:[%s1312 + $0x30] sm:$0xf]
    %v1326 = vld [vmem:[%s1312 + $0x34] sm:$0xf]
    %v1327 = vld [vmem:[%s1312 + $0x38] sm:$0xf]
    %v1328 = vld [vmem:[%s1312 + $0x3c] sm:$0xf]
    %v1345 = vunpack.c.l.b16 %v1313
    %v1346 = vunpack.c.l.b16 %v1314
    %v1347 = vunpack.c.l.b16 %v1315
    %v1348 = vunpack.c.l.b16 %v1316
    %v1349 = vunpack.c.l.b16 %v1317
    %v1350 = vunpack.c.l.b16 %v1318
    %v1351 = vunpack.c.l.b16 %v1319
    %v1352 = vunpack.c.l.b16 %v1320
    %v1353 = vunpack.c.l.b16 %v1321
    %v1354 = vunpack.c.l.b16 %v1322
    %v1355 = vunpack.c.l.b16 %v1323
    %v1356 = vunpack.c.l.b16 %v1324
    %v1357 = vunpack.c.l.b16 %v1325
    %v1358 = vunpack.c.l.b16 %v1326
    %v1359 = vunpack.c.l.b16 %v1327
    %v1360 = vunpack.c.l.b16 %v1328
    %v1361 = vpack.c.b16 %v1346, %v1345
    %v1362 = vpack.c.b16 %v1348, %v1347
    %v1363 = vpack.c.b16 %v1350, %v1349
    %v1364 = vpack.c.b16 %v1352, %v1351
    %v1365 = vpack.c.b16 %v1354, %v1353
    %v1366 = vpack.c.b16 %v1356, %v1355
    %v1367 = vpack.c.b16 %v1358, %v1357
    %v1368 = vpack.c.b16 %v1360, %v1359
    %1377 = vmatpush.bf16.msra.mxu0 %v1368
    %1378 = vmatpush.bf16.msra.mxu0 %v1367
    %1379 = vmatpush.bf16.msra.mxu0 %v1366
    %1380 = vmatpush.bf16.msra.mxu0 %v1365
    %1381 = vmatpush.bf16.msra.mxu0 %v1364
    %1382 = vmatpush.bf16.msra.mxu0 %v1363
    %1383 = vmatpush.bf16.msra.mxu0 %v1362
    %1384 = vmatpush.bf16.msra.mxu0 %v1361
    %1385 = vmatmul.bf16.gmra.mxu0 %v1311
    %v1386 = vpop.f32.mrf.mxu0
    %v1387 = vadd.f32 0.0, %v1386
    %v1388 = vpop.f32.mrf.mxu0
    %1389 = vdwg.mxu0
    %v1390 = vadd.f32 %v1304, %v1387
    %1391 = vset.pattern.permute.xlu0 15
    %1392 = vperm.xlu0 %1391, %v101
    %v1393 = vpop.permute.xlu0 %1392
    %vm1394 = vcmp.eq.s32.totalorder %v1393, %v103
    %v1395 = vsel %vm1394, 1, 0
    %v1396 = vcvt.s32.f32 %v1395
    %v1397 = vpack.c.bf16 %v1396, %v1396
    %s1398 = scalar_lea.vmem [#allocation5], 960
    %v1399 = vld [vmem:[%s1398] sm:$0xf]
    %v1400 = vld [vmem:[%s1398 + $0x4] sm:$0xf]
    %v1401 = vld [vmem:[%s1398 + $0x8] sm:$0xf]
    %v1402 = vld [vmem:[%s1398 + $0xc] sm:$0xf]
    %v1403 = vld [vmem:[%s1398 + $0x10] sm:$0xf]
    %v1404 = vld [vmem:[%s1398 + $0x14] sm:$0xf]
    %v1405 = vld [vmem:[%s1398 + $0x18] sm:$0xf]
    %v1406 = vld [vmem:[%s1398 + $0x1c] sm:$0xf]
    %v1407 = vld [vmem:[%s1398 + $0x20] sm:$0xf]
    %v1408 = vld [vmem:[%s1398 + $0x24] sm:$0xf]
    %v1409 = vld [vmem:[%s1398 + $0x28] sm:$0xf]
    %v1410 = vld [vmem:[%s1398 + $0x2c] sm:$0xf]
    %v1411 = vld [vmem:[%s1398 + $0x30] sm:$0xf]
    %v1412 = vld [vmem:[%s1398 + $0x34] sm:$0xf]
    %v1413 = vld [vmem:[%s1398 + $0x38] sm:$0xf]
    %v1414 = vld [vmem:[%s1398 + $0x3c] sm:$0xf]
    %v1431 = vunpack.c.l.b16 %v1399
    %v1432 = vunpack.c.l.b16 %v1400
    %v1433 = vunpack.c.l.b16 %v1401
    %v1434 = vunpack.c.l.b16 %v1402
    %v1435 = vunpack.c.l.b16 %v1403
    %v1436 = vunpack.c.l.b16 %v1404
    %v1437 = vunpack.c.l.b16 %v1405
    %v1438 = vunpack.c.l.b16 %v1406
    %v1439 = vunpack.c.l.b16 %v1407
    %v1440 = vunpack.c.l.b16 %v1408
    %v1441 = vunpack.c.l.b16 %v1409
    %v1442 = vunpack.c.l.b16 %v1410
    %v1443 = vunpack.c.l.b16 %v1411
    %v1444 = vunpack.c.l.b16 %v1412
    %v1445 = vunpack.c.l.b16 %v1413
    %v1446 = vunpack.c.l.b16 %v1414
    %v1447 = vpack.c.b16 %v1432, %v1431
    %v1448 = vpack.c.b16 %v1434, %v1433
    %v1449 = vpack.c.b16 %v1436, %v1435
    %v1450 = vpack.c.b16 %v1438, %v1437
    %v1451 = vpack.c.b16 %v1440, %v1439
    %v1452 = vpack.c.b16 %v1442, %v1441
    %v1453 = vpack.c.b16 %v1444, %v1443
    %v1454 = vpack.c.b16 %v1446, %v1445
    %1463 = vmatpush.bf16.msra.mxu0 %v1454
    %1464 = vmatpush.bf16.msra.mxu0 %v1453
    %1465 = vmatpush.bf16.msra.mxu0 %v1452
    %1466 = vmatpush.bf16.msra.mxu0 %v1451
    %1467 = vmatpush.bf16.msra.mxu0 %v1450
    %1468 = vmatpush.bf16.msra.mxu0 %v1449
    %1469 = vmatpush.bf16.msra.mxu0 %v1448
    %1470 = vmatpush.bf16.msra.mxu0 %v1447
    %1471 = vmatmul.bf16.gmra.mxu0 %v1397
    %v1472 = vpop.f32.mrf.mxu0
    %v1473 = vadd.f32 0.0, %v1472
    %v1474 = vpop.f32.mrf.mxu0
    %1475 = vdwg.mxu0
    %v1476 = vadd.f32 %v1390, %v1473
    %1477 = vset.pattern.permute.xlu0 16
    %1478 = vperm.xlu0 %1477, %v101
    %v1479 = vpop.permute.xlu0 %1478
    %vm1480 = vcmp.eq.s32.totalorder %v1479, %v103
    %v1481 = vsel %vm1480, 1, 0
    %v1482 = vcvt.s32.f32 %v1481
    %v1483 = vpack.c.bf16 %v1482, %v1482
    %s1484 = scalar_lea.vmem [#allocation5], 1024
    %v1485 = vld [vmem:[%s1484] sm:$0xf]
    %v1486 = vld [vmem:[%s1484 + $0x4] sm:$0xf]
    %v1487 = vld [vmem:[%s1484 + $0x8] sm:$0xf]
    %v1488 = vld [vmem:[%s1484 + $0xc] sm:$0xf]
    %v1489 = vld [vmem:[%s1484 + $0x10] sm:$0xf]
    %v1490 = vld [vmem:[%s1484 + $0x14] sm:$0xf]
    %v1491 = vld [vmem:[%s1484 + $0x18] sm:$0xf]
    %v1492 = vld [vmem:[%s1484 + $0x1c] sm:$0xf]
    %v1493 = vld [vmem:[%s1484 + $0x20] sm:$0xf]
    %v1494 = vld [vmem:[%s1484 + $0x24] sm:$0xf]
    %v1495 = vld [vmem:[%s1484 + $0x28] sm:$0xf]
    %v1496 = vld [vmem:[%s1484 + $0x2c] sm:$0xf]
    %v1497 = vld [vmem:[%s1484 + $0x30] sm:$0xf]
    %v1498 = vld [vmem:[%s1484 + $0x34] sm:$0xf]
    %v1499 = vld [vmem:[%s1484 + $0x38] sm:$0xf]
    %v1500 = vld [vmem:[%s1484 + $0x3c] sm:$0xf]
    %v1517 = vunpack.c.l.b16 %v1485
    %v1518 = vunpack.c.l.b16 %v1486
    %v1519 = vunpack.c.l.b16 %v1487
    %v1520 = vunpack.c.l.b16 %v1488
    %v1521 = vunpack.c.l.b16 %v1489
    %v1522 = vunpack.c.l.b16 %v1490
    %v1523 = vunpack.c.l.b16 %v1491
    %v1524 = vunpack.c.l.b16 %v1492
    %v1525 = vunpack.c.l.b16 %v1493
    %v1526 = vunpack.c.l.b16 %v1494
    %v1527 = vunpack.c.l.b16 %v1495
    %v1528 = vunpack.c.l.b16 %v1496
    %v1529 = vunpack.c.l.b16 %v1497
    %v1530 = vunpack.c.l.b16 %v1498
    %v1531 = vunpack.c.l.b16 %v1499
    %v1532 = vunpack.c.l.b16 %v1500
    %v1533 = vpack.c.b16 %v1518, %v1517
    %v1534 = vpack.c.b16 %v1520, %v1519
    %v1535 = vpack.c.b16 %v1522, %v1521
    %v1536 = vpack.c.b16 %v1524, %v1523
    %v1537 = vpack.c.b16 %v1526, %v1525
    %v1538 = vpack.c.b16 %v1528, %v1527
    %v1539 = vpack.c.b16 %v1530, %v1529
    %v1540 = vpack.c.b16 %v1532, %v1531
    %1549 = vmatpush.bf16.msra.mxu0 %v1540
    %1550 = vmatpush.bf16.msra.mxu0 %v1539
    %1551 = vmatpush.bf16.msra.mxu0 %v1538
    %1552 = vmatpush.bf16.msra.mxu0 %v1537
    %1553 = vmatpush.bf16.msra.mxu0 %v1536
    %1554 = vmatpush.bf16.msra.mxu0 %v1535
    %1555 = vmatpush.bf16.msra.mxu0 %v1534
    %1556 = vmatpush.bf16.msra.mxu0 %v1533
    %1557 = vmatmul.bf16.gmra.mxu0 %v1483
    %v1558 = vpop.f32.mrf.mxu0
    %v1559 = vadd.f32 0.0, %v1558
    %v1560 = vpop.f32.mrf.mxu0
    %1561 = vdwg.mxu0
    %v1562 = vadd.f32 %v1476, %v1559
    %1563 = vset.pattern.permute.xlu0 17
    %1564 = vperm.xlu0 %1563, %v101
    %v1565 = vpop.permute.xlu0 %1564
    %vm1566 = vcmp.eq.s32.totalorder %v1565, %v103
    %v1567 = vsel %vm1566, 1, 0
    %v1568 = vcvt.s32.f32 %v1567
    %v1569 = vpack.c.bf16 %v1568, %v1568
    %s1570 = scalar_lea.vmem [#allocation5], 1088
    %v1571 = vld [vmem:[%s1570] sm:$0xf]
    %v1572 = vld [vmem:[%s1570 + $0x4] sm:$0xf]
    %v1573 = vld [vmem:[%s1570 + $0x8] sm:$0xf]
    %v1574 = vld [vmem:[%s1570 + $0xc] sm:$0xf]
    %v1575 = vld [vmem:[%s1570 + $0x10] sm:$0xf]
    %v1576 = vld [vmem:[%s1570 + $0x14] sm:$0xf]
    %v1577 = vld [vmem:[%s1570 + $0x18] sm:$0xf]
    %v1578 = vld [vmem:[%s1570 + $0x1c] sm:$0xf]
    %v1579 = vld [vmem:[%s1570 + $0x20] sm:$0xf]
    %v1580 = vld [vmem:[%s1570 + $0x24] sm:$0xf]
    %v1581 = vld [vmem:[%s1570 + $0x28] sm:$0xf]
    %v1582 = vld [vmem:[%s1570 + $0x2c] sm:$0xf]
    %v1583 = vld [vmem:[%s1570 + $0x30] sm:$0xf]
    %v1584 = vld [vmem:[%s1570 + $0x34] sm:$0xf]
    %v1585 = vld [vmem:[%s1570 + $0x38] sm:$0xf]
    %v1586 = vld [vmem:[%s1570 + $0x3c] sm:$0xf]
    %v1603 = vunpack.c.l.b16 %v1571
    %v1604 = vunpack.c.l.b16 %v1572
    %v1605 = vunpack.c.l.b16 %v1573
    %v1606 = vunpack.c.l.b16 %v1574
    %v1607 = vunpack.c.l.b16 %v1575
    %v1608 = vunpack.c.l.b16 %v1576
    %v1609 = vunpack.c.l.b16 %v1577
    %v1610 = vunpack.c.l.b16 %v1578
    %v1611 = vunpack.c.l.b16 %v1579
    %v1612 = vunpack.c.l.b16 %v1580
    %v1613 = vunpack.c.l.b16 %v1581
    %v1614 = vunpack.c.l.b16 %v1582
    %v1615 = vunpack.c.l.b16 %v1583
    %v1616 = vunpack.c.l.b16 %v1584
    %v1617 = vunpack.c.l.b16 %v1585
    %v1618 = vunpack.c.l.b16 %v1586
    %v1619 = vpack.c.b16 %v1604, %v1603
    %v1620 = vpack.c.b16 %v1606, %v1605
    %v1621 = vpack.c.b16 %v1608, %v1607
    %v1622 = vpack.c.b16 %v1610, %v1609
    %v1623 = vpack.c.b16 %v1612, %v1611
    %v1624 = vpack.c.b16 %v1614, %v1613
    %v1625 = vpack.c.b16 %v1616, %v1615
    %v1626 = vpack.c.b16 %v1618, %v1617
    %1635 = vmatpush.bf16.msra.mxu0 %v1626
    %1636 = vmatpush.bf16.msra.mxu0 %v1625
    %1637 = vmatpush.bf16.msra.mxu0 %v1624
    %1638 = vmatpush.bf16.msra.mxu0 %v1623
    %1639 = vmatpush.bf16.msra.mxu0 %v1622
    %1640 = vmatpush.bf16.msra.mxu0 %v1621
    %1641 = vmatpush.bf16.msra.mxu0 %v1620
    %1642 = vmatpush.bf16.msra.mxu0 %v1619
    %1643 = vmatmul.bf16.gmra.mxu0 %v1569
    %v1644 = vpop.f32.mrf.mxu0
    %v1645 = vadd.f32 0.0, %v1644
    %v1646 = vpop.f32.mrf.mxu0
    %1647 = vdwg.mxu0
    %v1648 = vadd.f32 %v1562, %v1645
    %1649 = vset.pattern.permute.xlu0 18
    %1650 = vperm.xlu0 %1649, %v101
    %v1651 = vpop.permute.xlu0 %1650
    %vm1652 = vcmp.eq.s32.totalorder %v1651, %v103
    %v1653 = vsel %vm1652, 1, 0
    %v1654 = vcvt.s32.f32 %v1653
    %v1655 = vpack.c.bf16 %v1654, %v1654
    %s1656 = scalar_lea.vmem [#allocation5], 1152
    %v1657 = vld [vmem:[%s1656] sm:$0xf]
    %v1658 = vld [vmem:[%s1656 + $0x4] sm:$0xf]
    %v1659 = vld [vmem:[%s1656 + $0x8] sm:$0xf]
    %v1660 = vld [vmem:[%s1656 + $0xc] sm:$0xf]
    %v1661 = vld [vmem:[%s1656 + $0x10] sm:$0xf]
    %v1662 = vld [vmem:[%s1656 + $0x14] sm:$0xf]
    %v1663 = vld [vmem:[%s1656 + $0x18] sm:$0xf]
    %v1664 = vld [vmem:[%s1656 + $0x1c] sm:$0xf]
    %v1665 = vld [vmem:[%s1656 + $0x20] sm:$0xf]
    %v1666 = vld [vmem:[%s1656 + $0x24] sm:$0xf]
    %v1667 = vld [vmem:[%s1656 + $0x28] sm:$0xf]
    %v1668 = vld [vmem:[%s1656 + $0x2c] sm:$0xf]
    %v1669 = vld [vmem:[%s1656 + $0x30] sm:$0xf]
    %v1670 = vld [vmem:[%s1656 + $0x34] sm:$0xf]
    %v1671 = vld [vmem:[%s1656 + $0x38] sm:$0xf]
    %v1672 = vld [vmem:[%s1656 + $0x3c] sm:$0xf]
    %v1689 = vunpack.c.l.b16 %v1657
    %v1690 = vunpack.c.l.b16 %v1658
    %v1691 = vunpack.c.l.b16 %v1659
    %v1692 = vunpack.c.l.b16 %v1660
    %v1693 = vunpack.c.l.b16 %v1661
    %v1694 = vunpack.c.l.b16 %v1662
    %v1695 = vunpack.c.l.b16 %v1663
    %v1696 = vunpack.c.l.b16 %v1664
    %v1697 = vunpack.c.l.b16 %v1665
    %v1698 = vunpack.c.l.b16 %v1666
    %v1699 = vunpack.c.l.b16 %v1667
    %v1700 = vunpack.c.l.b16 %v1668
    %v1701 = vunpack.c.l.b16 %v1669
    %v1702 = vunpack.c.l.b16 %v1670
    %v1703 = vunpack.c.l.b16 %v1671
    %v1704 = vunpack.c.l.b16 %v1672
    %v1705 = vpack.c.b16 %v1690, %v1689
    %v1706 = vpack.c.b16 %v1692, %v1691
    %v1707 = vpack.c.b16 %v1694, %v1693
    %v1708 = vpack.c.b16 %v1696, %v1695
    %v1709 = vpack.c.b16 %v1698, %v1697
    %v1710 = vpack.c.b16 %v1700, %v1699
    %v1711 = vpack.c.b16 %v1702, %v1701
    %v1712 = vpack.c.b16 %v1704, %v1703
    %1721 = vmatpush.bf16.msra.mxu0 %v1712
    %1722 = vmatpush.bf16.msra.mxu0 %v1711
    %1723 = vmatpush.bf16.msra.mxu0 %v1710
    %1724 = vmatpush.bf16.msra.mxu0 %v1709
    %1725 = vmatpush.bf16.msra.mxu0 %v1708
    %1726 = vmatpush.bf16.msra.mxu0 %v1707
    %1727 = vmatpush.bf16.msra.mxu0 %v1706
    %1728 = vmatpush.bf16.msra.mxu0 %v1705
    %1729 = vmatmul.bf16.gmra.mxu0 %v1655
    %v1730 = vpop.f32.mrf.mxu0
    %v1731 = vadd.f32 0.0, %v1730
    %v1732 = vpop.f32.mrf.mxu0
    %1733 = vdwg.mxu0
    %v1734 = vadd.f32 %v1648, %v1731
    %1735 = vset.pattern.permute.xlu0 19
    %1736 = vperm.xlu0 %1735, %v101
    %v1737 = vpop.permute.xlu0 %1736
    %vm1738 = vcmp.eq.s32.totalorder %v1737, %v103
    %v1739 = vsel %vm1738, 1, 0
    %v1740 = vcvt.s32.f32 %v1739
    %v1741 = vpack.c.bf16 %v1740, %v1740
    %s1742 = scalar_lea.vmem [#allocation5], 1216
    %v1743 = vld [vmem:[%s1742] sm:$0xf]
    %v1744 = vld [vmem:[%s1742 + $0x4] sm:$0xf]
    %v1745 = vld [vmem:[%s1742 + $0x8] sm:$0xf]
    %v1746 = vld [vmem:[%s1742 + $0xc] sm:$0xf]
    %v1747 = vld [vmem:[%s1742 + $0x10] sm:$0xf]
    %v1748 = vld [vmem:[%s1742 + $0x14] sm:$0xf]
    %v1749 = vld [vmem:[%s1742 + $0x18] sm:$0xf]
    %v1750 = vld [vmem:[%s1742 + $0x1c] sm:$0xf]
    %v1751 = vld [vmem:[%s1742 + $0x20] sm:$0xf]
    %v1752 = vld [vmem:[%s1742 + $0x24] sm:$0xf]
    %v1753 = vld [vmem:[%s1742 + $0x28] sm:$0xf]
    %v1754 = vld [vmem:[%s1742 + $0x2c] sm:$0xf]
    %v1755 = vld [vmem:[%s1742 + $0x30] sm:$0xf]
    %v1756 = vld [vmem:[%s1742 + $0x34] sm:$0xf]
    %v1757 = vld [vmem:[%s1742 + $0x38] sm:$0xf]
    %v1758 = vld [vmem:[%s1742 + $0x3c] sm:$0xf]
    %v1775 = vunpack.c.l.b16 %v1743
    %v1776 = vunpack.c.l.b16 %v1744
    %v1777 = vunpack.c.l.b16 %v1745
    %v1778 = vunpack.c.l.b16 %v1746
    %v1779 = vunpack.c.l.b16 %v1747
    %v1780 = vunpack.c.l.b16 %v1748
    %v1781 = vunpack.c.l.b16 %v1749
    %v1782 = vunpack.c.l.b16 %v1750
    %v1783 = vunpack.c.l.b16 %v1751
    %v1784 = vunpack.c.l.b16 %v1752
    %v1785 = vunpack.c.l.b16 %v1753
    %v1786 = vunpack.c.l.b16 %v1754
    %v1787 = vunpack.c.l.b16 %v1755
    %v1788 = vunpack.c.l.b16 %v1756
    %v1789 = vunpack.c.l.b16 %v1757
    %v1790 = vunpack.c.l.b16 %v1758
    %v1791 = vpack.c.b16 %v1776, %v1775
    %v1792 = vpack.c.b16 %v1778, %v1777
    %v1793 = vpack.c.b16 %v1780, %v1779
    %v1794 = vpack.c.b16 %v1782, %v1781
    %v1795 = vpack.c.b16 %v1784, %v1783
    %v1796 = vpack.c.b16 %v1786, %v1785
    %v1797 = vpack.c.b16 %v1788, %v1787
    %v1798 = vpack.c.b16 %v1790, %v1789
    %1807 = vmatpush.bf16.msra.mxu0 %v1798
    %1808 = vmatpush.bf16.msra.mxu0 %v1797
    %1809 = vmatpush.bf16.msra.mxu0 %v1796
    %1810 = vmatpush.bf16.msra.mxu0 %v1795
    %1811 = vmatpush.bf16.msra.mxu0 %v1794
    %1812 = vmatpush.bf16.msra.mxu0 %v1793
    %1813 = vmatpush.bf16.msra.mxu0 %v1792
    %1814 = vmatpush.bf16.msra.mxu0 %v1791
    %1815 = vmatmul.bf16.gmra.mxu0 %v1741
    %v1816 = vpop.f32.mrf.mxu0
    %v1817 = vadd.f32 0.0, %v1816
    %v1818 = vpop.f32.mrf.mxu0
    %1819 = vdwg.mxu0
    %v1820 = vadd.f32 %v1734, %v1817
    %1821 = vset.pattern.permute.xlu0 20
    %1822 = vperm.xlu0 %1821, %v101
    %v1823 = vpop.permute.xlu0 %1822
    %vm1824 = vcmp.eq.s32.totalorder %v1823, %v103
    %v1825 = vsel %vm1824, 1, 0
    %v1826 = vcvt.s32.f32 %v1825
    %v1827 = vpack.c.bf16 %v1826, %v1826
    %s1828 = scalar_lea.vmem [#allocation5], 1280
    %v1829 = vld [vmem:[%s1828] sm:$0xf]
    %v1830 = vld [vmem:[%s1828 + $0x4] sm:$0xf]
    %v1831 = vld [vmem:[%s1828 + $0x8] sm:$0xf]
    %v1832 = vld [vmem:[%s1828 + $0xc] sm:$0xf]
    %v1833 = vld [vmem:[%s1828 + $0x10] sm:$0xf]
    %v1834 = vld [vmem:[%s1828 + $0x14] sm:$0xf]
    %v1835 = vld [vmem:[%s1828 + $0x18] sm:$0xf]
    %v1836 = vld [vmem:[%s1828 + $0x1c] sm:$0xf]
    %v1837 = vld [vmem:[%s1828 + $0x20] sm:$0xf]
    %v1838 = vld [vmem:[%s1828 + $0x24] sm:$0xf]
    %v1839 = vld [vmem:[%s1828 + $0x28] sm:$0xf]
    %v1840 = vld [vmem:[%s1828 + $0x2c] sm:$0xf]
    %v1841 = vld [vmem:[%s1828 + $0x30] sm:$0xf]
    %v1842 = vld [vmem:[%s1828 + $0x34] sm:$0xf]
    %v1843 = vld [vmem:[%s1828 + $0x38] sm:$0xf]
    %v1844 = vld [vmem:[%s1828 + $0x3c] sm:$0xf]
    %v1861 = vunpack.c.l.b16 %v1829
    %v1862 = vunpack.c.l.b16 %v1830
    %v1863 = vunpack.c.l.b16 %v1831
    %v1864 = vunpack.c.l.b16 %v1832
    %v1865 = vunpack.c.l.b16 %v1833
    %v1866 = vunpack.c.l.b16 %v1834
    %v1867 = vunpack.c.l.b16 %v1835
    %v1868 = vunpack.c.l.b16 %v1836
    %v1869 = vunpack.c.l.b16 %v1837
    %v1870 = vunpack.c.l.b16 %v1838
    %v1871 = vunpack.c.l.b16 %v1839
    %v1872 = vunpack.c.l.b16 %v1840
    %v1873 = vunpack.c.l.b16 %v1841
    %v1874 = vunpack.c.l.b16 %v1842
    %v1875 = vunpack.c.l.b16 %v1843
    %v1876 = vunpack.c.l.b16 %v1844
    %v1877 = vpack.c.b16 %v1862, %v1861
    %v1878 = vpack.c.b16 %v1864, %v1863
    %v1879 = vpack.c.b16 %v1866, %v1865
    %v1880 = vpack.c.b16 %v1868, %v1867
    %v1881 = vpack.c.b16 %v1870, %v1869
    %v1882 = vpack.c.b16 %v1872, %v1871
    %v1883 = vpack.c.b16 %v1874, %v1873
    %v1884 = vpack.c.b16 %v1876, %v1875
    %1893 = vmatpush.bf16.msra.mxu0 %v1884
    %1894 = vmatpush.bf16.msra.mxu0 %v1883
    %1895 = vmatpush.bf16.msra.mxu0 %v1882
    %1896 = vmatpush.bf16.msra.mxu0 %v1881
    %1897 = vmatpush.bf16.msra.mxu0 %v1880
    %1898 = vmatpush.bf16.msra.mxu0 %v1879
    %1899 = vmatpush.bf16.msra.mxu0 %v1878
    %1900 = vmatpush.bf16.msra.mxu0 %v1877
    %1901 = vmatmul.bf16.gmra.mxu0 %v1827
    %v1902 = vpop.f32.mrf.mxu0
    %v1903 = vadd.f32 0.0, %v1902
    %v1904 = vpop.f32.mrf.mxu0
    %1905 = vdwg.mxu0
    %v1906 = vadd.f32 %v1820, %v1903
    %1907 = vset.pattern.permute.xlu0 21
    %1908 = vperm.xlu0 %1907, %v101
    %v1909 = vpop.permute.xlu0 %1908
    %vm1910 = vcmp.eq.s32.totalorder %v1909, %v103
    %v1911 = vsel %vm1910, 1, 0
    %v1912 = vcvt.s32.f32 %v1911
    %v1913 = vpack.c.bf16 %v1912, %v1912
    %s1914 = scalar_lea.vmem [#allocation5], 1344
    %v1915 = vld [vmem:[%s1914] sm:$0xf]
    %v1916 = vld [vmem:[%s1914 + $0x4] sm:$0xf]
    %v1917 = vld [vmem:[%s1914 + $0x8] sm:$0xf]
    %v1918 = vld [vmem:[%s1914 + $0xc] sm:$0xf]
    %v1919 = vld [vmem:[%s1914 + $0x10] sm:$0xf]
    %v1920 = vld [vmem:[%s1914 + $0x14] sm:$0xf]
    %v1921 = vld [vmem:[%s1914 + $0x18] sm:$0xf]
    %v1922 = vld [vmem:[%s1914 + $0x1c] sm:$0xf]
    %v1923 = vld [vmem:[%s1914 + $0x20] sm:$0xf]
    %v1924 = vld [vmem:[%s1914 + $0x24] sm:$0xf]
    %v1925 = vld [vmem:[%s1914 + $0x28] sm:$0xf]
    %v1926 = vld [vmem:[%s1914 + $0x2c] sm:$0xf]
    %v1927 = vld [vmem:[%s1914 + $0x30] sm:$0xf]
    %v1928 = vld [vmem:[%s1914 + $0x34] sm:$0xf]
    %v1929 = vld [vmem:[%s1914 + $0x38] sm:$0xf]
    %v1930 = vld [vmem:[%s1914 + $0x3c] sm:$0xf]
    %v1947 = vunpack.c.l.b16 %v1915
    %v1948 = vunpack.c.l.b16 %v1916
    %v1949 = vunpack.c.l.b16 %v1917
    %v1950 = vunpack.c.l.b16 %v1918
    %v1951 = vunpack.c.l.b16 %v1919
    %v1952 = vunpack.c.l.b16 %v1920
    %v1953 = vunpack.c.l.b16 %v1921
    %v1954 = vunpack.c.l.b16 %v1922
    %v1955 = vunpack.c.l.b16 %v1923
    %v1956 = vunpack.c.l.b16 %v1924
    %v1957 = vunpack.c.l.b16 %v1925
    %v1958 = vunpack.c.l.b16 %v1926
    %v1959 = vunpack.c.l.b16 %v1927
    %v1960 = vunpack.c.l.b16 %v1928
    %v1961 = vunpack.c.l.b16 %v1929
    %v1962 = vunpack.c.l.b16 %v1930
    %v1963 = vpack.c.b16 %v1948, %v1947
    %v1964 = vpack.c.b16 %v1950, %v1949
    %v1965 = vpack.c.b16 %v1952, %v1951
    %v1966 = vpack.c.b16 %v1954, %v1953
    %v1967 = vpack.c.b16 %v1956, %v1955
    %v1968 = vpack.c.b16 %v1958, %v1957
    %v1969 = vpack.c.b16 %v1960, %v1959
    %v1970 = vpack.c.b16 %v1962, %v1961
    %1979 = vmatpush.bf16.msra.mxu0 %v1970
    %1980 = vmatpush.bf16.msra.mxu0 %v1969
    %1981 = vmatpush.bf16.msra.mxu0 %v1968
    %1982 = vmatpush.bf16.msra.mxu0 %v1967
    %1983 = vmatpush.bf16.msra.mxu0 %v1966
    %1984 = vmatpush.bf16.msra.mxu0 %v1965
    %1985 = vmatpush.bf16.msra.mxu0 %v1964
    %1986 = vmatpush.bf16.msra.mxu0 %v1963
    %1987 = vmatmul.bf16.gmra.mxu0 %v1913
    %v1988 = vpop.f32.mrf.mxu0
    %v1989 = vadd.f32 0.0, %v1988
    %v1990 = vpop.f32.mrf.mxu0
    %1991 = vdwg.mxu0
    %v1992 = vadd.f32 %v1906, %v1989
    %1993 = vset.pattern.permute.xlu0 22
    %1994 = vperm.xlu0 %1993, %v101
    %v1995 = vpop.permute.xlu0 %1994
    %vm1996 = vcmp.eq.s32.totalorder %v1995, %v103
    %v1997 = vsel %vm1996, 1, 0
    %v1998 = vcvt.s32.f32 %v1997
    %v1999 = vpack.c.bf16 %v1998, %v1998
    %s2000 = scalar_lea.vmem [#allocation5], 1408
    %v2001 = vld [vmem:[%s2000] sm:$0xf]
    %v2002 = vld [vmem:[%s2000 + $0x4] sm:$0xf]
    %v2003 = vld [vmem:[%s2000 + $0x8] sm:$0xf]
    %v2004 = vld [vmem:[%s2000 + $0xc] sm:$0xf]
    %v2005 = vld [vmem:[%s2000 + $0x10] sm:$0xf]
    %v2006 = vld [vmem:[%s2000 + $0x14] sm:$0xf]
    %v2007 = vld [vmem:[%s2000 + $0x18] sm:$0xf]
    %v2008 = vld [vmem:[%s2000 + $0x1c] sm:$0xf]
    %v2009 = vld [vmem:[%s2000 + $0x20] sm:$0xf]
    %v2010 = vld [vmem:[%s2000 + $0x24] sm:$0xf]
    %v2011 = vld [vmem:[%s2000 + $0x28] sm:$0xf]
    %v2012 = vld [vmem:[%s2000 + $0x2c] sm:$0xf]
    %v2013 = vld [vmem:[%s2000 + $0x30] sm:$0xf]
    %v2014 = vld [vmem:[%s2000 + $0x34] sm:$0xf]
    %v2015 = vld [vmem:[%s2000 + $0x38] sm:$0xf]
    %v2016 = vld [vmem:[%s2000 + $0x3c] sm:$0xf]
    %v2033 = vunpack.c.l.b16 %v2001
    %v2034 = vunpack.c.l.b16 %v2002
    %v2035 = vunpack.c.l.b16 %v2003
    %v2036 = vunpack.c.l.b16 %v2004
    %v2037 = vunpack.c.l.b16 %v2005
    %v2038 = vunpack.c.l.b16 %v2006
    %v2039 = vunpack.c.l.b16 %v2007
    %v2040 = vunpack.c.l.b16 %v2008
    %v2041 = vunpack.c.l.b16 %v2009
    %v2042 = vunpack.c.l.b16 %v2010
    %v2043 = vunpack.c.l.b16 %v2011
    %v2044 = vunpack.c.l.b16 %v2012
    %v2045 = vunpack.c.l.b16 %v2013
    %v2046 = vunpack.c.l.b16 %v2014
    %v2047 = vunpack.c.l.b16 %v2015
    %v2048 = vunpack.c.l.b16 %v2016
    %v2049 = vpack.c.b16 %v2034, %v2033
    %v2050 = vpack.c.b16 %v2036, %v2035
    %v2051 = vpack.c.b16 %v2038, %v2037
    %v2052 = vpack.c.b16 %v2040, %v2039
    %v2053 = vpack.c.b16 %v2042, %v2041
    %v2054 = vpack.c.b16 %v2044, %v2043
    %v2055 = vpack.c.b16 %v2046, %v2045
    %v2056 = vpack.c.b16 %v2048, %v2047
    %2065 = vmatpush.bf16.msra.mxu0 %v2056
    %2066 = vmatpush.bf16.msra.mxu0 %v2055
    %2067 = vmatpush.bf16.msra.mxu0 %v2054
    %2068 = vmatpush.bf16.msra.mxu0 %v2053
    %2069 = vmatpush.bf16.msra.mxu0 %v2052
    %2070 = vmatpush.bf16.msra.mxu0 %v2051
    %2071 = vmatpush.bf16.msra.mxu0 %v2050
    %2072 = vmatpush.bf16.msra.mxu0 %v2049
    %2073 = vmatmul.bf16.gmra.mxu0 %v1999
    %v2074 = vpop.f32.mrf.mxu0
    %v2075 = vadd.f32 0.0, %v2074
    %v2076 = vpop.f32.mrf.mxu0
    %2077 = vdwg.mxu0
    %v2078 = vadd.f32 %v1992, %v2075
    %2079 = vset.pattern.permute.xlu0 23
    %2080 = vperm.xlu0 %2079, %v101
    %v2081 = vpop.permute.xlu0 %2080
    %vm2082 = vcmp.eq.s32.totalorder %v2081, %v103
    %v2083 = vsel %vm2082, 1, 0
    %v2084 = vcvt.s32.f32 %v2083
    %v2085 = vpack.c.bf16 %v2084, %v2084
    %s2086 = scalar_lea.vmem [#allocation5], 1472
    %v2087 = vld [vmem:[%s2086] sm:$0xf]
    %v2088 = vld [vmem:[%s2086 + $0x4] sm:$0xf]
    %v2089 = vld [vmem:[%s2086 + $0x8] sm:$0xf]
    %v2090 = vld [vmem:[%s2086 + $0xc] sm:$0xf]
    %v2091 = vld [vmem:[%s2086 + $0x10] sm:$0xf]
    %v2092 = vld [vmem:[%s2086 + $0x14] sm:$0xf]
    %v2093 = vld [vmem:[%s2086 + $0x18] sm:$0xf]
    %v2094 = vld [vmem:[%s2086 + $0x1c] sm:$0xf]
    %v2095 = vld [vmem:[%s2086 + $0x20] sm:$0xf]
    %v2096 = vld [vmem:[%s2086 + $0x24] sm:$0xf]
    %v2097 = vld [vmem:[%s2086 + $0x28] sm:$0xf]
    %v2098 = vld [vmem:[%s2086 + $0x2c] sm:$0xf]
    %v2099 = vld [vmem:[%s2086 + $0x30] sm:$0xf]
    %v2100 = vld [vmem:[%s2086 + $0x34] sm:$0xf]
    %v2101 = vld [vmem:[%s2086 + $0x38] sm:$0xf]
    %v2102 = vld [vmem:[%s2086 + $0x3c] sm:$0xf]
    %v2119 = vunpack.c.l.b16 %v2087
    %v2120 = vunpack.c.l.b16 %v2088
    %v2121 = vunpack.c.l.b16 %v2089
    %v2122 = vunpack.c.l.b16 %v2090
    %v2123 = vunpack.c.l.b16 %v2091
    %v2124 = vunpack.c.l.b16 %v2092
    %v2125 = vunpack.c.l.b16 %v2093
    %v2126 = vunpack.c.l.b16 %v2094
    %v2127 = vunpack.c.l.b16 %v2095
    %v2128 = vunpack.c.l.b16 %v2096
    %v2129 = vunpack.c.l.b16 %v2097
    %v2130 = vunpack.c.l.b16 %v2098
    %v2131 = vunpack.c.l.b16 %v2099
    %v2132 = vunpack.c.l.b16 %v2100
    %v2133 = vunpack.c.l.b16 %v2101
    %v2134 = vunpack.c.l.b16 %v2102
    %v2135 = vpack.c.b16 %v2120, %v2119
    %v2136 = vpack.c.b16 %v2122, %v2121
    %v2137 = vpack.c.b16 %v2124, %v2123
    %v2138 = vpack.c.b16 %v2126, %v2125
    %v2139 = vpack.c.b16 %v2128, %v2127
    %v2140 = vpack.c.b16 %v2130, %v2129
    %v2141 = vpack.c.b16 %v2132, %v2131
    %v2142 = vpack.c.b16 %v2134, %v2133
    %2151 = vmatpush.bf16.msra.mxu0 %v2142
    %2152 = vmatpush.bf16.msra.mxu0 %v2141
    %2153 = vmatpush.bf16.msra.mxu0 %v2140
    %2154 = vmatpush.bf16.msra.mxu0 %v2139
    %2155 = vmatpush.bf16.msra.mxu0 %v2138
    %2156 = vmatpush.bf16.msra.mxu0 %v2137
    %2157 = vmatpush.bf16.msra.mxu0 %v2136
    %2158 = vmatpush.bf16.msra.mxu0 %v2135
    %2159 = vmatmul.bf16.gmra.mxu0 %v2085
    %v2160 = vpop.f32.mrf.mxu0
    %v2161 = vadd.f32 0.0, %v2160
    %v2162 = vpop.f32.mrf.mxu0
    %2163 = vdwg.mxu0
    %v2164 = vadd.f32 %v2078, %v2161
    %2165 = vset.pattern.permute.xlu0 24
    %2166 = vperm.xlu0 %2165, %v101
    %v2167 = vpop.permute.xlu0 %2166
    %vm2168 = vcmp.eq.s32.totalorder %v2167, %v103
    %v2169 = vsel %vm2168, 1, 0
    %v2170 = vcvt.s32.f32 %v2169
    %v2171 = vpack.c.bf16 %v2170, %v2170
    %s2172 = scalar_lea.vmem [#allocation5], 1536
    %v2173 = vld [vmem:[%s2172] sm:$0xf]
    %v2174 = vld [vmem:[%s2172 + $0x4] sm:$0xf]
    %v2175 = vld [vmem:[%s2172 + $0x8] sm:$0xf]
    %v2176 = vld [vmem:[%s2172 + $0xc] sm:$0xf]
    %v2177 = vld [vmem:[%s2172 + $0x10] sm:$0xf]
    %v2178 = vld [vmem:[%s2172 + $0x14] sm:$0xf]
    %v2179 = vld [vmem:[%s2172 + $0x18] sm:$0xf]
    %v2180 = vld [vmem:[%s2172 + $0x1c] sm:$0xf]
    %v2181 = vld [vmem:[%s2172 + $0x20] sm:$0xf]
    %v2182 = vld [vmem:[%s2172 + $0x24] sm:$0xf]
    %v2183 = vld [vmem:[%s2172 + $0x28] sm:$0xf]
    %v2184 = vld [vmem:[%s2172 + $0x2c] sm:$0xf]
    %v2185 = vld [vmem:[%s2172 + $0x30] sm:$0xf]
    %v2186 = vld [vmem:[%s2172 + $0x34] sm:$0xf]
    %v2187 = vld [vmem:[%s2172 + $0x38] sm:$0xf]
    %v2188 = vld [vmem:[%s2172 + $0x3c] sm:$0xf]
    %v2205 = vunpack.c.l.b16 %v2173
    %v2206 = vunpack.c.l.b16 %v2174
    %v2207 = vunpack.c.l.b16 %v2175
    %v2208 = vunpack.c.l.b16 %v2176
    %v2209 = vunpack.c.l.b16 %v2177
    %v2210 = vunpack.c.l.b16 %v2178
    %v2211 = vunpack.c.l.b16 %v2179
    %v2212 = vunpack.c.l.b16 %v2180
    %v2213 = vunpack.c.l.b16 %v2181
    %v2214 = vunpack.c.l.b16 %v2182
    %v2215 = vunpack.c.l.b16 %v2183
    %v2216 = vunpack.c.l.b16 %v2184
    %v2217 = vunpack.c.l.b16 %v2185
    %v2218 = vunpack.c.l.b16 %v2186
    %v2219 = vunpack.c.l.b16 %v2187
    %v2220 = vunpack.c.l.b16 %v2188
    %v2221 = vpack.c.b16 %v2206, %v2205
    %v2222 = vpack.c.b16 %v2208, %v2207
    %v2223 = vpack.c.b16 %v2210, %v2209
    %v2224 = vpack.c.b16 %v2212, %v2211
    %v2225 = vpack.c.b16 %v2214, %v2213
    %v2226 = vpack.c.b16 %v2216, %v2215
    %v2227 = vpack.c.b16 %v2218, %v2217
    %v2228 = vpack.c.b16 %v2220, %v2219
    %2237 = vmatpush.bf16.msra.mxu0 %v2228
    %2238 = vmatpush.bf16.msra.mxu0 %v2227
    %2239 = vmatpush.bf16.msra.mxu0 %v2226
    %2240 = vmatpush.bf16.msra.mxu0 %v2225
    %2241 = vmatpush.bf16.msra.mxu0 %v2224
    %2242 = vmatpush.bf16.msra.mxu0 %v2223
    %2243 = vmatpush.bf16.msra.mxu0 %v2222
    %2244 = vmatpush.bf16.msra.mxu0 %v2221
    %2245 = vmatmul.bf16.gmra.mxu0 %v2171
    %v2246 = vpop.f32.mrf.mxu0
    %v2247 = vadd.f32 0.0, %v2246
    %v2248 = vpop.f32.mrf.mxu0
    %2249 = vdwg.mxu0
    %v2250 = vadd.f32 %v2164, %v2247
    %2251 = vset.pattern.permute.xlu0 25
    %2252 = vperm.xlu0 %2251, %v101
    %v2253 = vpop.permute.xlu0 %2252
    %vm2254 = vcmp.eq.s32.totalorder %v2253, %v103
    %v2255 = vsel %vm2254, 1, 0
    %v2256 = vcvt.s32.f32 %v2255
    %v2257 = vpack.c.bf16 %v2256, %v2256
    %s2258 = scalar_lea.vmem [#allocation5], 1600
    %v2259 = vld [vmem:[%s2258] sm:$0xf]
    %v2260 = vld [vmem:[%s2258 + $0x4] sm:$0xf]
    %v2261 = vld [vmem:[%s2258 + $0x8] sm:$0xf]
    %v2262 = vld [vmem:[%s2258 + $0xc] sm:$0xf]
    %v2263 = vld [vmem:[%s2258 + $0x10] sm:$0xf]
    %v2264 = vld [vmem:[%s2258 + $0x14] sm:$0xf]
    %v2265 = vld [vmem:[%s2258 + $0x18] sm:$0xf]
    %v2266 = vld [vmem:[%s2258 + $0x1c] sm:$0xf]
    %v2267 = vld [vmem:[%s2258 + $0x20] sm:$0xf]
    %v2268 = vld [vmem:[%s2258 + $0x24] sm:$0xf]
    %v2269 = vld [vmem:[%s2258 + $0x28] sm:$0xf]
    %v2270 = vld [vmem:[%s2258 + $0x2c] sm:$0xf]
    %v2271 = vld [vmem:[%s2258 + $0x30] sm:$0xf]
    %v2272 = vld [vmem:[%s2258 + $0x34] sm:$0xf]
    %v2273 = vld [vmem:[%s2258 + $0x38] sm:$0xf]
    %v2274 = vld [vmem:[%s2258 + $0x3c] sm:$0xf]
    %v2291 = vunpack.c.l.b16 %v2259
    %v2292 = vunpack.c.l.b16 %v2260
    %v2293 = vunpack.c.l.b16 %v2261
    %v2294 = vunpack.c.l.b16 %v2262
    %v2295 = vunpack.c.l.b16 %v2263
    %v2296 = vunpack.c.l.b16 %v2264
    %v2297 = vunpack.c.l.b16 %v2265
    %v2298 = vunpack.c.l.b16 %v2266
    %v2299 = vunpack.c.l.b16 %v2267
    %v2300 = vunpack.c.l.b16 %v2268
    %v2301 = vunpack.c.l.b16 %v2269
    %v2302 = vunpack.c.l.b16 %v2270
    %v2303 = vunpack.c.l.b16 %v2271
    %v2304 = vunpack.c.l.b16 %v2272
    %v2305 = vunpack.c.l.b16 %v2273
    %v2306 = vunpack.c.l.b16 %v2274
    %v2307 = vpack.c.b16 %v2292, %v2291
    %v2308 = vpack.c.b16 %v2294, %v2293
    %v2309 = vpack.c.b16 %v2296, %v2295
    %v2310 = vpack.c.b16 %v2298, %v2297
    %v2311 = vpack.c.b16 %v2300, %v2299
    %v2312 = vpack.c.b16 %v2302, %v2301
    %v2313 = vpack.c.b16 %v2304, %v2303
    %v2314 = vpack.c.b16 %v2306, %v2305
    %2323 = vmatpush.bf16.msra.mxu0 %v2314
    %2324 = vmatpush.bf16.msra.mxu0 %v2313
    %2325 = vmatpush.bf16.msra.mxu0 %v2312
    %2326 = vmatpush.bf16.msra.mxu0 %v2311
    %2327 = vmatpush.bf16.msra.mxu0 %v2310
    %2328 = vmatpush.bf16.msra.mxu0 %v2309
    %2329 = vmatpush.bf16.msra.mxu0 %v2308
    %2330 = vmatpush.bf16.msra.mxu0 %v2307
    %2331 = vmatmul.bf16.gmra.mxu0 %v2257
    %v2332 = vpop.f32.mrf.mxu0
    %v2333 = vadd.f32 0.0, %v2332
    %v2334 = vpop.f32.mrf.mxu0
    %2335 = vdwg.mxu0
    %v2336 = vadd.f32 %v2250, %v2333
    %2337 = vset.pattern.permute.xlu0 26
    %2338 = vperm.xlu0 %2337, %v101
    %v2339 = vpop.permute.xlu0 %2338
    %vm2340 = vcmp.eq.s32.totalorder %v2339, %v103
    %v2341 = vsel %vm2340, 1, 0
    %v2342 = vcvt.s32.f32 %v2341
    %v2343 = vpack.c.bf16 %v2342, %v2342
    %s2344 = scalar_lea.vmem [#allocation5], 1664
    %v2345 = vld [vmem:[%s2344] sm:$0xf]
    %v2346 = vld [vmem:[%s2344 + $0x4] sm:$0xf]
    %v2347 = vld [vmem:[%s2344 + $0x8] sm:$0xf]
    %v2348 = vld [vmem:[%s2344 + $0xc] sm:$0xf]
    %v2349 = vld [vmem:[%s2344 + $0x10] sm:$0xf]
    %v2350 = vld [vmem:[%s2344 + $0x14] sm:$0xf]
    %v2351 = vld [vmem:[%s2344 + $0x18] sm:$0xf]
    %v2352 = vld [vmem:[%s2344 + $0x1c] sm:$0xf]
    %v2353 = vld [vmem:[%s2344 + $0x20] sm:$0xf]
    %v2354 = vld [vmem:[%s2344 + $0x24] sm:$0xf]
    %v2355 = vld [vmem:[%s2344 + $0x28] sm:$0xf]
    %v2356 = vld [vmem:[%s2344 + $0x2c] sm:$0xf]
    %v2357 = vld [vmem:[%s2344 + $0x30] sm:$0xf]
    %v2358 = vld [vmem:[%s2344 + $0x34] sm:$0xf]
    %v2359 = vld [vmem:[%s2344 + $0x38] sm:$0xf]
    %v2360 = vld [vmem:[%s2344 + $0x3c] sm:$0xf]
    %v2377 = vunpack.c.l.b16 %v2345
    %v2378 = vunpack.c.l.b16 %v2346
    %v2379 = vunpack.c.l.b16 %v2347
    %v2380 = vunpack.c.l.b16 %v2348
    %v2381 = vunpack.c.l.b16 %v2349
    %v2382 = vunpack.c.l.b16 %v2350
    %v2383 = vunpack.c.l.b16 %v2351
    %v2384 = vunpack.c.l.b16 %v2352
    %v2385 = vunpack.c.l.b16 %v2353
    %v2386 = vunpack.c.l.b16 %v2354
    %v2387 = vunpack.c.l.b16 %v2355
    %v2388 = vunpack.c.l.b16 %v2356
    %v2389 = vunpack.c.l.b16 %v2357
    %v2390 = vunpack.c.l.b16 %v2358
    %v2391 = vunpack.c.l.b16 %v2359
    %v2392 = vunpack.c.l.b16 %v2360
    %v2393 = vpack.c.b16 %v2378, %v2377
    %v2394 = vpack.c.b16 %v2380, %v2379
    %v2395 = vpack.c.b16 %v2382, %v2381
    %v2396 = vpack.c.b16 %v2384, %v2383
    %v2397 = vpack.c.b16 %v2386, %v2385
    %v2398 = vpack.c.b16 %v2388, %v2387
    %v2399 = vpack.c.b16 %v2390, %v2389
    %v2400 = vpack.c.b16 %v2392, %v2391
    %2409 = vmatpush.bf16.msra.mxu0 %v2400
    %2410 = vmatpush.bf16.msra.mxu0 %v2399
    %2411 = vmatpush.bf16.msra.mxu0 %v2398
    %2412 = vmatpush.bf16.msra.mxu0 %v2397
    %2413 = vmatpush.bf16.msra.mxu0 %v2396
    %2414 = vmatpush.bf16.msra.mxu0 %v2395
    %2415 = vmatpush.bf16.msra.mxu0 %v2394
    %2416 = vmatpush.bf16.msra.mxu0 %v2393
    %2417 = vmatmul.bf16.gmra.mxu0 %v2343
    %v2418 = vpop.f32.mrf.mxu0
    %v2419 = vadd.f32 0.0, %v2418
    %v2420 = vpop.f32.mrf.mxu0
    %2421 = vdwg.mxu0
    %v2422 = vadd.f32 %v2336, %v2419
    %2423 = vset.pattern.permute.xlu0 27
    %2424 = vperm.xlu0 %2423, %v101
    %v2425 = vpop.permute.xlu0 %2424
    %vm2426 = vcmp.eq.s32.totalorder %v2425, %v103
    %v2427 = vsel %vm2426, 1, 0
    %v2428 = vcvt.s32.f32 %v2427
    %v2429 = vpack.c.bf16 %v2428, %v2428
    %s2430 = scalar_lea.vmem [#allocation5], 1728
    %v2431 = vld [vmem:[%s2430] sm:$0xf]
    %v2432 = vld [vmem:[%s2430 + $0x4] sm:$0xf]
    %v2433 = vld [vmem:[%s2430 + $0x8] sm:$0xf]
    %v2434 = vld [vmem:[%s2430 + $0xc] sm:$0xf]
    %v2435 = vld [vmem:[%s2430 + $0x10] sm:$0xf]
    %v2436 = vld [vmem:[%s2430 + $0x14] sm:$0xf]
    %v2437 = vld [vmem:[%s2430 + $0x18] sm:$0xf]
    %v2438 = vld [vmem:[%s2430 + $0x1c] sm:$0xf]
    %v2439 = vld [vmem:[%s2430 + $0x20] sm:$0xf]
    %v2440 = vld [vmem:[%s2430 + $0x24] sm:$0xf]
    %v2441 = vld [vmem:[%s2430 + $0x28] sm:$0xf]
    %v2442 = vld [vmem:[%s2430 + $0x2c] sm:$0xf]
    %v2443 = vld [vmem:[%s2430 + $0x30] sm:$0xf]
    %v2444 = vld [vmem:[%s2430 + $0x34] sm:$0xf]
    %v2445 = vld [vmem:[%s2430 + $0x38] sm:$0xf]
    %v2446 = vld [vmem:[%s2430 + $0x3c] sm:$0xf]
    %v2463 = vunpack.c.l.b16 %v2431
    %v2464 = vunpack.c.l.b16 %v2432
    %v2465 = vunpack.c.l.b16 %v2433
    %v2466 = vunpack.c.l.b16 %v2434
    %v2467 = vunpack.c.l.b16 %v2435
    %v2468 = vunpack.c.l.b16 %v2436
    %v2469 = vunpack.c.l.b16 %v2437
    %v2470 = vunpack.c.l.b16 %v2438
    %v2471 = vunpack.c.l.b16 %v2439
    %v2472 = vunpack.c.l.b16 %v2440
    %v2473 = vunpack.c.l.b16 %v2441
    %v2474 = vunpack.c.l.b16 %v2442
    %v2475 = vunpack.c.l.b16 %v2443
    %v2476 = vunpack.c.l.b16 %v2444
    %v2477 = vunpack.c.l.b16 %v2445
    %v2478 = vunpack.c.l.b16 %v2446
    %v2479 = vpack.c.b16 %v2464, %v2463
    %v2480 = vpack.c.b16 %v2466, %v2465
    %v2481 = vpack.c.b16 %v2468, %v2467
    %v2482 = vpack.c.b16 %v2470, %v2469
    %v2483 = vpack.c.b16 %v2472, %v2471
    %v2484 = vpack.c.b16 %v2474, %v2473
    %v2485 = vpack.c.b16 %v2476, %v2475
    %v2486 = vpack.c.b16 %v2478, %v2477
    %2495 = vmatpush.bf16.msra.mxu0 %v2486
    %2496 = vmatpush.bf16.msra.mxu0 %v2485
    %2497 = vmatpush.bf16.msra.mxu0 %v2484
    %2498 = vmatpush.bf16.msra.mxu0 %v2483
    %2499 = vmatpush.bf16.msra.mxu0 %v2482
    %2500 = vmatpush.bf16.msra.mxu0 %v2481
    %2501 = vmatpush.bf16.msra.mxu0 %v2480
    %2502 = vmatpush.bf16.msra.mxu0 %v2479
    %2503 = vmatmul.bf16.gmra.mxu0 %v2429
    %v2504 = vpop.f32.mrf.mxu0
    %v2505 = vadd.f32 0.0, %v2504
    %v2506 = vpop.f32.mrf.mxu0
    %2507 = vdwg.mxu0
    %v2508 = vadd.f32 %v2422, %v2505
    %2509 = vset.pattern.permute.xlu0 28
    %2510 = vperm.xlu0 %2509, %v101
    %v2511 = vpop.permute.xlu0 %2510
    %vm2512 = vcmp.eq.s32.totalorder %v2511, %v103
    %v2513 = vsel %vm2512, 1, 0
    %v2514 = vcvt.s32.f32 %v2513
    %v2515 = vpack.c.bf16 %v2514, %v2514
    %s2516 = scalar_lea.vmem [#allocation5], 1792
    %v2517 = vld [vmem:[%s2516] sm:$0xf]
    %v2518 = vld [vmem:[%s2516 + $0x4] sm:$0xf]
    %v2519 = vld [vmem:[%s2516 + $0x8] sm:$0xf]
    %v2520 = vld [vmem:[%s2516 + $0xc] sm:$0xf]
    %v2521 = vld [vmem:[%s2516 + $0x10] sm:$0xf]
    %v2522 = vld [vmem:[%s2516 + $0x14] sm:$0xf]
    %v2523 = vld [vmem:[%s2516 + $0x18] sm:$0xf]
    %v2524 = vld [vmem:[%s2516 + $0x1c] sm:$0xf]
    %v2525 = vld [vmem:[%s2516 + $0x20] sm:$0xf]
    %v2526 = vld [vmem:[%s2516 + $0x24] sm:$0xf]
    %v2527 = vld [vmem:[%s2516 + $0x28] sm:$0xf]
    %v2528 = vld [vmem:[%s2516 + $0x2c] sm:$0xf]
    %v2529 = vld [vmem:[%s2516 + $0x30] sm:$0xf]
    %v2530 = vld [vmem:[%s2516 + $0x34] sm:$0xf]
    %v2531 = vld [vmem:[%s2516 + $0x38] sm:$0xf]
    %v2532 = vld [vmem:[%s2516 + $0x3c] sm:$0xf]
    %v2549 = vunpack.c.l.b16 %v2517
    %v2550 = vunpack.c.l.b16 %v2518
    %v2551 = vunpack.c.l.b16 %v2519
    %v2552 = vunpack.c.l.b16 %v2520
    %v2553 = vunpack.c.l.b16 %v2521
    %v2554 = vunpack.c.l.b16 %v2522
    %v2555 = vunpack.c.l.b16 %v2523
    %v2556 = vunpack.c.l.b16 %v2524
    %v2557 = vunpack.c.l.b16 %v2525
    %v2558 = vunpack.c.l.b16 %v2526
    %v2559 = vunpack.c.l.b16 %v2527
    %v2560 = vunpack.c.l.b16 %v2528
    %v2561 = vunpack.c.l.b16 %v2529
    %v2562 = vunpack.c.l.b16 %v2530
    %v2563 = vunpack.c.l.b16 %v2531
    %v2564 = vunpack.c.l.b16 %v2532
    %v2565 = vpack.c.b16 %v2550, %v2549
    %v2566 = vpack.c.b16 %v2552, %v2551
    %v2567 = vpack.c.b16 %v2554, %v2553
    %v2568 = vpack.c.b16 %v2556, %v2555
    %v2569 = vpack.c.b16 %v2558, %v2557
    %v2570 = vpack.c.b16 %v2560, %v2559
    %v2571 = vpack.c.b16 %v2562, %v2561
    %v2572 = vpack.c.b16 %v2564, %v2563
    %2581 = vmatpush.bf16.msra.mxu0 %v2572
    %2582 = vmatpush.bf16.msra.mxu0 %v2571
    %2583 = vmatpush.bf16.msra.mxu0 %v2570
    %2584 = vmatpush.bf16.msra.mxu0 %v2569
    %2585 = vmatpush.bf16.msra.mxu0 %v2568
    %2586 = vmatpush.bf16.msra.mxu0 %v2567
    %2587 = vmatpush.bf16.msra.mxu0 %v2566
    %2588 = vmatpush.bf16.msra.mxu0 %v2565
    %2589 = vmatmul.bf16.gmra.mxu0 %v2515
    %v2590 = vpop.f32.mrf.mxu0
    %v2591 = vadd.f32 0.0, %v2590
    %v2592 = vpop.f32.mrf.mxu0
    %2593 = vdwg.mxu0
    %v2594 = vadd.f32 %v2508, %v2591
    %2595 = vset.pattern.permute.xlu0 29
    %2596 = vperm.xlu0 %2595, %v101
    %v2597 = vpop.permute.xlu0 %2596
    %vm2598 = vcmp.eq.s32.totalorder %v2597, %v103
    %v2599 = vsel %vm2598, 1, 0
    %v2600 = vcvt.s32.f32 %v2599
    %v2601 = vpack.c.bf16 %v2600, %v2600
    %s2602 = scalar_lea.vmem [#allocation5], 1856
    %v2603 = vld [vmem:[%s2602] sm:$0xf]
    %v2604 = vld [vmem:[%s2602 + $0x4] sm:$0xf]
    %v2605 = vld [vmem:[%s2602 + $0x8] sm:$0xf]
    %v2606 = vld [vmem:[%s2602 + $0xc] sm:$0xf]
    %v2607 = vld [vmem:[%s2602 + $0x10] sm:$0xf]
    %v2608 = vld [vmem:[%s2602 + $0x14] sm:$0xf]
    %v2609 = vld [vmem:[%s2602 + $0x18] sm:$0xf]
    %v2610 = vld [vmem:[%s2602 + $0x1c] sm:$0xf]
    %v2611 = vld [vmem:[%s2602 + $0x20] sm:$0xf]
    %v2612 = vld [vmem:[%s2602 + $0x24] sm:$0xf]
    %v2613 = vld [vmem:[%s2602 + $0x28] sm:$0xf]
    %v2614 = vld [vmem:[%s2602 + $0x2c] sm:$0xf]
    %v2615 = vld [vmem:[%s2602 + $0x30] sm:$0xf]
    %v2616 = vld [vmem:[%s2602 + $0x34] sm:$0xf]
    %v2617 = vld [vmem:[%s2602 + $0x38] sm:$0xf]
    %v2618 = vld [vmem:[%s2602 + $0x3c] sm:$0xf]
    %v2635 = vunpack.c.l.b16 %v2603
    %v2636 = vunpack.c.l.b16 %v2604
    %v2637 = vunpack.c.l.b16 %v2605
    %v2638 = vunpack.c.l.b16 %v2606
    %v2639 = vunpack.c.l.b16 %v2607
    %v2640 = vunpack.c.l.b16 %v2608
    %v2641 = vunpack.c.l.b16 %v2609
    %v2642 = vunpack.c.l.b16 %v2610
    %v2643 = vunpack.c.l.b16 %v2611
    %v2644 = vunpack.c.l.b16 %v2612
    %v2645 = vunpack.c.l.b16 %v2613
    %v2646 = vunpack.c.l.b16 %v2614
    %v2647 = vunpack.c.l.b16 %v2615
    %v2648 = vunpack.c.l.b16 %v2616
    %v2649 = vunpack.c.l.b16 %v2617
    %v2650 = vunpack.c.l.b16 %v2618
    %v2651 = vpack.c.b16 %v2636, %v2635
    %v2652 = vpack.c.b16 %v2638, %v2637
    %v2653 = vpack.c.b16 %v2640, %v2639
    %v2654 = vpack.c.b16 %v2642, %v2641
    %v2655 = vpack.c.b16 %v2644, %v2643
    %v2656 = vpack.c.b16 %v2646, %v2645
    %v2657 = vpack.c.b16 %v2648, %v2647
    %v2658 = vpack.c.b16 %v2650, %v2649
    %2667 = vmatpush.bf16.msra.mxu0 %v2658
    %2668 = vmatpush.bf16.msra.mxu0 %v2657
    %2669 = vmatpush.bf16.msra.mxu0 %v2656
    %2670 = vmatpush.bf16.msra.mxu0 %v2655
    %2671 = vmatpush.bf16.msra.mxu0 %v2654
    %2672 = vmatpush.bf16.msra.mxu0 %v2653
    %2673 = vmatpush.bf16.msra.mxu0 %v2652
    %2674 = vmatpush.bf16.msra.mxu0 %v2651
    %2675 = vmatmul.bf16.gmra.mxu0 %v2601
    %v2676 = vpop.f32.mrf.mxu0
    %v2677 = vadd.f32 0.0, %v2676
    %v2678 = vpop.f32.mrf.mxu0
    %2679 = vdwg.mxu0
    %v2680 = vadd.f32 %v2594, %v2677
    %2681 = vset.pattern.permute.xlu0 30
    %2682 = vperm.xlu0 %2681, %v101
    %v2683 = vpop.permute.xlu0 %2682
    %vm2684 = vcmp.eq.s32.totalorder %v2683, %v103
    %v2685 = vsel %vm2684, 1, 0
    %v2686 = vcvt.s32.f32 %v2685
    %v2687 = vpack.c.bf16 %v2686, %v2686
    %s2688 = scalar_lea.vmem [#allocation5], 1920
    %v2689 = vld [vmem:[%s2688] sm:$0xf]
    %v2690 = vld [vmem:[%s2688 + $0x4] sm:$0xf]
    %v2691 = vld [vmem:[%s2688 + $0x8] sm:$0xf]
    %v2692 = vld [vmem:[%s2688 + $0xc] sm:$0xf]
    %v2693 = vld [vmem:[%s2688 + $0x10] sm:$0xf]
    %v2694 = vld [vmem:[%s2688 + $0x14] sm:$0xf]
    %v2695 = vld [vmem:[%s2688 + $0x18] sm:$0xf]
    %v2696 = vld [vmem:[%s2688 + $0x1c] sm:$0xf]
    %v2697 = vld [vmem:[%s2688 + $0x20] sm:$0xf]
    %v2698 = vld [vmem:[%s2688 + $0x24] sm:$0xf]
    %v2699 = vld [vmem:[%s2688 + $0x28] sm:$0xf]
    %v2700 = vld [vmem:[%s2688 + $0x2c] sm:$0xf]
    %v2701 = vld [vmem:[%s2688 + $0x30] sm:$0xf]
    %v2702 = vld [vmem:[%s2688 + $0x34] sm:$0xf]
    %v2703 = vld [vmem:[%s2688 + $0x38] sm:$0xf]
    %v2704 = vld [vmem:[%s2688 + $0x3c] sm:$0xf]
    %v2721 = vunpack.c.l.b16 %v2689
    %v2722 = vunpack.c.l.b16 %v2690
    %v2723 = vunpack.c.l.b16 %v2691
    %v2724 = vunpack.c.l.b16 %v2692
    %v2725 = vunpack.c.l.b16 %v2693
    %v2726 = vunpack.c.l.b16 %v2694
    %v2727 = vunpack.c.l.b16 %v2695
    %v2728 = vunpack.c.l.b16 %v2696
    %v2729 = vunpack.c.l.b16 %v2697
    %v2730 = vunpack.c.l.b16 %v2698
    %v2731 = vunpack.c.l.b16 %v2699
    %v2732 = vunpack.c.l.b16 %v2700
    %v2733 = vunpack.c.l.b16 %v2701
    %v2734 = vunpack.c.l.b16 %v2702
    %v2735 = vunpack.c.l.b16 %v2703
    %v2736 = vunpack.c.l.b16 %v2704
    %v2737 = vpack.c.b16 %v2722, %v2721
    %v2738 = vpack.c.b16 %v2724, %v2723
    %v2739 = vpack.c.b16 %v2726, %v2725
    %v2740 = vpack.c.b16 %v2728, %v2727
    %v2741 = vpack.c.b16 %v2730, %v2729
    %v2742 = vpack.c.b16 %v2732, %v2731
    %v2743 = vpack.c.b16 %v2734, %v2733
    %v2744 = vpack.c.b16 %v2736, %v2735
    %2753 = vmatpush.bf16.msra.mxu0 %v2744
    %2754 = vmatpush.bf16.msra.mxu0 %v2743
    %2755 = vmatpush.bf16.msra.mxu0 %v2742
    %2756 = vmatpush.bf16.msra.mxu0 %v2741
    %2757 = vmatpush.bf16.msra.mxu0 %v2740
    %2758 = vmatpush.bf16.msra.mxu0 %v2739
    %2759 = vmatpush.bf16.msra.mxu0 %v2738
    %2760 = vmatpush.bf16.msra.mxu0 %v2737
    %2761 = vmatmul.bf16.gmra.mxu0 %v2687
    %v2762 = vpop.f32.mrf.mxu0
    %v2763 = vadd.f32 0.0, %v2762
    %v2764 = vpop.f32.mrf.mxu0
    %2765 = vdwg.mxu0
    %v2766 = vadd.f32 %v2680, %v2763
    %2767 = vset.pattern.permute.xlu0 31
    %2768 = vperm.xlu0 %2767, %v101
    %v2769 = vpop.permute.xlu0 %2768
    %vm2770 = vcmp.eq.s32.totalorder %v2769, %v103
    %v2771 = vsel %vm2770, 1, 0
    %v2772 = vcvt.s32.f32 %v2771
    %v2773 = vpack.c.bf16 %v2772, %v2772
    %s2774 = scalar_lea.vmem [#allocation5], 1984
    %v2775 = vld [vmem:[%s2774] sm:$0xf]
    %v2776 = vld [vmem:[%s2774 + $0x4] sm:$0xf]
    %v2777 = vld [vmem:[%s2774 + $0x8] sm:$0xf]
    %v2778 = vld [vmem:[%s2774 + $0xc] sm:$0xf]
    %v2779 = vld [vmem:[%s2774 + $0x10] sm:$0xf]
    %v2780 = vld [vmem:[%s2774 + $0x14] sm:$0xf]
    %v2781 = vld [vmem:[%s2774 + $0x18] sm:$0xf]
    %v2782 = vld [vmem:[%s2774 + $0x1c] sm:$0xf]
    %v2783 = vld [vmem:[%s2774 + $0x20] sm:$0xf]
    %v2784 = vld [vmem:[%s2774 + $0x24] sm:$0xf]
    %v2785 = vld [vmem:[%s2774 + $0x28] sm:$0xf]
    %v2786 = vld [vmem:[%s2774 + $0x2c] sm:$0xf]
    %v2787 = vld [vmem:[%s2774 + $0x30] sm:$0xf]
    %v2788 = vld [vmem:[%s2774 + $0x34] sm:$0xf]
    %v2789 = vld [vmem:[%s2774 + $0x38] sm:$0xf]
    %v2790 = vld [vmem:[%s2774 + $0x3c] sm:$0xf]
    %v2807 = vunpack.c.l.b16 %v2775
    %v2808 = vunpack.c.l.b16 %v2776
    %v2809 = vunpack.c.l.b16 %v2777
    %v2810 = vunpack.c.l.b16 %v2778
    %v2811 = vunpack.c.l.b16 %v2779
    %v2812 = vunpack.c.l.b16 %v2780
    %v2813 = vunpack.c.l.b16 %v2781
    %v2814 = vunpack.c.l.b16 %v2782
    %v2815 = vunpack.c.l.b16 %v2783
    %v2816 = vunpack.c.l.b16 %v2784
    %v2817 = vunpack.c.l.b16 %v2785
    %v2818 = vunpack.c.l.b16 %v2786
    %v2819 = vunpack.c.l.b16 %v2787
    %v2820 = vunpack.c.l.b16 %v2788
    %v2821 = vunpack.c.l.b16 %v2789
    %v2822 = vunpack.c.l.b16 %v2790
    %v2823 = vpack.c.b16 %v2808, %v2807
    %v2824 = vpack.c.b16 %v2810, %v2809
    %v2825 = vpack.c.b16 %v2812, %v2811
    %v2826 = vpack.c.b16 %v2814, %v2813
    %v2827 = vpack.c.b16 %v2816, %v2815
    %v2828 = vpack.c.b16 %v2818, %v2817
    %v2829 = vpack.c.b16 %v2820, %v2819
    %v2830 = vpack.c.b16 %v2822, %v2821
    %2839 = vmatpush.bf16.msra.mxu0 %v2830
    %2840 = vmatpush.bf16.msra.mxu0 %v2829
    %2841 = vmatpush.bf16.msra.mxu0 %v2828
    %2842 = vmatpush.bf16.msra.mxu0 %v2827
    %2843 = vmatpush.bf16.msra.mxu0 %v2826
    %2844 = vmatpush.bf16.msra.mxu0 %v2825
    %2845 = vmatpush.bf16.msra.mxu0 %v2824
    %2846 = vmatpush.bf16.msra.mxu0 %v2823
    %2847 = vmatmul.bf16.gmra.mxu0 %v2773
    %v2848 = vpop.f32.mrf.mxu0
    %v2849 = vadd.f32 0.0, %v2848
    %v2850 = vpop.f32.mrf.mxu0
    %2851 = vdwg.mxu0
    %v2852 = vadd.f32 %v2766, %v2849
    %v2853 = vld [vmem:[%s2] sm:$0x1]
    %v2855 = vperm.slane %v2853, 0
    %v2857 = vadd.f32 %v2852, %v2855
    %v2858 = vmax.f32 %v2857, 0.0
    %v2859 = vpack.c.bf16 %v2858, %v2858
    %v2860 = vld [vmem:[#allocation7] sm:$0xf]
    %v2861 = vld [vmem:[#allocation7 + $0x4] sm:$0xf]
    %v2862 = vld [vmem:[#allocation7 + $0x8] sm:$0xf]
    %v2863 = vld [vmem:[#allocation7 + $0xc] sm:$0xf]
    %v2864 = vld [vmem:[#allocation7 + $0x10] sm:$0xf]
    %v2865 = vld [vmem:[#allocation7 + $0x14] sm:$0xf]
    %v2866 = vld [vmem:[#allocation7 + $0x18] sm:$0xf]
    %v2867 = vld [vmem:[#allocation7 + $0x1c] sm:$0xf]
    %v2868 = vld [vmem:[#allocation7 + $0x20] sm:$0xf]
    %v2869 = vld [vmem:[#allocation7 + $0x24] sm:$0xf]
    %v2870 = vld [vmem:[#allocation7 + $0x28] sm:$0xf]
    %v2871 = vld [vmem:[#allocation7 + $0x2c] sm:$0xf]
    %v2872 = vld [vmem:[#allocation7 + $0x30] sm:$0xf]
    %v2873 = vld [vmem:[#allocation7 + $0x34] sm:$0xf]
    %v2874 = vld [vmem:[#allocation7 + $0x38] sm:$0xf]
    %v2875 = vld [vmem:[#allocation7 + $0x3c] sm:$0xf]
    %v2876 = vld [vmem:[#allocation8] sm:$0x1]
    %v2878 = vperm.slane %v2876, 0
    %v2896 = vunpack.c.l.b16 %v2860
    %v2897 = vunpack.c.l.b16 %v2861
    %v2898 = vunpack.c.l.b16 %v2862
    %v2899 = vunpack.c.l.b16 %v2863
    %v2900 = vunpack.c.l.b16 %v2864
    %v2901 = vunpack.c.l.b16 %v2865
    %v2902 = vunpack.c.l.b16 %v2866
    %v2903 = vunpack.c.l.b16 %v2867
    %v2904 = vunpack.c.l.b16 %v2868
    %v2905 = vunpack.c.l.b16 %v2869
    %v2906 = vunpack.c.l.b16 %v2870
    %v2907 = vunpack.c.l.b16 %v2871
    %v2908 = vunpack.c.l.b16 %v2872
    %v2909 = vunpack.c.l.b16 %v2873
    %v2910 = vunpack.c.l.b16 %v2874
    %v2911 = vunpack.c.l.b16 %v2875
    %v2912 = vpack.c.b16 %v2897, %v2896
    %v2913 = vpack.c.b16 %v2899, %v2898
    %v2914 = vpack.c.b16 %v2901, %v2900
    %v2915 = vpack.c.b16 %v2903, %v2902
    %v2916 = vpack.c.b16 %v2905, %v2904
    %v2917 = vpack.c.b16 %v2907, %v2906
    %v2918 = vpack.c.b16 %v2909, %v2908
    %v2919 = vpack.c.b16 %v2911, %v2910
    %2928 = vmatpush.bf16.msra.mxu0 %v2919
    %2929 = vmatpush.bf16.msra.mxu0 %v2918
    %2930 = vmatpush.bf16.msra.mxu0 %v2917
    %2931 = vmatpush.bf16.msra.mxu0 %v2916
    %2932 = vmatpush.bf16.msra.mxu0 %v2915
    %2933 = vmatpush.bf16.msra.mxu0 %v2914
    %2934 = vmatpush.bf16.msra.mxu0 %v2913
    %2935 = vmatpush.bf16.msra.mxu0 %v2912
    %2936 = vmatmul.bf16.gmra.mxu0 %v2859
    %v2937 = vpop.f32.mrf.mxu0
    %v2938 = vadd.f32 %v2878, %v2937
    %v2939 = vpop.f32.mrf.mxu0
    %2940 = vdwg.mxu0
    %v2941 = vmax.f32 %v2938, 0.0
    %v2942 = vpack.c.bf16 %v2941, %v2941
    %v2943 = vld [vmem:[#allocation10] sm:$0xff]
    %v2944 = vld [vmem:[#allocation10 + $0x8] sm:$0xff]
    %v2945 = vld [vmem:[#allocation10 + $0x10] sm:$0xff]
    %v2946 = vld [vmem:[#allocation10 + $0x18] sm:$0xff]
    %v2947 = vld [vmem:[#allocation10 + $0x20] sm:$0xff]
    %v2948 = vld [vmem:[#allocation10 + $0x28] sm:$0xff]
    %v2949 = vld [vmem:[#allocation10 + $0x30] sm:$0xff]
    %v2950 = vld [vmem:[#allocation10 + $0x38] sm:$0xff]
    %v2951 = vld [vmem:[#allocation10 + $0x40] sm:$0xff]
    %v2952 = vld [vmem:[#allocation10 + $0x48] sm:$0xff]
    %v2953 = vld [vmem:[#allocation10 + $0x50] sm:$0xff]
    %v2954 = vld [vmem:[#allocation10 + $0x58] sm:$0xff]
    %v2955 = vld [vmem:[#allocation10 + $0x60] sm:$0xff]
    %v2956 = vld [vmem:[#allocation10 + $0x68] sm:$0xff]
    %v2957 = vld [vmem:[#allocation10 + $0x70] sm:$0xff]
    %v2958 = vld [vmem:[#allocation10 + $0x78] sm:$0xff]
    %v2959 = vld [vmem:[%s6] sm:$0x3]
    %v2961 = vperm.slane %v2959, 0
    %v2962 = vperm.slane %v2959, 1
    %v2981 = vunpack.c.l.b16 %v2943
    %v2982 = vunpack.c.h.b16 %v2943
    %v2983 = vunpack.c.l.b16 %v2944
    %v2984 = vunpack.c.h.b16 %v2944
    %v2985 = vunpack.c.l.b16 %v2945
    %v2986 = vunpack.c.h.b16 %v2945
    %v2987 = vunpack.c.l.b16 %v2946
    %v2988 = vunpack.c.h.b16 %v2946
    %v2989 = vunpack.c.l.b16 %v2947
    %v2990 = vunpack.c.h.b16 %v2947
    %v2991 = vunpack.c.l.b16 %v2948
    %v2992 = vunpack.c.h.b16 %v2948
    %v2993 = vunpack.c.l.b16 %v2949
    %v2994 = vunpack.c.h.b16 %v2949
    %v2995 = vunpack.c.l.b16 %v2950
    %v2996 = vunpack.c.h.b16 %v2950
    %v2997 = vunpack.c.l.b16 %v2951
    %v2998 = vunpack.c.h.b16 %v2951
    %v2999 = vunpack.c.l.b16 %v2952
    %v3000 = vunpack.c.h.b16 %v2952
    %v3001 = vunpack.c.l.b16 %v2953
    %v3002 = vunpack.c.h.b16 %v2953
    %v3003 = vunpack.c.l.b16 %v2954
    %v3004 = vunpack.c.h.b16 %v2954
    %v3005 = vunpack.c.l.b16 %v2955
    %v3006 = vunpack.c.h.b16 %v2955
    %v3007 = vunpack.c.l.b16 %v2956
    %v3008 = vunpack.c.h.b16 %v2956
    %v3009 = vunpack.c.l.b16 %v2957
    %v3010 = vunpack.c.h.b16 %v2957
    %v3011 = vunpack.c.l.b16 %v2958
    %v3012 = vunpack.c.h.b16 %v2958
    %v3013 = vpack.c.b16 %v2983, %v2981
    %v3014 = vpack.c.b16 %v2984, %v2982
    %v3015 = vpack.c.b16 %v2987, %v2985
    %v3016 = vpack.c.b16 %v2988, %v2986
    %v3017 = vpack.c.b16 %v2991, %v2989
    %v3018 = vpack.c.b16 %v2992, %v2990
    %v3019 = vpack.c.b16 %v2995, %v2993
    %v3020 = vpack.c.b16 %v2996, %v2994
    %v3021 = vpack.c.b16 %v2999, %v2997
    %v3022 = vpack.c.b16 %v3000, %v2998
    %v3023 = vpack.c.b16 %v3003, %v3001
    %v3024 = vpack.c.b16 %v3004, %v3002
    %v3025 = vpack.c.b16 %v3007, %v3005
    %v3026 = vpack.c.b16 %v3008, %v3006
    %v3027 = vpack.c.b16 %v3011, %v3009
    %v3028 = vpack.c.b16 %v3012, %v3010
    %3045 = vmatpush.bf16.msra.mxu0 %v3027
    %3046 = vmatpush.bf16.msra.mxu0 %v3025
    %3047 = vmatpush.bf16.msra.mxu0 %v3023
    %3048 = vmatpush.bf16.msra.mxu0 %v3021
    %3049 = vmatpush.bf16.msra.mxu0 %v3019
    %3050 = vmatpush.bf16.msra.mxu0 %v3017
    %3051 = vmatpush.bf16.msra.mxu0 %v3015
    %3052 = vmatpush.bf16.msra.mxu0 %v3013
    %3053 = vmatmul.bf16.gmra.mxu0 %v2942
    %v3054 = vpop.f32.mrf.mxu0
    %v3055 = vadd.f32 %v2961, %v3054
    %v3056 = vpop.f32.mrf.mxu0
    %3057 = vdwg.mxu0
    %3058 = vmatpush.bf16.msra.mxu0 %v3028
    %3059 = vmatpush.bf16.msra.mxu0 %v3026
    %3060 = vmatpush.bf16.msra.mxu0 %v3024
    %3061 = vmatpush.bf16.msra.mxu0 %v3022
    %3062 = vmatpush.bf16.msra.mxu0 %v3020
    %3063 = vmatpush.bf16.msra.mxu0 %v3018
    %3064 = vmatpush.bf16.msra.mxu0 %v3016
    %3065 = vmatpush.bf16.msra.mxu0 %v3014
    %3066 = vmatmul.bf16.gmra.mxu0 %v2942
    %v3067 = vpop.f32.mrf.mxu0
    %v3068 = vadd.f32 %v2962, %v3067
    %v3069 = vpop.f32.mrf.mxu0
    %3070 = vdwg.mxu0
    %3071 = vst [vmem:[#allocation11] sm:$0xff] %v3055
    %3072 = vst [vmem:[#allocation11 + $0x8] sm:$0xff] %v3068
    // Predicated region
    $region50: #{tpu_custom_call.1} parent=1 // pred_check
      _
    $region51: #{tpu_custom_call.1} parent=1 // pred_check_branch
      %3074 = sbr.rel (0) target = $region53
    $region52: #{tpu_custom_call.1} parent=1 // pred_region
      %3076 = vsyncadd [#allocation4], 0
      %s3078 = sshll.u32 [#allocation11], 4
      %s3079 = int_to_ptr.vmem [resolvable:$true] %s3078
      %s3080 = sshll.u32 %s7, 4
      %s3081 = int_to_ptr.hbm [resolvable:$true] %s3080
      %3083 = dma.vmem_to_hbm [thread:$0]  %s3079, 256, %s3081, [#allocation4]
    $region53: #{tpu_custom_call.1} parent=1 // pred_fallthru
      _
    // Predicated region
    $region54: #{tpu_custom_call.1} parent=1 // pred_check
      _
    $region55: #{tpu_custom_call.1} parent=1 // pred_check_branch
      %3085 = sbr.rel (0) target = $region57
    $region56: #{tpu_custom_call.1} parent=1 // pred_region
      %3087 = dma.done [#allocation4], 256
    $region57: #{tpu_custom_call.1} parent=1 // pred_fallthru
      _
    %3088 = vsyncpa [#allocation3], 1
    %3089 = vsyncpa [#allocation6], 1
    %3090 = vsyncpa [#allocation9], 1
    %3091 = vsyncpa [#allocation4], 1

</llo_original>
